<compile_context>
chip_gen: v7x
topology: tpu7x:2x2x1
jax: 0.10.0
libtpu: 0.0.40
codegen_flags: <defaults>
</compile_context>

<pallas_src>
import functools

import jax
import jax.numpy as jnp
from jax.experimental import pallas as pl
from jax.experimental.pallas import tpu as pltpu


_VMEM_LIMIT = 32 * 1024 * 1024   # scoped VMEM budget; fits v5e/v6e/v7x.
_LN_EPS = 1e-5


def _pick_tile(n, cap=128):
    """Largest tile <= cap dividing n; prefers multiples of 16 (bf16 sublane
    packing), falls back to multiples of 8, else the full dimension."""
    if n <= cap:
        return n
    for step in (16, 8):
        start = (cap // step) * step
        for t in range(start, 0, -step):
            if n % t == 0:
                return t
    # NOTE: full-dim fallback can blow VMEM for huge awkward N; fine here.
    return n


def _pick_col_tile(n, cap=512):
    """Lane-dim tile: multiple of 128 dividing n, or the full dimension."""
    if n <= cap:
        return n
    t = (cap // 128) * 128
    while t >= 128:
        if n % t == 0:
            return t
        t -= 128
    return n


def _ln_f32(xf, g, b, eps=_LN_EPS):
    mu = jnp.mean(xf, axis=-1, keepdims=True)
    var = jnp.mean((xf - mu) ** 2, axis=-1, keepdims=True)
    return (xf - mu) * jax.lax.rsqrt(var + eps) * g + b


# ----------------------------------------------------------------------------
# K/V projection kernel: once per (batch, kv-tile) -- hoisted out of the
# per-query-tile attention loop.  LayerNorm on the kv path is fused here.
# ----------------------------------------------------------------------------
def _kv_project_kernel(x_ref, g_ref, b_ref, wk_ref, bk_ref, wv_ref, bv_ref,
                       k_ref, v_ref, *, num_heads, head_dim):
    # x_ref (tkv, C); wk/wv (C, C); bk/bv (1, C); k_ref/v_ref (H, tkv, d).
    cdt = x_ref.dtype
    xn = _ln_f32(x_ref[...].astype(jnp.float32), g_ref[...], b_ref[...]).astype(cdt)
    # Full-width (lane-dense) projections, f32 MXU accumulation.
    k = (jnp.dot(xn, wk_ref[...], preferred_element_type=jnp.float32)
         + bk_ref[...]).astype(cdt)                                   # (tkv, C)
    v = (jnp.dot(xn, wv_ref[...], preferred_element_type=jnp.float32)
         + bv_ref[...]).astype(cdt)                                   # (tkv, C)
    for h in range(num_heads):
        sl = slice(h * head_dim, (h + 1) * head_dim)
        k_ref[h] = k[:, sl]
        v_ref[h] = v[:, sl]


def kv_project_pallas(x_kv, ln_g, ln_b, wk_t, bk, wv_t, bv, num_heads, *,
                      kv_tile=256):
    """K/V per-head projections with fused LayerNorm.

    x_kv: (B, Nkv, C) raw (pre-LayerNorm) kv-path activations.
    wk_t / wv_t: (Cin, Cout) = (C, C), head-major output columns.
    Returns K, V of shape (B, num_heads, Nkv, d).
    """
    B, Nkv, C = x_kv.shape
    d = C // num_heads
    cdt = x_kv.dtype
    tkv = _pick_tile(Nkv, kv_tile)

    g = ln_g.astype(jnp.float32).reshape(1, C)
    b = ln_b.astype(jnp.float32).reshape(1, C)
    wk2 = wk_t.astype(cdt)
    wv2 = wv_t.astype(cdt)
    bk2 = bk.astype(jnp.float32).reshape(1, C)
    bv2 = bv.astype(jnp.float32).reshape(1, C)

    kernel = functools.partial(_kv_project_kernel, num_heads=num_heads,
                               head_dim=d)
    const = lambda b_, i: (0, 0)
    return pl.pallas_call(
        kernel,
        out_shape=(jax.ShapeDtypeStruct((B, num_heads, Nkv, d), cdt),
                   jax.ShapeDtypeStruct((B, num_heads, Nkv, d), cdt)),
        grid_spec=pltpu.PrefetchScalarGridSpec(
            num_scalar_prefetch=0,
            grid=(B, Nkv // tkv),
            in_specs=[
                pl.BlockSpec((None, tkv, C), lambda b_, i: (b_, i, 0)),  # x_kv
                pl.BlockSpec((1, C), const),                             # ln g
                pl.BlockSpec((1, C), const),                             # ln b
                pl.BlockSpec((C, C), const),                             # Wk (resident)
                pl.BlockSpec((1, C), const),                             # bk
                pl.BlockSpec((C, C), const),                             # Wv (resident)
                pl.BlockSpec((1, C), const),                             # bv
            ],
            out_specs=[
                pl.BlockSpec((None, num_heads, tkv, d), lambda b_, i: (b_, 0, i, 0)),
                pl.BlockSpec((None, num_heads, tkv, d), lambda b_, i: (b_, 0, i, 0)),
            ],
        ),
        compiler_params=pltpu.CompilerParams(
            dimension_semantics=("parallel", "parallel"),
            vmem_limit_bytes=_VMEM_LIMIT),
    )(x_kv, g, b, wk2, bk2, wv2, bv2)


# ----------------------------------------------------------------------------
# Fused attention kernel: LN1 + Q-proj + per-head softmax(QK^T)V + out-proj +
# residual add.  grid = (batch, query-tiles); heads = static in-kernel loop.
# ----------------------------------------------------------------------------
def _attention_kernel(x_ref, g_ref, b_ref, wq_ref, bq_ref, k_ref, v_ref,
                      wp_ref, bp_ref, out_ref, *, num_heads, head_dim):
    # x_ref (tq, C) raw residual-stream tile; k/v (H, Nkv, d) precomputed.
    # wq (C, C) [softmax scale folded], bq (1, C); wp (H, d, C); bp (1, C).
    cdt = x_ref.dtype
    xf = x_ref[...].astype(jnp.float32)
    xn = _ln_f32(xf, g_ref[...], b_ref[...]).astype(cdt)      # fused LN1 (queries)
    q = (jnp.dot(xn, wq_ref[...], preferred_element_type=jnp.float32)
         + bq_ref[...]).astype(cdt)                           # (tq, C) lane-dense
    acc = jnp.zeros(x_ref.shape, jnp.float32)
    # TODO(synk): for very large Nkv (PVT stage-1 with sr_ratio=1) the scores
    # should be tiled along Nkv with an online (flash) softmax; here the full
    # Nkv stays resident, which fits these shapes comfortably.
    for h in range(num_heads):
        q_h = q[:, h * head_dim:(h + 1) * head_dim]            # (tq, d)
        k_h = k_ref[h]                                         # (Nkv, d)
        v_h = v_ref[h]                                         # (Nkv, d)
        s = jax.lax.dot_general(q_h, k_h, (((1,), (1,)), ((), ())),
                                preferred_element_type=jnp.float32)  # (tq, Nkv)
        s = s - jnp.max(s, axis=-1, keepdims=True)
        p = jnp.exp(s)
        p = p / jnp.sum(p, axis=-1, keepdims=True)             # exact softmax
        o = jnp.dot(p.astype(cdt), v_h,
                    preferred_element_type=jnp.float32).astype(cdt)  # (tq, d)
        acc = acc + jnp.dot(o, wp_ref[h], preferred_element_type=jnp.float32)
    # Fused output-projection bias + residual add.
    out_ref[...] = (xf + acc + bp_ref[...]).astype(out_ref.dtype)


def attention_pallas(x, k_heads, v_heads, ln_g, ln_b, wq, bq, wproj, bproj,
                     num_heads, *, q_tile=128):
    """Returns x + proj(attention(LN1(x))) with everything fused in one kernel.

    x: (B, N, C) raw residual stream; k_heads/v_heads: (B, H, Nkv, d);
    wq / wproj in torch layout (Cout, Cin).
    """
    B, N, C = x.shape
    d = C // num_heads
    scale = float(d) ** -0.5
    cdt = x.dtype
    Nkv = k_heads.shape[2]

    wq_t = (wq.T * scale).astype(cdt)                          # fold softmax scale
    bq2 = (bq * scale).astype(jnp.float32).reshape(1, C)
    wp = wproj.T.reshape(num_heads, d, C).astype(cdt)          # (H, d, C)
    bp = bproj.astype(jnp.float32).reshape(1, C)
    g = ln_g.astype(jnp.float32).reshape(1, C)
    b = ln_b.astype(jnp.float32).reshape(1, C)

    tq = _pick_tile(N, q_tile)
    kernel = functools.partial(_attention_kernel, num_heads=num_heads,
                               head_dim=d)
    const2 = lambda b_, i: (0, 0)
    const3 = lambda b_, i: (0, 0, 0)
    kvmap = lambda b_, i: (b_, 0, 0, 0)
    # TODO(synk): constant-index weight blocks are still double-buffered by the
    # default pipeline; pl.Buffered(1) would halve their VMEM footprint.
    return pl.pallas_call(
        kernel,
        out_shape=jax.ShapeDtypeStruct((B, N, C), cdt),
        grid_spec=pltpu.PrefetchScalarGridSpec(
            num_scalar_prefetch=0,
            grid=(B, N // tq),
            in_specs=[
                pl.BlockSpec((None, tq, C), lambda b_, i: (b_, i, 0)),   # x tile
                pl.BlockSpec((1, C), const2),                            # ln1 g
                pl.BlockSpec((1, C), const2),                            # ln1 b
                pl.BlockSpec((C, C), const2),                            # Wq (resident)
                pl.BlockSpec((1, C), const2),                            # bq
                pl.BlockSpec((None, num_heads, Nkv, d), kvmap),          # K (per batch)
                pl.BlockSpec((None, num_heads, Nkv, d), kvmap),          # V (per batch)
                pl.BlockSpec((num_heads, d, C), const3),                 # Wproj (resident)
                pl.BlockSpec((1, C), const2),                            # bproj
            ],
            out_specs=pl.BlockSpec((None, tq, C), lambda b_, i: (b_, i, 0)),
        ),
        compiler_params=pltpu.CompilerParams(
            dimension_semantics=("parallel", "parallel"),
            vmem_limit_bytes=_VMEM_LIMIT),
    )(x, g, b, wq_t, bq2, k_heads, v_heads, wp, bp)


# ----------------------------------------------------------------------------
# MLP fc1: fused LayerNorm + matmul (row x col tiled).
# ----------------------------------------------------------------------------
def _ln_linear_kernel(x_ref, g_ref, b_ref, w_ref, bias_ref, out_ref):
    xn = _ln_f32(x_ref[...].astype(jnp.float32), g_ref[...], b_ref[...]
                 ).astype(x_ref.dtype)
    y = jnp.dot(xn, w_ref[...], preferred_element_type=jnp.float32) + bias_ref[...]
    out_ref[...] = y.astype(out_ref.dtype)


def mlp_fc1_pallas(x, ln_g, ln_b, w, bias, *, row_tile=256, col_tile=512):
    """y = LN2(x) @ w.T + bias, torch-layout w = (Cout, Cin); x = (..., Cin)."""
    orig_shape = x.shape
    Cin = orig_shape[-1]
    Cout = w.shape[0]
    xf = x.reshape(-1, Cin)
    R = xf.shape[0]
    tm = _pick_tile(R, row_tile)
    tn = _pick_col_tile(Cout, col_tile)
    cdt = x.dtype
    w_t = w.T.astype(cdt)
    b2 = bias.astype(jnp.float32).reshape(1, Cout)
    g = ln_g.astype(jnp.float32).reshape(1, Cin)
    b = ln_b.astype(jnp.float32).reshape(1, Cin)
    y = pl.pallas_call(
        _ln_linear_kernel,
        out_shape=jax.ShapeDtypeStruct((R, Cout), cdt),
        grid_spec=pltpu.PrefetchScalarGridSpec(
            num_scalar_prefetch=0,
            grid=(R // tm, Cout // tn),
            in_specs=[
                pl.BlockSpec((tm, Cin), lambda i, j: (i, 0)),
                pl.BlockSpec((1, Cin), lambda i, j: (0, 0)),
                pl.BlockSpec((1, Cin), lambda i, j: (0, 0)),
                pl.BlockSpec((Cin, tn), lambda i, j: (0, j)),
                pl.BlockSpec((1, tn), lambda i, j: (0, j)),
            ],
            out_specs=pl.BlockSpec((tm, tn), lambda i, j: (i, j)),
        ),
        compiler_params=pltpu.CompilerParams(
            dimension_semantics=("parallel", "parallel"),
            vmem_limit_bytes=_VMEM_LIMIT),
    )(xf, g, b, w_t, b2)
    return y.reshape(orig_shape[:-1] + (Cout,))


# ----------------------------------------------------------------------------
# MLP fc2: matmul with fused residual add.
# ----------------------------------------------------------------------------
def _linear_resid_kernel(x_ref, w_ref, bias_ref, r_ref, out_ref):
    y = jnp.dot(x_ref[...], w_ref[...], preferred_element_type=jnp.float32) + bias_ref[...]
    out_ref[...] = (r_ref[...].astype(jnp.float32) + y).astype(out_ref.dtype)


def linear_resid_pallas(x, w, bias, resid, *, row_tile=256, col_tile=512):
    """resid + x @ w.T + bias; torch-layout w = (Cout, Cin)."""
    orig_shape = resid.shape
    Cin = x.shape[-1]
    Cout = w.shape[0]
    xf = x.reshape(-1, Cin)
    rf = resid.reshape(-1, Cout)
    R = xf.shape[0]
    tm = _pick_tile(R, row_tile)
    tn = _pick_col_tile(Cout, col_tile)
    cdt = resid.dtype
    w_t = w.T.astype(x.dtype)
    b2 = bias.astype(jnp.float32).reshape(1, Cout)
    y = pl.pallas_call(
        _linear_resid_kernel,
        out_shape=jax.ShapeDtypeStruct((R, Cout), cdt),
        grid_spec=pltpu.PrefetchScalarGridSpec(
            num_scalar_prefetch=0,
            grid=(R // tm, Cout // tn),
            in_specs=[
                pl.BlockSpec((tm, Cin), lambda i, j: (i, 0)),
                pl.BlockSpec((Cin, tn), lambda i, j: (0, j)),
                pl.BlockSpec((1, tn), lambda i, j: (0, j)),
                pl.BlockSpec((tm, tn), lambda i, j: (i, j)),
            ],
            out_specs=pl.BlockSpec((tm, tn), lambda i, j: (i, j)),
        ),
        compiler_params=pltpu.CompilerParams(
            dimension_semantics=("parallel", "parallel"),
            vmem_limit_bytes=_VMEM_LIMIT),
    )(xf, w_t, b2, rf)
    return y.reshape(orig_shape)


# ----------------------------------------------------------------------------
# JAX glue (LayerNorm helper, sr patchify conv, depthwise conv).
# ----------------------------------------------------------------------------
def _layernorm(x, g, b, eps=_LN_EPS):
    xf = x.astype(jnp.float32)
    mu = jnp.mean(xf, axis=-1, keepdims=True)
    var = jnp.mean((xf - mu) ** 2, axis=-1, keepdims=True)
    y = (xf - mu) * jax.lax.rsqrt(var + eps) * g + b
    return y.astype(x.dtype)


def _sr_reduce(x, H, W, sr, w_sr, b_sr):
    # Conv2d(C, C, kernel=sr, stride=sr) == patchify + linear.
    # TODO(synk): could also go through a Pallas linear; kept as XLA glue.
    B, N, C = x.shape
    x_ = jnp.transpose(x, (0, 2, 1)).reshape(B, C, H, W)
    p = x_.reshape(B, C, H // sr, sr, W // sr, sr)
    p = jnp.transpose(p, (0, 2, 4, 1, 3, 5)).reshape(B, (H // sr) * (W // sr), C * sr * sr)
    w = w_sr.reshape(C, C * sr * sr).astype(x.dtype)
    y = p @ w.T + b_sr.astype(jnp.float32)
    return y.astype(x.dtype)


def _dwconv(x, H, W, w, b):
    # 3x3 depthwise conv, stride 1, pad 1, NHWC layout (channels stay on lanes;
    # no NCHW relayout traffic).
    B, N, Ch = x.shape
    xi = x.reshape(B, H, W, Ch)
    w_hwio = jnp.transpose(w, (2, 3, 1, 0)).astype(x.dtype)       # (3, 3, 1, Ch)
    y = jax.lax.conv_general_dilated(
        xi, w_hwio, window_strides=(1, 1), padding=((1, 1), (1, 1)),
        dimension_numbers=("NHWC", "HWIO", "NHWC"), feature_group_count=Ch)
    y = y + b.astype(jnp.float32).reshape(1, 1, 1, Ch)
    return y.reshape(B, N, Ch).astype(x.dtype)


# ----------------------------------------------------------------------------
# Block forward (mirrors PyTorch Block.forward).
# ----------------------------------------------------------------------------
def block_forward(x, H, W, params, num_heads, sr_ratio):
    B, N, C = x.shape
    # --- attention branch (residual fused into the attention kernel) --------
    if sr_ratio > 1:
        xn1 = _layernorm(x, params["ln1_g"], params["ln1_b"])
        x_kv_raw = _sr_reduce(xn1, H, W, sr_ratio, params["w_sr"], params["b_sr"])
        kv_g, kv_b = params["ln_sr_g"], params["ln_sr_b"]
    else:
        x_kv_raw = x                   # kv-path LN1 is fused into the kv kernel
        kv_g, kv_b = params["ln1_g"], params["ln1_b"]
    wk_t = params["wkv"][:C].T
    wv_t = params["wkv"][C:].T
    bk = params["bkv"][:C]
    bv = params["bkv"][C:]
    k_h, v_h = kv_project_pallas(x_kv_raw, kv_g, kv_b, wk_t, bk, wv_t, bv, num_heads)
    x = attention_pallas(x, k_h, v_h, params["ln1_g"], params["ln1_b"],
                         params["wq"], params["bq"], params["wproj"],
                         params["bproj"], num_heads)

    # --- MLP branch (LN2 fused into fc1; residual fused into fc2) -----------
    h1 = mlp_fc1_pallas(x, params["ln2_g"], params["ln2_b"],
                        params["w_fc1"], params["b_fc1"])
    h1 = _dwconv(h1, H, W, params["w_dw"], params["b_dw"])
    # TODO(synk): exact erf-GELU has no guaranteed Mosaic lowering; kept as XLA
    # glue (XLA fuses it into the conv epilogue) rather than inside the fc2 kernel.
    h1 = jax.nn.gelu(h1, approximate=False)
    return linear_resid_pallas(h1, params["w_fc2"], params["b_fc2"], x)


# Pure-JAX reference for verification.
def block_reference(x, H, W, params, num_heads, sr_ratio):
    B, N, C = x.shape
    d = C // num_heads
    scale = float(d) ** -0.5
    xn1 = _layernorm(x, params["ln1_g"], params["ln1_b"])
    if sr_ratio > 1:
        x_kv = _sr_reduce(xn1, H, W, sr_ratio, params["w_sr"], params["b_sr"])
        x_kv = _layernorm(x_kv, params["ln_sr_g"], params["ln_sr_b"])
    else:
        x_kv = xn1
    Nkv = x_kv.shape[1]
    q = xn1 @ params["wq"].T + params["bq"]
    kv = x_kv @ params["wkv"].T + params["bkv"]
    k, v = kv[..., :C], kv[..., C:]
    qh = q.reshape(B, N, num_heads, d).transpose(0, 2, 1, 3)
    kh = k.reshape(B, Nkv, num_heads, d).transpose(0, 2, 1, 3)
    vh = v.reshape(B, Nkv, num_heads, d).transpose(0, 2, 1, 3)
    attn = jax.nn.softmax(jnp.einsum("bhnd,bhmd->bhnm", qh, kh) * scale, axis=-1)
    o = jnp.einsum("bhnm,bhmd->bhnd", attn, vh).transpose(0, 2, 1, 3).reshape(B, N, C)
    x = x + (o @ params["wproj"].T + params["bproj"])
    xn2 = _layernorm(x, params["ln2_g"], params["ln2_b"])
    h1 = xn2 @ params["w_fc1"].T + params["b_fc1"]
    h1 = _dwconv(h1, H, W, params["w_dw"], params["b_dw"])
    h1 = jax.nn.gelu(h1, approximate=False)
    h2 = h1 @ params["w_fc2"].T + params["b_fc2"]
    return x + h2


def init_params(key, dim, num_heads, sr_ratio, mlp_ratio=4.0):
    hidden = int(dim * mlp_ratio)
    ks = jax.random.split(key, 20)
    s = 0.05
    n = lambda k, shp: jax.random.normal(k, shp, jnp.float32) * s
    p = {
        "ln1_g": 1.0 + n(ks[0], (dim,)), "ln1_b": n(ks[1], (dim,)),
        "wq": n(ks[2], (dim, dim)), "bq": n(ks[3], (dim,)),
        "wkv": n(ks[4], (2 * dim, dim)), "bkv": n(ks[5], (2 * dim,)),
        "wproj": n(ks[6], (dim, dim)), "bproj": n(ks[7], (dim,)),
        "ln2_g": 1.0 + n(ks[8], (dim,)), "ln2_b": n(ks[9], (dim,)),
        "w_fc1": n(ks[10], (hidden, dim)), "b_fc1": n(ks[11], (hidden,)),
        "w_dw": n(ks[12], (hidden, 1, 3, 3)), "b_dw": n(ks[13], (hidden,)),
        "w_fc2": n(ks[14], (dim, hidden)), "b_fc2": n(ks[15], (dim,)),
    }
    if sr_ratio > 1:
        p["w_sr"] = n(ks[16], (dim, dim, sr_ratio, sr_ratio))
        p["b_sr"] = n(ks[17], (dim,))
        p["ln_sr_g"] = 1.0 + n(ks[18], (dim,))
        p["ln_sr_b"] = n(ks[19], (dim,))
    return p


if __name__ == "__main__":
    # Full-f32 XLA matmuls in the reference / glue so comparisons are tight.
    jax.config.update("jax_default_matmul_precision", "highest")

    key = jax.random.PRNGKey(0)
    B, H, W, C = 2, 16, 16, 128
    N = H * W
    num_heads = 2

    kx, kp1, kp2 = jax.random.split(key, 3)
    x = jax.random.normal(kx, (B, N, C), jnp.float32)

    # Case 1: sr_ratio = 1 (Identity sr / norm on the kv path).
    p1 = init_params(kp1, C, num_heads, sr_ratio=1)
    out1 = jax.block_until_ready(block_forward(x, H, W, p1, num_heads, sr_ratio=1))
    ref1 = block_reference(x, H, W, p1, num_heads, sr_ratio=1)
    assert out1.shape == (B, N, C)
    err1 = float(jnp.max(jnp.abs(out1 - ref1)))
    assert jnp.allclose(out1, ref1, atol=5e-3, rtol=5e-3), f"sr=1 mismatch {err1}"

    # Case 2: sr_ratio = 2 (patchify conv + LayerNorm on the kv path).
    p2 = init_params(kp2, C, num_heads, sr_ratio=2)
    out2 = jax.block_until_ready(block_forward(x, H, W, p2, num_heads, sr_ratio=2))
    ref2 = block_reference(x, H, W, p2, num_heads, sr_ratio=2)
    err2 = float(jnp.max(jnp.abs(out2 - ref2)))
    assert jnp.allclose(out2, ref2, atol=5e-3, rtol=5e-3), f"sr=2 mismatch {err2}"

    # Case 3: bf16 fast path (MXU-native rate); loose check vs f32 reference.
    out_bf = jax.block_until_ready(
        block_forward(x.astype(jnp.bfloat16), H, W, p2, num_heads, sr_ratio=2))
    assert out_bf.dtype == jnp.bfloat16
    err3 = float(jnp.max(jnp.abs(out_bf.astype(jnp.float32) - ref2)))
    assert jnp.allclose(out_bf.astype(jnp.float32), ref2, atol=0.15, rtol=0.15), \
        f"bf16 mismatch {err3}"

    print("KERNEL_OK")
</pallas_src>

<mosaic_0001>
module attributes {stable_mosaic.version = 11 : i64} {
  func.func @_kv_project_kernel(%arg0: i32, %arg1: i32, %arg2: memref<1x256x128xf32, #tpu.memory_space<vmem>>, %arg3: memref<1x128xf32, #tpu.memory_space<vmem>>, %arg4: memref<1x128xf32, #tpu.memory_space<vmem>>, %arg5: memref<128x128xf32, #tpu.memory_space<vmem>>, %arg6: memref<1x128xf32, #tpu.memory_space<vmem>>, %arg7: memref<128x128xf32, #tpu.memory_space<vmem>>, %arg8: memref<1x128xf32, #tpu.memory_space<vmem>>, %arg9: memref<1x2x256x64xf32, #tpu.memory_space<vmem>>, %arg10: memref<1x2x256x64xf32, #tpu.memory_space<vmem>>) attributes {dimension_semantics = [#tpu.dimension_semantics<parallel>, #tpu.dimension_semantics<parallel>], iteration_bounds = array<i64: 2, 1>, scalar_prefetch = 0 : i64, scratch_operands = 0 : i64, tpu.core_type = #tpu.core_type<tc>, window_params = [{transform_indices = @transform_0, window_bounds = array<i64: 1, 256, 128>}, {pipeline_mode = #tpu.pipeline_mode<synchronous>, transform_indices = @transform_1, window_bounds = array<i64: 1, 128>}, {pipeline_mode = #tpu.pipeline_mode<synchronous>, transform_indices = @transform_2, window_bounds = array<i64: 1, 128>}, {pipeline_mode = #tpu.pipeline_mode<synchronous>, transform_indices = @transform_3, window_bounds = array<i64: 128, 128>}, {pipeline_mode = #tpu.pipeline_mode<synchronous>, transform_indices = @transform_4, window_bounds = array<i64: 1, 128>}, {pipeline_mode = #tpu.pipeline_mode<synchronous>, transform_indices = @transform_5, window_bounds = array<i64: 128, 128>}, {pipeline_mode = #tpu.pipeline_mode<synchronous>, transform_indices = @transform_6, window_bounds = array<i64: 1, 128>}, {transform_indices = @transform_7, window_bounds = array<i64: 1, 2, 256, 64>}, {transform_indices = @transform_8, window_bounds = array<i64: 1, 2, 256, 64>}]} {
    %c0 = arith.constant 0 : index
    %c0_0 = arith.constant 0 : index
    %c0_1 = arith.constant 0 : index
    %0 = vector.load %arg2[%c0, %c0_0, %c0_1] : memref<1x256x128xf32, #tpu.memory_space<vmem>>, vector<1x256x128xf32>
    %1 = vector.shape_cast %0 : vector<1x256x128xf32> to vector<256x128xf32>
    %c0_2 = arith.constant 0 : index
    %c0_3 = arith.constant 0 : index
    %2 = vector.load %arg3[%c0_2, %c0_3] : memref<1x128xf32, #tpu.memory_space<vmem>>, vector<1x128xf32>
    %c0_4 = arith.constant 0 : index
    %c0_5 = arith.constant 0 : index
    %3 = vector.load %arg4[%c0_4, %c0_5] : memref<1x128xf32, #tpu.memory_space<vmem>>, vector<1x128xf32>
    %cst = arith.constant dense<0.000000e+00> : vector<256xf32>
    %4 = vector.multi_reduction <add>, %1, %cst [1] : vector<256x128xf32> to vector<256xf32>
    %5 = vector.shape_cast %4 : vector<256xf32> to vector<256x1xf32>
    %cst_6 = arith.constant 1.280000e+02 : f32
    %6 = vector.broadcast %cst_6 : f32 to vector<256x1xf32>
    %7 = arith.divf %5, %6 : vector<256x1xf32>
    %8 = vector.broadcast %7 : vector<256x1xf32> to vector<256x128xf32>
    %9 = arith.subf %1, %8 : vector<256x128xf32>
    %10 = arith.mulf %9, %9 : vector<256x128xf32>
    %cst_7 = arith.constant dense<0.000000e+00> : vector<256xf32>
    %11 = vector.multi_reduction <add>, %10, %cst_7 [1] : vector<256x128xf32> to vector<256xf32>
    %12 = vector.shape_cast %11 : vector<256xf32> to vector<256x1xf32>
    %cst_8 = arith.constant 1.280000e+02 : f32
    %13 = vector.broadcast %cst_8 : f32 to vector<256x1xf32>
    %14 = arith.divf %12, %13 : vector<256x1xf32>
    %15 = vector.broadcast %7 : vector<256x1xf32> to vector<256x128xf32>
    %16 = arith.subf %1, %15 : vector<256x128xf32>
    %cst_9 = arith.constant 9.99999974E-6 : f32
    %17 = vector.broadcast %cst_9 : f32 to vector<256x1xf32>
    %18 = arith.addf %14, %17 : vector<256x1xf32>
    %19 = math.rsqrt %18 : vector<256x1xf32>
    %20 = vector.broadcast %19 : vector<256x1xf32> to vector<256x128xf32>
    %21 = arith.mulf %16, %20 : vector<256x128xf32>
    %22 = vector.broadcast %2 : vector<1x128xf32> to vector<256x128xf32>
    %23 = arith.mulf %21, %22 : vector<256x128xf32>
    %24 = vector.broadcast %3 : vector<1x128xf32> to vector<256x128xf32>
    %25 = arith.addf %23, %24 : vector<256x128xf32>
    %c0_10 = arith.constant 0 : index
    %c0_11 = arith.constant 0 : index
    %26 = vector.load %arg5[%c0_10, %c0_11] : memref<128x128xf32, #tpu.memory_space<vmem>>, vector<128x128xf32>
    %cst_12 = arith.constant dense<0.000000e+00> : vector<256x128xf32>
    %27 = tpu.matmul %25, %26, %cst_12 {dimension_numbers = #tpu.dot_dimension_numbers<[1], [0], [0], [1], [0, 0, 1, 1], [], []>, precision = #tpu.contract_precision<fp32>} : vector<256x128xf32>, vector<128x128xf32>, vector<256x128xf32> -> vector<256x128xf32>
    %c0_13 = arith.constant 0 : index
    %c0_14 = arith.constant 0 : index
    %28 = vector.load %arg6[%c0_13, %c0_14] : memref<1x128xf32, #tpu.memory_space<vmem>>, vector<1x128xf32>
    %29 = vector.broadcast %28 : vector<1x128xf32> to vector<256x128xf32>
    %30 = arith.addf %27, %29 : vector<256x128xf32>
    %c0_15 = arith.constant 0 : index
    %c0_16 = arith.constant 0 : index
    %31 = vector.load %arg7[%c0_15, %c0_16] : memref<128x128xf32, #tpu.memory_space<vmem>>, vector<128x128xf32>
    %cst_17 = arith.constant dense<0.000000e+00> : vector<256x128xf32>
    %32 = tpu.matmul %25, %31, %cst_17 {dimension_numbers = #tpu.dot_dimension_numbers<[1], [0], [0], [1], [0, 0, 1, 1], [], []>, precision = #tpu.contract_precision<fp32>} : vector<256x128xf32>, vector<128x128xf32>, vector<256x128xf32> -> vector<256x128xf32>
    %c0_18 = arith.constant 0 : index
    %c0_19 = arith.constant 0 : index
    %33 = vector.load %arg8[%c0_18, %c0_19] : memref<1x128xf32, #tpu.memory_space<vmem>>, vector<1x128xf32>
    %34 = vector.broadcast %33 : vector<1x128xf32> to vector<256x128xf32>
    %35 = arith.addf %32, %34 : vector<256x128xf32>
    %36 = vector.extract_strided_slice %30 {offsets = [0, 0], sizes = [256, 64], strides = [1, 1]} : vector<256x128xf32> to vector<256x64xf32>
    %c0_20 = arith.constant 0 : index
    %c0_21 = arith.constant 0 : index
    %c0_22 = arith.constant 0 : index
    %c0_23 = arith.constant 0 : index
    %37 = vector.load %arg9[%c0_20, %c0_21, %c0_22, %c0_23] : memref<1x2x256x64xf32, #tpu.memory_space<vmem>>, vector<1x1x256x64xf32>
    %38 = vector.shape_cast %37 : vector<1x1x256x64xf32> to vector<256x64xf32>
    %39 = vector.shape_cast %36 : vector<256x64xf32> to vector<1x1x256x64xf32>
    tpu.vector_store %arg9[%c0_20, %c0_21, %c0_22, %c0_23], %39 {strides = array<i32>} : memref<1x2x256x64xf32, #tpu.memory_space<vmem>>, vector<1x1x256x64xf32>,
    %40 = vector.extract_strided_slice %35 {offsets = [0, 0], sizes = [256, 64], strides = [1, 1]} : vector<256x128xf32> to vector<256x64xf32>
    %c0_24 = arith.constant 0 : index
    %c0_25 = arith.constant 0 : index
    %c0_26 = arith.constant 0 : index
    %c0_27 = arith.constant 0 : index
    %41 = vector.load %arg10[%c0_24, %c0_25, %c0_26, %c0_27] : memref<1x2x256x64xf32, #tpu.memory_space<vmem>>, vector<1x1x256x64xf32>
    %42 = vector.shape_cast %41 : vector<1x1x256x64xf32> to vector<256x64xf32>
    %43 = vector.shape_cast %40 : vector<256x64xf32> to vector<1x1x256x64xf32>
    tpu.vector_store %arg10[%c0_24, %c0_25, %c0_26, %c0_27], %43 {strides = array<i32>} : memref<1x2x256x64xf32, #tpu.memory_space<vmem>>, vector<1x1x256x64xf32>,
    %44 = vector.extract_strided_slice %30 {offsets = [0, 64], sizes = [256, 64], strides = [1, 1]} : vector<256x128xf32> to vector<256x64xf32>
    %c0_28 = arith.constant 0 : index
    %c1 = arith.constant 1 : index
    %c0_29 = arith.constant 0 : index
    %c0_30 = arith.constant 0 : index
    %45 = vector.load %arg9[%c0_28, %c1, %c0_29, %c0_30] : memref<1x2x256x64xf32, #tpu.memory_space<vmem>>, vector<1x1x256x64xf32>
    %46 = vector.shape_cast %45 : vector<1x1x256x64xf32> to vector<256x64xf32>
    %47 = vector.shape_cast %44 : vector<256x64xf32> to vector<1x1x256x64xf32>
    tpu.vector_store %arg9[%c0_28, %c1, %c0_29, %c0_30], %47 {strides = array<i32>} : memref<1x2x256x64xf32, #tpu.memory_space<vmem>>, vector<1x1x256x64xf32>,
    %48 = vector.extract_strided_slice %35 {offsets = [0, 64], sizes = [256, 64], strides = [1, 1]} : vector<256x128xf32> to vector<256x64xf32>
    %c0_31 = arith.constant 0 : index
    %c1_32 = arith.constant 1 : index
    %c0_33 = arith.constant 0 : index
    %c0_34 = arith.constant 0 : index
    %49 = vector.load %arg10[%c0_31, %c1_32, %c0_33, %c0_34] : memref<1x2x256x64xf32, #tpu.memory_space<vmem>>, vector<1x1x256x64xf32>
    %50 = vector.shape_cast %49 : vector<1x1x256x64xf32> to vector<256x64xf32>
    %51 = vector.shape_cast %48 : vector<256x64xf32> to vector<1x1x256x64xf32>
    tpu.vector_store %arg10[%c0_31, %c1_32, %c0_33, %c0_34], %51 {strides = array<i32>} : memref<1x2x256x64xf32, #tpu.memory_space<vmem>>, vector<1x1x256x64xf32>,
    return
  }
  func.func @transform_0(%arg0: i32, %arg1: i32) -> (i32, i32, i32) {
    %c0_i32 = arith.constant 0 : i32
    %c0_i32_0 = arith.constant 0 : i32
    return %arg0, %arg1, %c0_i32 : i32, i32, i32
  }
  func.func @transform_1(%arg0: i32, %arg1: i32) -> (i32, i32) {
    %c0_i32 = arith.constant 0 : i32
    %c0_i32_0 = arith.constant 0 : i32
    %c0_i32_1 = arith.constant 0 : i32
    return %c0_i32, %c0_i32_0 : i32, i32
  }
  func.func @transform_2(%arg0: i32, %arg1: i32) -> (i32, i32) {
    %c0_i32 = arith.constant 0 : i32
    %c0_i32_0 = arith.constant 0 : i32
    %c0_i32_1 = arith.constant 0 : i32
    return %c0_i32, %c0_i32_0 : i32, i32
  }
  func.func @transform_3(%arg0: i32, %arg1: i32) -> (i32, i32) {
    %c0_i32 = arith.constant 0 : i32
    %c0_i32_0 = arith.constant 0 : i32
    %c0_i32_1 = arith.constant 0 : i32
    return %c0_i32, %c0_i32_0 : i32, i32
  }
  func.func @transform_4(%arg0: i32, %arg1: i32) -> (i32, i32) {
    %c0_i32 = arith.constant 0 : i32
    %c0_i32_0 = arith.constant 0 : i32
    %c0_i32_1 = arith.constant 0 : i32
    return %c0_i32, %c0_i32_0 : i32, i32
  }
  func.func @transform_5(%arg0: i32, %arg1: i32) -> (i32, i32) {
    %c0_i32 = arith.constant 0 : i32
    %c0_i32_0 = arith.constant 0 : i32
    %c0_i32_1 = arith.constant 0 : i32
    return %c0_i32, %c0_i32_0 : i32, i32
  }
  func.func @transform_6(%arg0: i32, %arg1: i32) -> (i32, i32) {
    %c0_i32 = arith.constant 0 : i32
    %c0_i32_0 = arith.constant 0 : i32
    %c0_i32_1 = arith.constant 0 : i32
    return %c0_i32, %c0_i32_0 : i32, i32
  }
  func.func @transform_7(%arg0: i32, %arg1: i32) -> (i32, i32, i32, i32) {
    %c0_i32 = arith.constant 0 : i32
    %c0_i32_0 = arith.constant 0 : i32
    %c0_i32_1 = arith.constant 0 : i32
    return %arg0, %c0_i32, %arg1, %c0_i32_0 : i32, i32, i32, i32
  }
  func.func @transform_8(%arg0: i32, %arg1: i32) -> (i32, i32, i32, i32) {
    %c0_i32 = arith.constant 0 : i32
    %c0_i32_0 = arith.constant 0 : i32
    %c0_i32_1 = arith.constant 0 : i32
    return %arg0, %c0_i32, %arg1, %c0_i32_0 : i32, i32, i32, i32
  }
}

</mosaic_0001>

<llo_original>
// kernel: tpu_custom_call.1
$region0: #{tpu_custom_call.1}
  #allocation0 [shape = 'u32[]', space=smem, size = 0x4, offset = 0x4, fixed_abs, tag = 'smem constant byte address 0x4 - core index']
  #allocation1 [shape = 'u32[144,128]{1,0:T(1,128)}', space=vmem, size = 0x12000, scoped, tag = 'internal scratch']
  %s0 = inlined_call_operand.hbm [shape: f32[2,256,128], index: 0, kind: input, shape index: {}]
  %s1 = inlined_call_operand.vmem [shape: f32[1,128], index: 1, kind: input, shape index: {}]
  %s2 = inlined_call_operand.vmem [shape: f32[1,128], index: 2, kind: input, shape index: {}]
  %s3 = inlined_call_operand.hbm [shape: f32[128,128], index: 3, kind: input, shape index: {}]
  %s4 = inlined_call_operand.vmem [shape: f32[1,128], index: 4, kind: input, shape index: {}]
  %s5 = inlined_call_operand.hbm [shape: f32[128,128], index: 5, kind: input, shape index: {}]
  %s6 = inlined_call_operand.vmem [shape: f32[1,128], index: 6, kind: input, shape index: {}]
  %s7 = inlined_call_operand.vmem [shape: f32[2,2,256,64], index: 7, kind: output, shape index: {0}]
  %s8 = inlined_call_operand.vmem [shape: f32[2,2,256,64], index: 8, kind: output, shape index: {1}]
  %9 = xla_tuple %s7, %s8
  %s10 = sld [smem:[#allocation0]]
  $region81: #{tpu_custom_call.1} parent=0
    _
  %s12 = ssub.s32 1, %s10
  %s13 = scalar_select 0, %s12, %s10
  $region1: #{tpu_custom_call.1} parent=0
    #allocation2 [shape = 'u8[262144]{0}', space=vmem, size = 0x40000, scoped, tag = 'input window, operand 0']
    #allocation3 [shape = 's32[2]{0}', space=sflag, size = 0x8, scoped, tag = 'scoped memory for tpu_custom_call.1']
    #allocation4 [shape = 'u8[65536]{0}', space=vmem, size = 0x10000, scoped, tag = 'input window, operand 3, single buffered']
    #allocation5 [shape = 's32[1]{0}', space=sflag, size = 0x4, scoped, tag = 'scoped memory for tpu_custom_call.1']
    #allocation6 [shape = 'u8[65536]{0}', space=vmem, size = 0x10000, scoped, tag = 'input window, operand 5, single buffered']
    %14 = vsyncpa [#allocation3], 0
    %s15 = scalar_lea.sflag [#allocation3], 1
    %16 = vsyncpa %s15, 0
    %17 = vsyncpa [#allocation5], 0
    loop: start=0, step=1, limit=4
    $region2: #{tpu_custom_call.1} parent=1 // loop_pre_header
      _
    $region3: #{tpu_custom_call.1} parent=1 // loop_header
      %s19 = sphi 0, %s23
      %p20 = scmp.ge.s32.totalorder %s19, 4
      %s26 = sphi 0, %s38
      %s27 = sphi 0, %s34
      %s28 = sphi 0, %s26
      %s29 = sphi 0, %s27
      %s30 = sphi 0, %s28
      %s31 = sphi 0, %s29
      %s43 = sphi 0, %s45
      %s46 = sphi 0, %s43
      %s47 = sphi 0, %s46
      %s63 = sphi 0, %s47
      %s67 = sphi 0, %s67
      %s69 = sphi 0, %s67
      %s70 = sphi 0, %s69
      %s84 = sphi 0, %s70
      %s88 = sphi 0, %s88
      %s90 = sphi 0, %s88
      %s91 = sphi 0, %s90
      %s105 = sphi 0, %s91
      %s109 = sphi 0, %s109
      %s111 = sphi 0, %s109
      %s112 = sphi 0, %s111
      %s126 = sphi 0, %s112
      %s130 = sphi 0, %s130
      %s132 = sphi 0, %s130
      %s133 = sphi 0, %s132
      %s147 = sphi 0, %s133
      %s151 = sphi 0, %s151
      %s153 = sphi 0, %s151
      %s154 = sphi 0, %s153
      %s168 = sphi 0, %s154
      %s172 = sphi 0, %s172
      %s174 = sphi 0, %s172
      %s175 = sphi 0, %s174
      %s189 = sphi 0, %s175
      %s197 = sphi 0, %s199
      %s200 = sphi 0, %s197
      %s201 = sphi 0, %s200
      %s217 = sphi 0, %s201
      %s225 = sphi 0, %s227
      %s228 = sphi 0, %s225
      %s229 = sphi 0, %s228
      %s245 = sphi 0, %s229
    $region4: #{tpu_custom_call.1} parent=1 // loop_header_branch
      %22 = sbr.rel (%p20) target = $region8
    $region5: #{tpu_custom_call.1} parent=1 // loop_body
      %s24 = ssub.s32 %s19, 1
      %s25 = ssub.s32 %s19, 2
      %s32 = sadd.s32 1, %s27
      %p33 = scmp.ge.s32.totalorder %s32, 1
      %s34 = scalar_select %p33, 0, %s32
      %s35 = sadd.s32 1, %s26
      %s36 = scalar_select %p33, %s35, %s26
      %p37 = scmp.ge.s32.totalorder %s36, 2
      %s38 = scalar_select %p37, 0, %s36
      %s39 = ssub.s32 %s26, %s38
      %s40 = ssub.s32 %s27, %s34
      %s41 = sor.u32 %s39, %s40
      %p42 = scmp.eq.s32.totalorder %s41, 0
      %s44 = sadd.s32 %s43, 1
      %s45 = scalar_select %p42, %s43, %s44
      %p48 = pneg %p42
      %p49 = scmp.eq.s32.totalorder %s19, 1
      %p50 = por %p48, %p49
      %p51 = scmp.ne.s32.totalorder %s43, %s46
      %p52 = scmp.eq.s32.totalorder %s19, 0
      %p53 = por %p51, %p52
      %p54 = scmp.ne.s32.totalorder %s43, %s46
      %p55 = scmp.eq.s32.totalorder %s24, 1
      %p56 = por %p54, %p55
      %p57 = scmp.ne.s32.totalorder %s46, %s47
      %p58 = scmp.eq.s32.totalorder %s24, 0
      %p59 = por %p57, %p58
      %p60 = scmp.ne.s32.totalorder %s46, %s47
      %p61 = scmp.eq.s32.totalorder %s25, 1
      %p62 = por %p60, %p61
      %p64 = scmp.ne.s32.totalorder %s47, %s63
      %p65 = scmp.eq.s32.totalorder %s25, 0
      %p66 = por %p64, %p65
      %s68 = sadd.s32 %s67, 1
      %p71 = scmp.eq.s32.totalorder %s19, 1
      %p72 = scmp.ne.s32.totalorder %s67, %s69
      %p73 = scmp.eq.s32.totalorder %s19, 0
      %p74 = por %p72, %p73
      %p75 = scmp.ne.s32.totalorder %s67, %s69
      %p76 = scmp.eq.s32.totalorder %s24, 1
      %p77 = por %p75, %p76
      %p78 = scmp.ne.s32.totalorder %s69, %s70
      %p79 = scmp.eq.s32.totalorder %s24, 0
      %p80 = por %p78, %p79
      %p81 = scmp.ne.s32.totalorder %s69, %s70
      %p82 = scmp.eq.s32.totalorder %s25, 1
      %p83 = por %p81, %p82
      %p85 = scmp.ne.s32.totalorder %s70, %s84
      %p86 = scmp.eq.s32.totalorder %s25, 0
      %p87 = por %p85, %p86
      %s89 = sadd.s32 %s88, 1
      %p92 = scmp.eq.s32.totalorder %s19, 1
      %p93 = scmp.ne.s32.totalorder %s88, %s90
      %p94 = scmp.eq.s32.totalorder %s19, 0
      %p95 = por %p93, %p94
      %p96 = scmp.ne.s32.totalorder %s88, %s90
      %p97 = scmp.eq.s32.totalorder %s24, 1
      %p98 = por %p96, %p97
      %p99 = scmp.ne.s32.totalorder %s90, %s91
      %p100 = scmp.eq.s32.totalorder %s24, 0
      %p101 = por %p99, %p100
      %p102 = scmp.ne.s32.totalorder %s90, %s91
      %p103 = scmp.eq.s32.totalorder %s25, 1
      %p104 = por %p102, %p103
      %p106 = scmp.ne.s32.totalorder %s91, %s105
      %p107 = scmp.eq.s32.totalorder %s25, 0
      %p108 = por %p106, %p107
      %s110 = sadd.s32 %s109, 1
      %p113 = scmp.eq.s32.totalorder %s19, 1
      %p114 = scmp.ne.s32.totalorder %s109, %s111
      %p115 = scmp.eq.s32.totalorder %s19, 0
      %p116 = por %p114, %p115
      %p117 = scmp.ne.s32.totalorder %s109, %s111
      %p118 = scmp.eq.s32.totalorder %s24, 1
      %p119 = por %p117, %p118
      %p120 = scmp.ne.s32.totalorder %s111, %s112
      %p121 = scmp.eq.s32.totalorder %s24, 0
      %p122 = por %p120, %p121
      %p123 = scmp.ne.s32.totalorder %s111, %s112
      %p124 = scmp.eq.s32.totalorder %s25, 1
      %p125 = por %p123, %p124
      %p127 = scmp.ne.s32.totalorder %s112, %s126
      %p128 = scmp.eq.s32.totalorder %s25, 0
      %p129 = por %p127, %p128
      %s131 = sadd.s32 %s130, 1
      %p134 = scmp.eq.s32.totalorder %s19, 1
      %p135 = scmp.ne.s32.totalorder %s130, %s132
      %p136 = scmp.eq.s32.totalorder %s19, 0
      %p137 = por %p135, %p136
      %p138 = scmp.ne.s32.totalorder %s130, %s132
      %p139 = scmp.eq.s32.totalorder %s24, 1
      %p140 = por %p138, %p139
      %p141 = scmp.ne.s32.totalorder %s132, %s133
      %p142 = scmp.eq.s32.totalorder %s24, 0
      %p143 = por %p141, %p142
      %p144 = scmp.ne.s32.totalorder %s132, %s133
      %p145 = scmp.eq.s32.totalorder %s25, 1
      %p146 = por %p144, %p145
      %p148 = scmp.ne.s32.totalorder %s133, %s147
      %p149 = scmp.eq.s32.totalorder %s25, 0
      %p150 = por %p148, %p149
      %s152 = sadd.s32 %s151, 1
      %p155 = scmp.eq.s32.totalorder %s19, 1
      %p156 = scmp.ne.s32.totalorder %s151, %s153
      %p157 = scmp.eq.s32.totalorder %s19, 0
      %p158 = por %p156, %p157
      %p159 = scmp.ne.s32.totalorder %s151, %s153
      %p160 = scmp.eq.s32.totalorder %s24, 1
      %p161 = por %p159, %p160
      %p162 = scmp.ne.s32.totalorder %s153, %s154
      %p163 = scmp.eq.s32.totalorder %s24, 0
      %p164 = por %p162, %p163
      %p165 = scmp.ne.s32.totalorder %s153, %s154
      %p166 = scmp.eq.s32.totalorder %s25, 1
      %p167 = por %p165, %p166
      %p169 = scmp.ne.s32.totalorder %s154, %s168
      %p170 = scmp.eq.s32.totalorder %s25, 0
      %p171 = por %p169, %p170
      %s173 = sadd.s32 %s172, 1
      %p176 = scmp.eq.s32.totalorder %s19, 1
      %p177 = scmp.ne.s32.totalorder %s172, %s174
      %p178 = scmp.eq.s32.totalorder %s19, 0
      %p179 = por %p177, %p178
      %p180 = scmp.ne.s32.totalorder %s172, %s174
      %p181 = scmp.eq.s32.totalorder %s24, 1
      %p182 = por %p180, %p181
      %p183 = scmp.ne.s32.totalorder %s174, %s175
      %p184 = scmp.eq.s32.totalorder %s24, 0
      %p185 = por %p183, %p184
      %p186 = scmp.ne.s32.totalorder %s174, %s175
      %p187 = scmp.eq.s32.totalorder %s25, 1
      %p188 = por %p186, %p187
      %p190 = scmp.ne.s32.totalorder %s175, %s189
      %p191 = scmp.eq.s32.totalorder %s25, 0
      %p192 = por %p190, %p191
      %s193 = ssub.s32 %s26, %s38
      %s194 = ssub.s32 %s27, %s34
      %s195 = sor.u32 %s193, %s194
      %p196 = scmp.eq.s32.totalorder %s195, 0
      %s198 = sadd.s32 %s197, 1
      %s199 = scalar_select %p196, %s197, %s198
      %p202 = pneg %p196
      %p203 = scmp.eq.s32.totalorder %s19, 1
      %p204 = por %p202, %p203
      %p205 = scmp.ne.s32.totalorder %s197, %s200
      %p206 = scmp.eq.s32.totalorder %s19, 0
      %p207 = por %p205, %p206
      %p208 = scmp.ne.s32.totalorder %s197, %s200
      %p209 = scmp.eq.s32.totalorder %s24, 1
      %p210 = por %p208, %p209
      %p211 = scmp.ne.s32.totalorder %s200, %s201
      %p212 = scmp.eq.s32.totalorder %s24, 0
      %p213 = por %p211, %p212
      %p214 = scmp.ne.s32.totalorder %s200, %s201
      %p215 = scmp.eq.s32.totalorder %s25, 1
      %p216 = por %p214, %p215
      %p218 = scmp.ne.s32.totalorder %s201, %s217
      %p219 = scmp.eq.s32.totalorder %s25, 0
      %p220 = por %p218, %p219
      %s221 = ssub.s32 %s26, %s38
      %s222 = ssub.s32 %s27, %s34
      %s223 = sor.u32 %s221, %s222
      %p224 = scmp.eq.s32.totalorder %s223, 0
      %s226 = sadd.s32 %s225, 1
      %s227 = scalar_select %p224, %s225, %s226
      %p230 = pneg %p224
      %p231 = scmp.eq.s32.totalorder %s19, 1
      %p232 = por %p230, %p231
      %p233 = scmp.ne.s32.totalorder %s225, %s228
      %p234 = scmp.eq.s32.totalorder %s19, 0
      %p235 = por %p233, %p234
      %p236 = scmp.ne.s32.totalorder %s225, %s228
      %p237 = scmp.eq.s32.totalorder %s24, 1
      %p238 = por %p236, %p237
      %p239 = scmp.ne.s32.totalorder %s228, %s229
      %p240 = scmp.eq.s32.totalorder %s24, 0
      %p241 = por %p239, %p240
      %p242 = scmp.ne.s32.totalorder %s228, %s229
      %p243 = scmp.eq.s32.totalorder %s25, 1
      %p244 = por %p242, %p243
      %p246 = scmp.ne.s32.totalorder %s229, %s245
      %p247 = scmp.eq.s32.totalorder %s25, 0
      %p248 = por %p246, %p247
      %p249 = scmp.le.s32.totalorder 1, %s19
      %p250 = scmp.lt.s32.totalorder %s19, 3
      %p251 = pnand %p249, %p250
      %p252 = pneg %p251
      // Predicated region
      $region9: #{tpu_custom_call.1} parent=5 // pred_check
        _
      $region10: #{tpu_custom_call.1} parent=5 // pred_check_branch
        %254 = sbr.rel (%p251) target = $region12
      $region11: #{tpu_custom_call.1} parent=5 // pred_region
        %s255 = ssub.s32 %s19, 1
        // Predicated region
        $region13: #{tpu_custom_call.1} parent=11 // pred_check
          %p256 = pneg %p80
        $region14: #{tpu_custom_call.1} parent=11 // pred_check_branch
          %258 = sbr.rel (%p256) target = $region16
        $region15: #{tpu_custom_call.1} parent=11 // pred_region
          _
        $region16: #{tpu_custom_call.1} parent=11 // pred_fallthru
          _
        // Predicated region
        $region17: #{tpu_custom_call.1} parent=11 // pred_check
          %p259 = pneg %p101
        $region18: #{tpu_custom_call.1} parent=11 // pred_check_branch
          %261 = sbr.rel (%p259) target = $region20
        $region19: #{tpu_custom_call.1} parent=11 // pred_region
          _
        $region20: #{tpu_custom_call.1} parent=11 // pred_fallthru
          _
        // Predicated region
        $region21: #{tpu_custom_call.1} parent=11 // pred_check
          %p262 = pneg %p122
        $region22: #{tpu_custom_call.1} parent=11 // pred_check_branch
          %264 = sbr.rel (%p262) target = $region24
        $region23: #{tpu_custom_call.1} parent=11 // pred_region
          %s266 = ssub.s32 2048, 2048
          %267 = vsyncadd [#allocation5], %s266
          %s268 = sshll.u32 [#allocation4], 4
          %s269 = int_to_ptr.vmem [resolvable:$true] %s268
          %274 = dma.hbm_to_vmem [thread:$0]  %s3, 2048, %s269, [#allocation5], 128, 128, 8
        $region24: #{tpu_custom_call.1} parent=11 // pred_fallthru
          _
        // Predicated region
        $region25: #{tpu_custom_call.1} parent=11 // pred_check
          %p275 = pneg %p143
        $region26: #{tpu_custom_call.1} parent=11 // pred_check_branch
          %277 = sbr.rel (%p275) target = $region28
        $region27: #{tpu_custom_call.1} parent=11 // pred_region
          _
        $region28: #{tpu_custom_call.1} parent=11 // pred_fallthru
          _
        // Predicated region
        $region29: #{tpu_custom_call.1} parent=11 // pred_check
          %p278 = pneg %p164
        $region30: #{tpu_custom_call.1} parent=11 // pred_check_branch
          %280 = sbr.rel (%p278) target = $region32
        $region31: #{tpu_custom_call.1} parent=11 // pred_region
          %s282 = ssub.s32 2048, 2048
          %283 = vsyncadd [#allocation5], %s282
          %s284 = sshll.u32 [#allocation6], 4
          %s285 = int_to_ptr.vmem [resolvable:$true] %s284
          %290 = dma.hbm_to_vmem [thread:$0]  %s5, 2048, %s285, [#allocation5], 128, 128, 8
        $region32: #{tpu_custom_call.1} parent=11 // pred_fallthru
          _
        // Predicated region
        $region33: #{tpu_custom_call.1} parent=11 // pred_check
          %p291 = pneg %p185
        $region34: #{tpu_custom_call.1} parent=11 // pred_check_branch
          %293 = sbr.rel (%p291) target = $region36
        $region35: #{tpu_custom_call.1} parent=11 // pred_region
          _
        $region36: #{tpu_custom_call.1} parent=11 // pred_fallthru
          _
      $region12: #{tpu_custom_call.1} parent=5 // pred_fallthru
        _
      %p294 = scmp.lt.s32.totalorder %s19, 2
      // Predicated region
      $region37: #{tpu_custom_call.1} parent=5 // pred_check
        %p295 = pneg %p294
      $region38: #{tpu_custom_call.1} parent=5 // pred_check_branch
        %297 = sbr.rel (%p295) target = $region40
      $region39: #{tpu_custom_call.1} parent=5 // pred_region
        // Predicated region
        $region41: #{tpu_custom_call.1} parent=39 // pred_check
          %p298 = pneg %p53
        $region42: #{tpu_custom_call.1} parent=39 // pred_check_branch
          %300 = sbr.rel (%p298) target = $region44
        $region43: #{tpu_custom_call.1} parent=39 // pred_region
          %s301 = sand.u32 %s43, 1
          %s302 = scalar_lea.sflag [#allocation3], %s301
          %s303 = sand.u32 %s43, 1
          %s304 = smul.addr %s303, 256
          %s305 = scalar_lea.vmem [#allocation2], %s304
          %s306 = smul.u32 32, %s27
          %s308 = ssub.s32 4096, 4096
          %309 = vsyncadd %s302, %s308
          %s310 = smul.addr %s26, 32
          %s311 = sadd.s32 %s306, %s310
          %s312 = smul.addr %s311, 128
          %s313 = scalar_lea.hbm %s0, %s312
          %s314 = sshll.u32 %s305, 4
          %s315 = int_to_ptr.vmem [resolvable:$true] %s314
          %320 = dma.hbm_to_vmem [thread:$0]  %s313, 4096, %s315, %s302, 128, 128, 8
        $region44: #{tpu_custom_call.1} parent=39 // pred_fallthru
          _
      $region40: #{tpu_custom_call.1} parent=5 // pred_fallthru
        _
      %p321 = scmp.le.s32.totalorder 1, %s19
      %p322 = scmp.lt.s32.totalorder %s19, 3
      %p323 = pnand %p321, %p322
      %p324 = pneg %p323
      // Predicated region
      $region45: #{tpu_custom_call.1} parent=5 // pred_check
        _
      $region46: #{tpu_custom_call.1} parent=5 // pred_check_branch
        %326 = sbr.rel (%p323) target = $region48
      $region47: #{tpu_custom_call.1} parent=5 // pred_region
        %s327 = ssub.s32 %s19, 1
        %s328 = sand.u32 %s46, 1
        %s329 = scalar_lea.sflag [#allocation3], %s328
        %s330 = sand.u32 %s46, 1
        %s331 = smul.addr %s330, 256
        %s332 = scalar_lea.vmem [#allocation2], %s331
        // Predicated region
        $region49: #{tpu_custom_call.1} parent=47 // pred_check
          %p333 = pneg %p59
        $region50: #{tpu_custom_call.1} parent=47 // pred_check_branch
          %335 = sbr.rel (%p333) target = $region52
        $region51: #{tpu_custom_call.1} parent=47 // pred_region
          %336 = dma.done %s329, 4096
        $region52: #{tpu_custom_call.1} parent=47 // pred_fallthru
          _
        // Predicated region
        $region53: #{tpu_custom_call.1} parent=47 // pred_check
          %p337 = pneg %p122
        $region54: #{tpu_custom_call.1} parent=47 // pred_check_branch
          %339 = sbr.rel (%p337) target = $region56
        $region55: #{tpu_custom_call.1} parent=47 // pred_region
          %340 = dma.done [#allocation5], 2048
        $region56: #{tpu_custom_call.1} parent=47 // pred_fallthru
          _
        // Predicated region
        $region57: #{tpu_custom_call.1} parent=47 // pred_check
          %p341 = pneg %p164
        $region58: #{tpu_custom_call.1} parent=47 // pred_check_branch
          %343 = sbr.rel (%p341) target = $region60
        $region59: #{tpu_custom_call.1} parent=47 // pred_region
          %344 = dma.done [#allocation5], 2048
        $region60: #{tpu_custom_call.1} parent=47 // pred_fallthru
          _
        %s345 = sand.u32 %s46, 1
        %s346 = scalar_lea.sflag [#allocation3], %s345
        %s347 = sand.u32 %s46, 1
        %s348 = smul.addr %s347, 256
        %s349 = scalar_lea.vmem [#allocation2], %s348
        %p350 = pneg %p59
        %p351 = pneg %p56
        %p352 = pneg %p80
        %p353 = pneg %p77
        %p354 = pneg %p101
        %p355 = pneg %p98
        %p356 = pneg %p122
        %p357 = pneg %p119
        %p358 = pneg %p143
        %p359 = pneg %p140
        %p360 = pneg %p164
        %p361 = pneg %p161
        %p362 = pneg %p185
        %p363 = pneg %p182
        %p364 = pneg %p213
        %p365 = pneg %p210
        %s366 = smul.u32 32, %s29
        %p367 = scmp.lt.s32.totalorder %s28, 1
        %s368 = scalar_select %p367, %s28, 1
        %p369 = scmp.lt.s32.totalorder %s366, 31
        %s370 = scalar_select %p369, %s366, 31
        %s371 = smul.addr %s368, 64
        %s372 = sadd.s32 %s370, %s371
        %s373 = smul.addr %s372, 8
        %s374 = scalar_lea.vmem %s7, %s373
        %p375 = pneg %p241
        %p376 = pneg %p238
        %s377 = smul.u32 32, %s29
        %p378 = scmp.lt.s32.totalorder %s28, 1
        %s379 = scalar_select %p378, %s28, 1
        %p380 = scmp.lt.s32.totalorder %s377, 31
        %s381 = scalar_select %p380, %s377, 31
        %s382 = smul.addr %s379, 64
        %s383 = sadd.s32 %s381, %s382
        %s384 = smul.addr %s383, 8
        %s385 = scalar_lea.vmem %s8, %s384
        %s386 = smul.u32 32, %s29
        %s387 = smul.u32 32, %s29
        %p388 = scmp.lt.s32.totalorder %s28, 1
        %s389 = scalar_select %p388, %s28, 1
        %p390 = scmp.lt.s32.totalorder %s387, 31
        %s391 = scalar_select %p390, %s387, 31
        %s392 = smul.addr %s389, 64
        %s393 = sadd.s32 %s391, %s392
        %s394 = smul.addr %s393, 8
        %s395 = scalar_lea.vmem %s7, %s394
        %s396 = smul.u32 32, %s29
        %s397 = smul.u32 32, %s29
        %p398 = scmp.lt.s32.totalorder %s28, 1
        %s399 = scalar_select %p398, %s28, 1
        %p400 = scmp.lt.s32.totalorder %s397, 31
        %s401 = scalar_select %p400, %s397, 31
        %s402 = smul.addr %s399, 64
        %s403 = sadd.s32 %s401, %s402
        %s404 = smul.addr %s403, 8
        %s405 = scalar_lea.vmem %s8, %s404
        %s406 = smul.u32 32, %s29
        %v407 = vld [vmem:[%s332] sm:$0xff]
        %v408 = vld [vmem:[%s332 + $0x8] sm:$0xff]
        %v409 = vld [vmem:[%s332 + $0x10] sm:$0xff]
        %v410 = vld [vmem:[%s332 + $0x18] sm:$0xff]
        %v411 = vld [vmem:[%s332 + $0x20] sm:$0xff]
        %v412 = vld [vmem:[%s332 + $0x28] sm:$0xff]
        %v413 = vld [vmem:[%s332 + $0x30] sm:$0xff]
        %v414 = vld [vmem:[%s332 + $0x38] sm:$0xff]
        %v415 = vld [vmem:[%s332 + $0x40] sm:$0xff]
        %v416 = vld [vmem:[%s332 + $0x48] sm:$0xff]
        %v417 = vld [vmem:[%s332 + $0x50] sm:$0xff]
        %v418 = vld [vmem:[%s332 + $0x58] sm:$0xff]
        %v419 = vld [vmem:[%s332 + $0x60] sm:$0xff]
        %v420 = vld [vmem:[%s332 + $0x68] sm:$0xff]
        %v421 = vld [vmem:[%s332 + $0x70] sm:$0xff]
        %v422 = vld [vmem:[%s332 + $0x78] sm:$0xff]
        %v423 = vld [vmem:[%s332 + $0x80] sm:$0xff]
        %v424 = vld [vmem:[%s332 + $0x88] sm:$0xff]
        %v425 = vld [vmem:[%s332 + $0x90] sm:$0xff]
        %v426 = vld [vmem:[%s332 + $0x98] sm:$0xff]
        %v427 = vld [vmem:[%s332 + $0xa0] sm:$0xff]
        %v428 = vld [vmem:[%s332 + $0xa8] sm:$0xff]
        %v429 = vld [vmem:[%s332 + $0xb0] sm:$0xff]
        %v430 = vld [vmem:[%s332 + $0xb8] sm:$0xff]
        %v431 = vld [vmem:[%s332 + $0xc0] sm:$0xff]
        %v432 = vld [vmem:[%s332 + $0xc8] sm:$0xff]
        %v433 = vld [vmem:[%s332 + $0xd0] sm:$0xff]
        %v434 = vld [vmem:[%s332 + $0xd8] sm:$0xff]
        %v435 = vld [vmem:[%s332 + $0xe0] sm:$0xff]
        %v436 = vld [vmem:[%s332 + $0xe8] sm:$0xff]
        %v437 = vld [vmem:[%s332 + $0xf0] sm:$0xff]
        %v438 = vld [vmem:[%s332 + $0xf8] sm:$0xff]
        %v439 = vld [vmem:[%s1] sm:$0x1]
        %v440 = vld [vmem:[%s2] sm:$0x1]
        %441 = vadd.xlane.f32.xlu0 %v407
        %v442 = vpop.xlane.xlu0 %441
        %443 = vadd.xlane.f32.xlu0 %v408
        %v444 = vpop.xlane.xlu0 %443
        %445 = vadd.xlane.f32.xlu0 %v409
        %v446 = vpop.xlane.xlu0 %445
        %447 = vadd.xlane.f32.xlu0 %v410
        %v448 = vpop.xlane.xlu0 %447
        %449 = vadd.xlane.f32.xlu0 %v411
        %v450 = vpop.xlane.xlu0 %449
        %451 = vadd.xlane.f32.xlu0 %v412
        %v452 = vpop.xlane.xlu0 %451
        %453 = vadd.xlane.f32.xlu0 %v413
        %v454 = vpop.xlane.xlu0 %453
        %455 = vadd.xlane.f32.xlu0 %v414
        %v456 = vpop.xlane.xlu0 %455
        %457 = vadd.xlane.f32.xlu0 %v415
        %v458 = vpop.xlane.xlu0 %457
        %459 = vadd.xlane.f32.xlu0 %v416
        %v460 = vpop.xlane.xlu0 %459
        %461 = vadd.xlane.f32.xlu0 %v417
        %v462 = vpop.xlane.xlu0 %461
        %463 = vadd.xlane.f32.xlu0 %v418
        %v464 = vpop.xlane.xlu0 %463
        %465 = vadd.xlane.f32.xlu0 %v419
        %v466 = vpop.xlane.xlu0 %465
        %467 = vadd.xlane.f32.xlu0 %v420
        %v468 = vpop.xlane.xlu0 %467
        %469 = vadd.xlane.f32.xlu0 %v421
        %v470 = vpop.xlane.xlu0 %469
        %471 = vadd.xlane.f32.xlu0 %v422
        %v472 = vpop.xlane.xlu0 %471
        %473 = vadd.xlane.f32.xlu0 %v423
        %v474 = vpop.xlane.xlu0 %473
        %475 = vadd.xlane.f32.xlu0 %v424
        %v476 = vpop.xlane.xlu0 %475
        %477 = vadd.xlane.f32.xlu0 %v425
        %v478 = vpop.xlane.xlu0 %477
        %479 = vadd.xlane.f32.xlu0 %v426
        %v480 = vpop.xlane.xlu0 %479
        %481 = vadd.xlane.f32.xlu0 %v427
        %v482 = vpop.xlane.xlu0 %481
        %483 = vadd.xlane.f32.xlu0 %v428
        %v484 = vpop.xlane.xlu0 %483
        %485 = vadd.xlane.f32.xlu0 %v429
        %v486 = vpop.xlane.xlu0 %485
        %487 = vadd.xlane.f32.xlu0 %v430
        %v488 = vpop.xlane.xlu0 %487
        %489 = vadd.xlane.f32.xlu0 %v431
        %v490 = vpop.xlane.xlu0 %489
        %491 = vadd.xlane.f32.xlu0 %v432
        %v492 = vpop.xlane.xlu0 %491
        %493 = vadd.xlane.f32.xlu0 %v433
        %v494 = vpop.xlane.xlu0 %493
        %495 = vadd.xlane.f32.xlu0 %v434
        %v496 = vpop.xlane.xlu0 %495
        %497 = vadd.xlane.f32.xlu0 %v435
        %v498 = vpop.xlane.xlu0 %497
        %499 = vadd.xlane.f32.xlu0 %v436
        %v500 = vpop.xlane.xlu0 %499
        %501 = vadd.xlane.f32.xlu0 %v437
        %v502 = vpop.xlane.xlu0 %501
        %503 = vadd.xlane.f32.xlu0 %v438
        %v504 = vpop.xlane.xlu0 %503
        %v505 = vrcp.pop 128.0
        %v506 = vmul.f32 %v442, %v505
        %v507 = vmul.f32 %v444, %v505
        %v508 = vmul.f32 %v446, %v505
        %v509 = vmul.f32 %v448, %v505
        %v510 = vmul.f32 %v450, %v505
        %v511 = vmul.f32 %v452, %v505
        %v512 = vmul.f32 %v454, %v505
        %v513 = vmul.f32 %v456, %v505
        %v514 = vmul.f32 %v458, %v505
        %v515 = vmul.f32 %v460, %v505
        %v516 = vmul.f32 %v462, %v505
        %v517 = vmul.f32 %v464, %v505
        %v518 = vmul.f32 %v466, %v505
        %v519 = vmul.f32 %v468, %v505
        %v520 = vmul.f32 %v470, %v505
        %v521 = vmul.f32 %v472, %v505
        %v522 = vmul.f32 %v474, %v505
        %v523 = vmul.f32 %v476, %v505
        %v524 = vmul.f32 %v478, %v505
        %v525 = vmul.f32 %v480, %v505
        %v526 = vmul.f32 %v482, %v505
        %v527 = vmul.f32 %v484, %v505
        %v528 = vmul.f32 %v486, %v505
        %v529 = vmul.f32 %v488, %v505
        %v530 = vmul.f32 %v490, %v505
        %v531 = vmul.f32 %v492, %v505
        %v532 = vmul.f32 %v494, %v505
        %v533 = vmul.f32 %v496, %v505
        %v534 = vmul.f32 %v498, %v505
        %v535 = vmul.f32 %v500, %v505
        %v536 = vmul.f32 %v502, %v505
        %v537 = vmul.f32 %v504, %v505
        %v538 = vsub.f32 %v407, %v506
        %v539 = vsub.f32 %v408, %v507
        %v540 = vsub.f32 %v409, %v508
        %v541 = vsub.f32 %v410, %v509
        %v542 = vsub.f32 %v411, %v510
        %v543 = vsub.f32 %v412, %v511
        %v544 = vsub.f32 %v413, %v512
        %v545 = vsub.f32 %v414, %v513
        %v546 = vsub.f32 %v415, %v514
        %v547 = vsub.f32 %v416, %v515
        %v548 = vsub.f32 %v417, %v516
        %v549 = vsub.f32 %v418, %v517
        %v550 = vsub.f32 %v419, %v518
        %v551 = vsub.f32 %v420, %v519
        %v552 = vsub.f32 %v421, %v520
        %v553 = vsub.f32 %v422, %v521
        %v554 = vsub.f32 %v423, %v522
        %v555 = vsub.f32 %v424, %v523
        %v556 = vsub.f32 %v425, %v524
        %v557 = vsub.f32 %v426, %v525
        %v558 = vsub.f32 %v427, %v526
        %v559 = vsub.f32 %v428, %v527
        %v560 = vsub.f32 %v429, %v528
        %v561 = vsub.f32 %v430, %v529
        %v562 = vsub.f32 %v431, %v530
        %v563 = vsub.f32 %v432, %v531
        %v564 = vsub.f32 %v433, %v532
        %v565 = vsub.f32 %v434, %v533
        %v566 = vsub.f32 %v435, %v534
        %v567 = vsub.f32 %v436, %v535
        %v568 = vsub.f32 %v437, %v536
        %v569 = vsub.f32 %v438, %v537
        %v570 = vmul.f32 %v538, %v538
        %v571 = vmul.f32 %v539, %v539
        %v572 = vmul.f32 %v540, %v540
        %v573 = vmul.f32 %v541, %v541
        %v574 = vmul.f32 %v542, %v542
        %v575 = vmul.f32 %v543, %v543
        %v576 = vmul.f32 %v544, %v544
        %v577 = vmul.f32 %v545, %v545
        %v578 = vmul.f32 %v546, %v546
        %v579 = vmul.f32 %v547, %v547
        %v580 = vmul.f32 %v548, %v548
        %v581 = vmul.f32 %v549, %v549
        %v582 = vmul.f32 %v550, %v550
        %v583 = vmul.f32 %v551, %v551
        %v584 = vmul.f32 %v552, %v552
        %v585 = vmul.f32 %v553, %v553
        %v586 = vmul.f32 %v554, %v554
        %v587 = vmul.f32 %v555, %v555
        %v588 = vmul.f32 %v556, %v556
        %v589 = vmul.f32 %v557, %v557
        %v590 = vmul.f32 %v558, %v558
        %v591 = vmul.f32 %v559, %v559
        %v592 = vmul.f32 %v560, %v560
        %v593 = vmul.f32 %v561, %v561
        %v594 = vmul.f32 %v562, %v562
        %v595 = vmul.f32 %v563, %v563
        %v596 = vmul.f32 %v564, %v564
        %v597 = vmul.f32 %v565, %v565
        %v598 = vmul.f32 %v566, %v566
        %v599 = vmul.f32 %v567, %v567
        %v600 = vmul.f32 %v568, %v568
        %v601 = vmul.f32 %v569, %v569
        %602 = vadd.xlane.f32.xlu0 %v570
        %v603 = vpop.xlane.xlu0 %602
        %604 = vadd.xlane.f32.xlu0 %v571
        %v605 = vpop.xlane.xlu0 %604
        %606 = vadd.xlane.f32.xlu0 %v572
        %v607 = vpop.xlane.xlu0 %606
        %608 = vadd.xlane.f32.xlu0 %v573
        %v609 = vpop.xlane.xlu0 %608
        %610 = vadd.xlane.f32.xlu0 %v574
        %v611 = vpop.xlane.xlu0 %610
        %612 = vadd.xlane.f32.xlu0 %v575
        %v613 = vpop.xlane.xlu0 %612
        %614 = vadd.xlane.f32.xlu0 %v576
        %v615 = vpop.xlane.xlu0 %614
        %616 = vadd.xlane.f32.xlu0 %v577
        %v617 = vpop.xlane.xlu0 %616
        %618 = vadd.xlane.f32.xlu0 %v578
        %v619 = vpop.xlane.xlu0 %618
        %620 = vadd.xlane.f32.xlu0 %v579
        %v621 = vpop.xlane.xlu0 %620
        %622 = vadd.xlane.f32.xlu0 %v580
        %v623 = vpop.xlane.xlu0 %622
        %624 = vadd.xlane.f32.xlu0 %v581
        %v625 = vpop.xlane.xlu0 %624
        %626 = vadd.xlane.f32.xlu0 %v582
        %v627 = vpop.xlane.xlu0 %626
        %628 = vadd.xlane.f32.xlu0 %v583
        %v629 = vpop.xlane.xlu0 %628
        %630 = vadd.xlane.f32.xlu0 %v584
        %v631 = vpop.xlane.xlu0 %630
        %632 = vadd.xlane.f32.xlu0 %v585
        %v633 = vpop.xlane.xlu0 %632
        %634 = vadd.xlane.f32.xlu0 %v586
        %v635 = vpop.xlane.xlu0 %634
        %636 = vadd.xlane.f32.xlu0 %v587
        %v637 = vpop.xlane.xlu0 %636
        %638 = vadd.xlane.f32.xlu0 %v588
        %v639 = vpop.xlane.xlu0 %638
        %640 = vadd.xlane.f32.xlu0 %v589
        %v641 = vpop.xlane.xlu0 %640
        %642 = vadd.xlane.f32.xlu0 %v590
        %v643 = vpop.xlane.xlu0 %642
        %644 = vadd.xlane.f32.xlu0 %v591
        %v645 = vpop.xlane.xlu0 %644
        %646 = vadd.xlane.f32.xlu0 %v592
        %v647 = vpop.xlane.xlu0 %646
        %648 = vadd.xlane.f32.xlu0 %v593
        %v649 = vpop.xlane.xlu0 %648
        %650 = vadd.xlane.f32.xlu0 %v594
        %v651 = vpop.xlane.xlu0 %650
        %652 = vadd.xlane.f32.xlu0 %v595
        %v653 = vpop.xlane.xlu0 %652
        %654 = vadd.xlane.f32.xlu0 %v596
        %v655 = vpop.xlane.xlu0 %654
        %656 = vadd.xlane.f32.xlu0 %v597
        %v657 = vpop.xlane.xlu0 %656
        %658 = vadd.xlane.f32.xlu0 %v598
        %v659 = vpop.xlane.xlu0 %658
        %660 = vadd.xlane.f32.xlu0 %v599
        %v661 = vpop.xlane.xlu0 %660
        %662 = vadd.xlane.f32.xlu0 %v600
        %v663 = vpop.xlane.xlu0 %662
        %664 = vadd.xlane.f32.xlu0 %v601
        %v665 = vpop.xlane.xlu0 %664
        %v666 = vmul.f32 %v603, %v505
        %v667 = vmul.f32 %v605, %v505
        %v668 = vmul.f32 %v607, %v505
        %v669 = vmul.f32 %v609, %v505
        %v670 = vmul.f32 %v611, %v505
        %v671 = vmul.f32 %v613, %v505
        %v672 = vmul.f32 %v615, %v505
        %v673 = vmul.f32 %v617, %v505
        %v674 = vmul.f32 %v619, %v505
        %v675 = vmul.f32 %v621, %v505
        %v676 = vmul.f32 %v623, %v505
        %v677 = vmul.f32 %v625, %v505
        %v678 = vmul.f32 %v627, %v505
        %v679 = vmul.f32 %v629, %v505
        %v680 = vmul.f32 %v631, %v505
        %v681 = vmul.f32 %v633, %v505
        %v682 = vmul.f32 %v635, %v505
        %v683 = vmul.f32 %v637, %v505
        %v684 = vmul.f32 %v639, %v505
        %v685 = vmul.f32 %v641, %v505
        %v686 = vmul.f32 %v643, %v505
        %v687 = vmul.f32 %v645, %v505
        %v688 = vmul.f32 %v647, %v505
        %v689 = vmul.f32 %v649, %v505
        %v690 = vmul.f32 %v651, %v505
        %v691 = vmul.f32 %v653, %v505
        %v692 = vmul.f32 %v655, %v505
        %v693 = vmul.f32 %v657, %v505
        %v694 = vmul.f32 %v659, %v505
        %v695 = vmul.f32 %v661, %v505
        %v696 = vmul.f32 %v663, %v505
        %v697 = vmul.f32 %v665, %v505
        %v698 = vadd.f32 %v666, 1e-05
        %v699 = vadd.f32 %v667, 1e-05
        %v700 = vadd.f32 %v668, 1e-05
        %v701 = vadd.f32 %v669, 1e-05
        %v702 = vadd.f32 %v670, 1e-05
        %v703 = vadd.f32 %v671, 1e-05
        %v704 = vadd.f32 %v672, 1e-05
        %v705 = vadd.f32 %v673, 1e-05
        %v706 = vadd.f32 %v674, 1e-05
        %v707 = vadd.f32 %v675, 1e-05
        %v708 = vadd.f32 %v676, 1e-05
        %v709 = vadd.f32 %v677, 1e-05
        %v710 = vadd.f32 %v678, 1e-05
        %v711 = vadd.f32 %v679, 1e-05
        %v712 = vadd.f32 %v680, 1e-05
        %v713 = vadd.f32 %v681, 1e-05
        %v714 = vadd.f32 %v682, 1e-05
        %v715 = vadd.f32 %v683, 1e-05
        %v716 = vadd.f32 %v684, 1e-05
        %v717 = vadd.f32 %v685, 1e-05
        %v718 = vadd.f32 %v686, 1e-05
        %v719 = vadd.f32 %v687, 1e-05
        %v720 = vadd.f32 %v688, 1e-05
        %v721 = vadd.f32 %v689, 1e-05
        %v722 = vadd.f32 %v690, 1e-05
        %v723 = vadd.f32 %v691, 1e-05
        %v724 = vadd.f32 %v692, 1e-05
        %v725 = vadd.f32 %v693, 1e-05
        %v726 = vadd.f32 %v694, 1e-05
        %v727 = vadd.f32 %v695, 1e-05
        %v728 = vadd.f32 %v696, 1e-05
        %v729 = vadd.f32 %v697, 1e-05
        %v730 = vrsqrt.pop %v698
        %v731 = vrsqrt.pop %v699
        %v732 = vrsqrt.pop %v700
        %v733 = vrsqrt.pop %v701
        %v734 = vrsqrt.pop %v702
        %v735 = vrsqrt.pop %v703
        %v736 = vrsqrt.pop %v704
        %v737 = vrsqrt.pop %v705
        %v738 = vrsqrt.pop %v706
        %v739 = vrsqrt.pop %v707
        %v740 = vrsqrt.pop %v708
        %v741 = vrsqrt.pop %v709
        %v742 = vrsqrt.pop %v710
        %v743 = vrsqrt.pop %v711
        %v744 = vrsqrt.pop %v712
        %v745 = vrsqrt.pop %v713
        %v746 = vrsqrt.pop %v714
        %v747 = vrsqrt.pop %v715
        %v748 = vrsqrt.pop %v716
        %v749 = vrsqrt.pop %v717
        %v750 = vrsqrt.pop %v718
        %v751 = vrsqrt.pop %v719
        %v752 = vrsqrt.pop %v720
        %v753 = vrsqrt.pop %v721
        %v754 = vrsqrt.pop %v722
        %v755 = vrsqrt.pop %v723
        %v756 = vrsqrt.pop %v724
        %v757 = vrsqrt.pop %v725
        %v758 = vrsqrt.pop %v726
        %v759 = vrsqrt.pop %v727
        %v760 = vrsqrt.pop %v728
        %v761 = vrsqrt.pop %v729
        %v762 = vmul.f32 %v538, %v730
        %v763 = vmul.f32 %v539, %v731
        %v764 = vmul.f32 %v540, %v732
        %v765 = vmul.f32 %v541, %v733
        %v766 = vmul.f32 %v542, %v734
        %v767 = vmul.f32 %v543, %v735
        %v768 = vmul.f32 %v544, %v736
        %v769 = vmul.f32 %v545, %v737
        %v770 = vmul.f32 %v546, %v738
        %v771 = vmul.f32 %v547, %v739
        %v772 = vmul.f32 %v548, %v740
        %v773 = vmul.f32 %v549, %v741
        %v774 = vmul.f32 %v550, %v742
        %v775 = vmul.f32 %v551, %v743
        %v776 = vmul.f32 %v552, %v744
        %v777 = vmul.f32 %v553, %v745
        %v778 = vmul.f32 %v554, %v746
        %v779 = vmul.f32 %v555, %v747
        %v780 = vmul.f32 %v556, %v748
        %v781 = vmul.f32 %v557, %v749
        %v782 = vmul.f32 %v558, %v750
        %v783 = vmul.f32 %v559, %v751
        %v784 = vmul.f32 %v560, %v752
        %v785 = vmul.f32 %v561, %v753
        %v786 = vmul.f32 %v562, %v754
        %v787 = vmul.f32 %v563, %v755
        %v788 = vmul.f32 %v564, %v756
        %v789 = vmul.f32 %v565, %v757
        %v790 = vmul.f32 %v566, %v758
        %v791 = vmul.f32 %v567, %v759
        %v792 = vmul.f32 %v568, %v760
        %v793 = vmul.f32 %v569, %v761
        %v795 = vlaneseq
        %v796 = vshrl.u32 %v795, 7
        %v797 = vsub.s32 0, %v796
        %v798 = vrot.slane %v439, %v797
        %v800 = vmul.f32 %v762, %v798
        %v801 = vmul.f32 %v763, %v798
        %v802 = vmul.f32 %v764, %v798
        %v803 = vmul.f32 %v765, %v798
        %v804 = vmul.f32 %v766, %v798
        %v805 = vmul.f32 %v767, %v798
        %v806 = vmul.f32 %v768, %v798
        %v807 = vmul.f32 %v769, %v798
        %v808 = vmul.f32 %v770, %v798
        %v809 = vmul.f32 %v771, %v798
        %v810 = vmul.f32 %v772, %v798
        %v811 = vmul.f32 %v773, %v798
        %v812 = vmul.f32 %v774, %v798
        %v813 = vmul.f32 %v775, %v798
        %v814 = vmul.f32 %v776, %v798
        %v815 = vmul.f32 %v777, %v798
        %v816 = vmul.f32 %v778, %v798
        %v817 = vmul.f32 %v779, %v798
        %v818 = vmul.f32 %v780, %v798
        %v819 = vmul.f32 %v781, %v798
        %v820 = vmul.f32 %v782, %v798
        %v821 = vmul.f32 %v783, %v798
        %v822 = vmul.f32 %v784, %v798
        %v823 = vmul.f32 %v785, %v798
        %v824 = vmul.f32 %v786, %v798
        %v825 = vmul.f32 %v787, %v798
        %v826 = vmul.f32 %v788, %v798
        %v827 = vmul.f32 %v789, %v798
        %v828 = vmul.f32 %v790, %v798
        %v829 = vmul.f32 %v791, %v798
        %v830 = vmul.f32 %v792, %v798
        %v831 = vmul.f32 %v793, %v798
        %v833 = vlaneseq
        %v834 = vshrl.u32 %v833, 7
        %v835 = vsub.s32 0, %v834
        %v836 = vrot.slane %v440, %v835
        %v838 = vadd.f32 %v800, %v836
        %v839 = vadd.f32 %v801, %v836
        %v840 = vadd.f32 %v802, %v836
        %v841 = vadd.f32 %v803, %v836
        %v842 = vadd.f32 %v804, %v836
        %v843 = vadd.f32 %v805, %v836
        %v844 = vadd.f32 %v806, %v836
        %v845 = vadd.f32 %v807, %v836
        %v846 = vadd.f32 %v808, %v836
        %v847 = vadd.f32 %v809, %v836
        %v848 = vadd.f32 %v810, %v836
        %v849 = vadd.f32 %v811, %v836
        %v850 = vadd.f32 %v812, %v836
        %v851 = vadd.f32 %v813, %v836
        %v852 = vadd.f32 %v814, %v836
        %v853 = vadd.f32 %v815, %v836
        %v854 = vadd.f32 %v816, %v836
        %v855 = vadd.f32 %v817, %v836
        %v856 = vadd.f32 %v818, %v836
        %v857 = vadd.f32 %v819, %v836
        %v858 = vadd.f32 %v820, %v836
        %v859 = vadd.f32 %v821, %v836
        %v860 = vadd.f32 %v822, %v836
        %v861 = vadd.f32 %v823, %v836
        %v862 = vadd.f32 %v824, %v836
        %v863 = vadd.f32 %v825, %v836
        %v864 = vadd.f32 %v826, %v836
        %v865 = vadd.f32 %v827, %v836
        %v866 = vadd.f32 %v828, %v836
        %v867 = vadd.f32 %v829, %v836
        %v868 = vadd.f32 %v830, %v836
        %v869 = vadd.f32 %v831, %v836
        %v870 = vld [vmem:[#allocation4] sm:$0xff]
        %v871 = vld [vmem:[#allocation4 + $0x8] sm:$0xff]
        %v872 = vld [vmem:[#allocation4 + $0x10] sm:$0xff]
        %v873 = vld [vmem:[#allocation4 + $0x18] sm:$0xff]
        %v874 = vld [vmem:[#allocation4 + $0x20] sm:$0xff]
        %v875 = vld [vmem:[#allocation4 + $0x28] sm:$0xff]
        %v876 = vld [vmem:[#allocation4 + $0x30] sm:$0xff]
        %v877 = vld [vmem:[#allocation4 + $0x38] sm:$0xff]
        %v878 = vld [vmem:[#allocation4 + $0x40] sm:$0xff]
        %v879 = vld [vmem:[#allocation4 + $0x48] sm:$0xff]
        %v880 = vld [vmem:[#allocation4 + $0x50] sm:$0xff]
        %v881 = vld [vmem:[#allocation4 + $0x58] sm:$0xff]
        %v882 = vld [vmem:[#allocation4 + $0x60] sm:$0xff]
        %v883 = vld [vmem:[#allocation4 + $0x68] sm:$0xff]
        %v884 = vld [vmem:[#allocation4 + $0x70] sm:$0xff]
        %v885 = vld [vmem:[#allocation4 + $0x78] sm:$0xff]
        %v886 = vld [vmem:[%s4] sm:$0x1]
        %v888 = vlaneseq
        %v889 = vshrl.u32 %v888, 7
        %v890 = vsub.s32 0, %v889
        %v891 = vrot.slane %v886, %v890
        %893 = vmatprep.subr.mxu0 0.0
        %v894 = vand.u32 %v870, 4294901760
        %895 = vmatpush1.msra.mxu0 %v894
        %896 = vmatprep.subr.mxu0 0.0
        %v897 = vand.u32 %v871, 4294901760
        %898 = vmatpush1.msra.mxu0 %v897
        %899 = vmatprep.subr.mxu0 0.0
        %v900 = vand.u32 %v872, 4294901760
        %901 = vmatpush1.msra.mxu0 %v900
        %902 = vmatprep.subr.mxu0 0.0
        %v903 = vand.u32 %v873, 4294901760
        %904 = vmatpush1.msra.mxu0 %v903
        %905 = vmatprep.subr.mxu0 0.0
        %v906 = vand.u32 %v874, 4294901760
        %907 = vmatpush1.msra.mxu0 %v906
        %908 = vmatprep.subr.mxu0 0.0
        %v909 = vand.u32 %v875, 4294901760
        %910 = vmatpush1.msra.mxu0 %v909
        %911 = vmatprep.subr.mxu0 0.0
        %v912 = vand.u32 %v876, 4294901760
        %913 = vmatpush1.msra.mxu0 %v912
        %914 = vmatprep.subr.mxu0 0.0
        %v915 = vand.u32 %v877, 4294901760
        %916 = vmatpush1.msra.mxu0 %v915
        %917 = vmatprep.subr.mxu0 0.0
        %v918 = vand.u32 %v878, 4294901760
        %919 = vmatpush1.msra.mxu0 %v918
        %920 = vmatprep.subr.mxu0 0.0
        %v921 = vand.u32 %v879, 4294901760
        %922 = vmatpush1.msra.mxu0 %v921
        %923 = vmatprep.subr.mxu0 0.0
        %v924 = vand.u32 %v880, 4294901760
        %925 = vmatpush1.msra.mxu0 %v924
        %926 = vmatprep.subr.mxu0 0.0
        %v927 = vand.u32 %v881, 4294901760
        %928 = vmatpush1.msra.mxu0 %v927
        %929 = vmatprep.subr.mxu0 0.0
        %v930 = vand.u32 %v882, 4294901760
        %931 = vmatpush1.msra.mxu0 %v930
        %932 = vmatprep.subr.mxu0 0.0
        %v933 = vand.u32 %v883, 4294901760
        %934 = vmatpush1.msra.mxu0 %v933
        %935 = vmatprep.subr.mxu0 0.0
        %v936 = vand.u32 %v884, 4294901760
        %937 = vmatpush1.msra.mxu0 %v936
        %938 = vmatprep.subr.mxu0 0.0
        %v939 = vand.u32 %v885, 4294901760
        %940 = vmatpush1.msra.mxu0 %v939
        %941 = vmatprep.subr.mxu0 0.0
        %942 = vmatpush1.msra.mxu0 0.0
        %943 = vmatprep.subr.mxu0 0.0
        %944 = vmatpush1.msra.mxu0 0.0
        %945 = vmatprep.subr.mxu0 0.0
        %946 = vmatpush1.msra.mxu0 0.0
        %947 = vmatprep.subr.mxu0 0.0
        %948 = vmatpush1.msra.mxu0 0.0
        %949 = vmatprep.subr.mxu0 0.0
        %950 = vmatpush1.msra.mxu0 0.0
        %951 = vmatprep.subr.mxu0 0.0
        %952 = vmatpush1.msra.mxu0 0.0
        %953 = vmatprep.subr.mxu0 0.0
        %954 = vmatpush1.msra.mxu0 0.0
        %955 = vmatprep.subr.mxu0 0.0
        %956 = vmatpush1.msra.mxu0 0.0
        %957 = vmatprep.subr.mxu0 0.0
        %958 = vmatpush1.msra.mxu0 0.0
        %959 = vmatprep.subr.mxu0 0.0
        %960 = vmatpush1.msra.mxu0 0.0
        %961 = vmatprep.subr.mxu0 0.0
        %962 = vmatpush1.msra.mxu0 0.0
        %963 = vmatprep.subr.mxu0 0.0
        %964 = vmatpush1.msra.mxu0 0.0
        %965 = vmatprep.subr.mxu0 0.0
        %966 = vmatpush1.msra.mxu0 0.0
        %967 = vmatprep.subr.mxu0 0.0
        %968 = vmatpush1.msra.mxu0 0.0
        %969 = vmatprep.subr.mxu0 0.0
        %970 = vmatpush1.msra.mxu0 0.0
        %971 = vmatprep.subr.mxu0 0.0
        %972 = vmatpush1.msra.mxu0 0.0
        %973 = vmatprep.mubr.f32.mxu0 0.0
        %v974 = vand.u32 %v838, 4294901760
        %v975 = vsub.f32 %v838, %v974
        %v976 = vand.u32 %v975, 4294901760
        %v977 = vsub.f32 %v975, %v976
        %v978 = vand.u32 %v977, 4294901760
        %979 = vmatmul.mubr.f32.gmra.mrb[0].mxu0 %v978
        %v980 = vpop.f32.mrb[0].mxu0
        %v981 = vadd.f32 %v891, %v980
        %v982 = vpop.f32.mrb[0].mxu0
        %983 = vmatprep.mubr.f32.mxu0 0.0
        %v984 = vand.u32 %v839, 4294901760
        %v985 = vsub.f32 %v839, %v984
        %v986 = vand.u32 %v985, 4294901760
        %v987 = vsub.f32 %v985, %v986
        %v988 = vand.u32 %v987, 4294901760
        %989 = vmatmul.mubr.f32.gmra.mrb[0].mxu0 %v988
        %v990 = vpop.f32.mrb[0].mxu0
        %v991 = vadd.f32 %v891, %v990
        %v992 = vpop.f32.mrb[0].mxu0
        %993 = vmatprep.mubr.f32.mxu0 0.0
        %v994 = vand.u32 %v840, 4294901760
        %v995 = vsub.f32 %v840, %v994
        %v996 = vand.u32 %v995, 4294901760
        %v997 = vsub.f32 %v995, %v996
        %v998 = vand.u32 %v997, 4294901760
        %999 = vmatmul.mubr.f32.gmra.mrb[0].mxu0 %v998
        %v1000 = vpop.f32.mrb[0].mxu0
        %v1001 = vadd.f32 %v891, %v1000
        %v1002 = vpop.f32.mrb[0].mxu0
        %1003 = vmatprep.mubr.f32.mxu0 0.0
        %v1004 = vand.u32 %v841, 4294901760
        %v1005 = vsub.f32 %v841, %v1004
        %v1006 = vand.u32 %v1005, 4294901760
        %v1007 = vsub.f32 %v1005, %v1006
        %v1008 = vand.u32 %v1007, 4294901760
        %1009 = vmatmul.mubr.f32.gmra.mrb[0].mxu0 %v1008
        %v1010 = vpop.f32.mrb[0].mxu0
        %v1011 = vadd.f32 %v891, %v1010
        %v1012 = vpop.f32.mrb[0].mxu0
        %1013 = vmatprep.mubr.f32.mxu0 0.0
        %v1014 = vand.u32 %v842, 4294901760
        %v1015 = vsub.f32 %v842, %v1014
        %v1016 = vand.u32 %v1015, 4294901760
        %v1017 = vsub.f32 %v1015, %v1016
        %v1018 = vand.u32 %v1017, 4294901760
        %1019 = vmatmul.mubr.f32.gmra.mrb[0].mxu0 %v1018
        %v1020 = vpop.f32.mrb[0].mxu0
        %v1021 = vadd.f32 %v891, %v1020
        %v1022 = vpop.f32.mrb[0].mxu0
        %1023 = vmatprep.mubr.f32.mxu0 0.0
        %v1024 = vand.u32 %v843, 4294901760
        %v1025 = vsub.f32 %v843, %v1024
        %v1026 = vand.u32 %v1025, 4294901760
        %v1027 = vsub.f32 %v1025, %v1026
        %v1028 = vand.u32 %v1027, 4294901760
        %1029 = vmatmul.mubr.f32.gmra.mrb[0].mxu0 %v1028
        %v1030 = vpop.f32.mrb[0].mxu0
        %v1031 = vadd.f32 %v891, %v1030
        %v1032 = vpop.f32.mrb[0].mxu0
        %1033 = vmatprep.mubr.f32.mxu0 0.0
        %v1034 = vand.u32 %v844, 4294901760
        %v1035 = vsub.f32 %v844, %v1034
        %v1036 = vand.u32 %v1035, 4294901760
        %v1037 = vsub.f32 %v1035, %v1036
        %v1038 = vand.u32 %v1037, 4294901760
        %1039 = vmatmul.mubr.f32.gmra.mrb[0].mxu0 %v1038
        %v1040 = vpop.f32.mrb[0].mxu0
        %v1041 = vadd.f32 %v891, %v1040
        %v1042 = vpop.f32.mrb[0].mxu0
        %1043 = vmatprep.mubr.f32.mxu0 0.0
        %v1044 = vand.u32 %v845, 4294901760
        %v1045 = vsub.f32 %v845, %v1044
        %v1046 = vand.u32 %v1045, 4294901760
        %v1047 = vsub.f32 %v1045, %v1046
        %v1048 = vand.u32 %v1047, 4294901760
        %1049 = vmatmul.mubr.f32.gmra.mrb[0].mxu0 %v1048
        %v1050 = vpop.f32.mrb[0].mxu0
        %v1051 = vadd.f32 %v891, %v1050
        %v1052 = vpop.f32.mrb[0].mxu0
        %1053 = vmatprep.mubr.f32.mxu0 0.0
        %v1054 = vand.u32 %v846, 4294901760
        %v1055 = vsub.f32 %v846, %v1054
        %v1056 = vand.u32 %v1055, 4294901760
        %v1057 = vsub.f32 %v1055, %v1056
        %v1058 = vand.u32 %v1057, 4294901760
        %1059 = vmatmul.mubr.f32.gmra.mrb[0].mxu0 %v1058
        %v1060 = vpop.f32.mrb[0].mxu0
        %v1061 = vadd.f32 %v891, %v1060
        %v1062 = vpop.f32.mrb[0].mxu0
        %1063 = vmatprep.mubr.f32.mxu0 0.0
        %v1064 = vand.u32 %v847, 4294901760
        %v1065 = vsub.f32 %v847, %v1064
        %v1066 = vand.u32 %v1065, 4294901760
        %v1067 = vsub.f32 %v1065, %v1066
        %v1068 = vand.u32 %v1067, 4294901760
        %1069 = vmatmul.mubr.f32.gmra.mrb[0].mxu0 %v1068
        %v1070 = vpop.f32.mrb[0].mxu0
        %v1071 = vadd.f32 %v891, %v1070
        %v1072 = vpop.f32.mrb[0].mxu0
        %1073 = vmatprep.mubr.f32.mxu0 0.0
        %v1074 = vand.u32 %v848, 4294901760
        %v1075 = vsub.f32 %v848, %v1074
        %v1076 = vand.u32 %v1075, 4294901760
        %v1077 = vsub.f32 %v1075, %v1076
        %v1078 = vand.u32 %v1077, 4294901760
        %1079 = vmatmul.mubr.f32.gmra.mrb[0].mxu0 %v1078
        %v1080 = vpop.f32.mrb[0].mxu0
        %v1081 = vadd.f32 %v891, %v1080
        %v1082 = vpop.f32.mrb[0].mxu0
        %1083 = vmatprep.mubr.f32.mxu0 0.0
        %v1084 = vand.u32 %v849, 4294901760
        %v1085 = vsub.f32 %v849, %v1084
        %v1086 = vand.u32 %v1085, 4294901760
        %v1087 = vsub.f32 %v1085, %v1086
        %v1088 = vand.u32 %v1087, 4294901760
        %1089 = vmatmul.mubr.f32.gmra.mrb[0].mxu0 %v1088
        %v1090 = vpop.f32.mrb[0].mxu0
        %v1091 = vadd.f32 %v891, %v1090
        %v1092 = vpop.f32.mrb[0].mxu0
        %1093 = vmatprep.mubr.f32.mxu0 0.0
        %v1094 = vand.u32 %v850, 4294901760
        %v1095 = vsub.f32 %v850, %v1094
        %v1096 = vand.u32 %v1095, 4294901760
        %v1097 = vsub.f32 %v1095, %v1096
        %v1098 = vand.u32 %v1097, 4294901760
        %1099 = vmatmul.mubr.f32.gmra.mrb[0].mxu0 %v1098
        %v1100 = vpop.f32.mrb[0].mxu0
        %v1101 = vadd.f32 %v891, %v1100
        %v1102 = vpop.f32.mrb[0].mxu0
        %1103 = vmatprep.mubr.f32.mxu0 0.0
        %v1104 = vand.u32 %v851, 4294901760
        %v1105 = vsub.f32 %v851, %v1104
        %v1106 = vand.u32 %v1105, 4294901760
        %v1107 = vsub.f32 %v1105, %v1106
        %v1108 = vand.u32 %v1107, 4294901760
        %1109 = vmatmul.mubr.f32.gmra.mrb[0].mxu0 %v1108
        %v1110 = vpop.f32.mrb[0].mxu0
        %v1111 = vadd.f32 %v891, %v1110
        %v1112 = vpop.f32.mrb[0].mxu0
        %1113 = vmatprep.mubr.f32.mxu0 0.0
        %v1114 = vand.u32 %v852, 4294901760
        %v1115 = vsub.f32 %v852, %v1114
        %v1116 = vand.u32 %v1115, 4294901760
        %v1117 = vsub.f32 %v1115, %v1116
        %v1118 = vand.u32 %v1117, 4294901760
        %1119 = vmatmul.mubr.f32.gmra.mrb[0].mxu0 %v1118
        %v1120 = vpop.f32.mrb[0].mxu0
        %v1121 = vadd.f32 %v891, %v1120
        %v1122 = vpop.f32.mrb[0].mxu0
        %1123 = vmatprep.mubr.f32.mxu0 0.0
        %v1124 = vand.u32 %v853, 4294901760
        %v1125 = vsub.f32 %v853, %v1124
        %v1126 = vand.u32 %v1125, 4294901760
        %v1127 = vsub.f32 %v1125, %v1126
        %v1128 = vand.u32 %v1127, 4294901760
        %1129 = vmatmul.mubr.f32.gmra.mrb[0].mxu0 %v1128
        %v1130 = vpop.f32.mrb[0].mxu0
        %v1131 = vadd.f32 %v891, %v1130
        %v1132 = vpop.f32.mrb[0].mxu0
        %1133 = vmatprep.mubr.f32.mxu0 0.0
        %v1134 = vand.u32 %v854, 4294901760
        %v1135 = vsub.f32 %v854, %v1134
        %v1136 = vand.u32 %v1135, 4294901760
        %v1137 = vsub.f32 %v1135, %v1136
        %v1138 = vand.u32 %v1137, 4294901760
        %1139 = vmatmul.mubr.f32.gmra.mrb[0].mxu0 %v1138
        %v1140 = vpop.f32.mrb[0].mxu0
        %v1141 = vadd.f32 %v891, %v1140
        %v1142 = vpop.f32.mrb[0].mxu0
        %1143 = vmatprep.mubr.f32.mxu0 0.0
        %v1144 = vand.u32 %v855, 4294901760
        %v1145 = vsub.f32 %v855, %v1144
        %v1146 = vand.u32 %v1145, 4294901760
        %v1147 = vsub.f32 %v1145, %v1146
        %v1148 = vand.u32 %v1147, 4294901760
        %1149 = vmatmul.mubr.f32.gmra.mrb[0].mxu0 %v1148
        %v1150 = vpop.f32.mrb[0].mxu0
        %v1151 = vadd.f32 %v891, %v1150
        %v1152 = vpop.f32.mrb[0].mxu0
        %1153 = vmatprep.mubr.f32.mxu0 0.0
        %v1154 = vand.u32 %v856, 4294901760
        %v1155 = vsub.f32 %v856, %v1154
        %v1156 = vand.u32 %v1155, 4294901760
        %v1157 = vsub.f32 %v1155, %v1156
        %v1158 = vand.u32 %v1157, 4294901760
        %1159 = vmatmul.mubr.f32.gmra.mrb[0].mxu0 %v1158
        %v1160 = vpop.f32.mrb[0].mxu0
        %v1161 = vadd.f32 %v891, %v1160
        %v1162 = vpop.f32.mrb[0].mxu0
        %1163 = vmatprep.mubr.f32.mxu0 0.0
        %v1164 = vand.u32 %v857, 4294901760
        %v1165 = vsub.f32 %v857, %v1164
        %v1166 = vand.u32 %v1165, 4294901760
        %v1167 = vsub.f32 %v1165, %v1166
        %v1168 = vand.u32 %v1167, 4294901760
        %1169 = vmatmul.mubr.f32.gmra.mrb[0].mxu0 %v1168
        %v1170 = vpop.f32.mrb[0].mxu0
        %v1171 = vadd.f32 %v891, %v1170
        %v1172 = vpop.f32.mrb[0].mxu0
        %1173 = vmatprep.mubr.f32.mxu0 0.0
        %v1174 = vand.u32 %v858, 4294901760
        %v1175 = vsub.f32 %v858, %v1174
        %v1176 = vand.u32 %v1175, 4294901760
        %v1177 = vsub.f32 %v1175, %v1176
        %v1178 = vand.u32 %v1177, 4294901760
        %1179 = vmatmul.mubr.f32.gmra.mrb[0].mxu0 %v1178
        %v1180 = vpop.f32.mrb[0].mxu0
        %v1181 = vadd.f32 %v891, %v1180
        %v1182 = vpop.f32.mrb[0].mxu0
        %1183 = vmatprep.mubr.f32.mxu0 0.0
        %v1184 = vand.u32 %v859, 4294901760
        %v1185 = vsub.f32 %v859, %v1184
        %v1186 = vand.u32 %v1185, 4294901760
        %v1187 = vsub.f32 %v1185, %v1186
        %v1188 = vand.u32 %v1187, 4294901760
        %1189 = vmatmul.mubr.f32.gmra.mrb[0].mxu0 %v1188
        %v1190 = vpop.f32.mrb[0].mxu0
        %v1191 = vadd.f32 %v891, %v1190
        %v1192 = vpop.f32.mrb[0].mxu0
        %1193 = vmatprep.mubr.f32.mxu0 0.0
        %v1194 = vand.u32 %v860, 4294901760
        %v1195 = vsub.f32 %v860, %v1194
        %v1196 = vand.u32 %v1195, 4294901760
        %v1197 = vsub.f32 %v1195, %v1196
        %v1198 = vand.u32 %v1197, 4294901760
        %1199 = vmatmul.mubr.f32.gmra.mrb[0].mxu0 %v1198
        %v1200 = vpop.f32.mrb[0].mxu0
        %v1201 = vadd.f32 %v891, %v1200
        %v1202 = vpop.f32.mrb[0].mxu0
        %1203 = vmatprep.mubr.f32.mxu0 0.0
        %v1204 = vand.u32 %v861, 4294901760
        %v1205 = vsub.f32 %v861, %v1204
        %v1206 = vand.u32 %v1205, 4294901760
        %v1207 = vsub.f32 %v1205, %v1206
        %v1208 = vand.u32 %v1207, 4294901760
        %1209 = vmatmul.mubr.f32.gmra.mrb[0].mxu0 %v1208
        %v1210 = vpop.f32.mrb[0].mxu0
        %v1211 = vadd.f32 %v891, %v1210
        %v1212 = vpop.f32.mrb[0].mxu0
        %1213 = vmatprep.mubr.f32.mxu0 0.0
        %v1214 = vand.u32 %v862, 4294901760
        %v1215 = vsub.f32 %v862, %v1214
        %v1216 = vand.u32 %v1215, 4294901760
        %v1217 = vsub.f32 %v1215, %v1216
        %v1218 = vand.u32 %v1217, 4294901760
        %1219 = vmatmul.mubr.f32.gmra.mrb[0].mxu0 %v1218
        %v1220 = vpop.f32.mrb[0].mxu0
        %v1221 = vadd.f32 %v891, %v1220
        %v1222 = vpop.f32.mrb[0].mxu0
        %1223 = vmatprep.mubr.f32.mxu0 0.0
        %v1224 = vand.u32 %v863, 4294901760
        %v1225 = vsub.f32 %v863, %v1224
        %v1226 = vand.u32 %v1225, 4294901760
        %v1227 = vsub.f32 %v1225, %v1226
        %v1228 = vand.u32 %v1227, 4294901760
        %1229 = vmatmul.mubr.f32.gmra.mrb[0].mxu0 %v1228
        %v1230 = vpop.f32.mrb[0].mxu0
        %v1231 = vadd.f32 %v891, %v1230
        %v1232 = vpop.f32.mrb[0].mxu0
        %1233 = vmatprep.mubr.f32.mxu0 0.0
        %v1234 = vand.u32 %v864, 4294901760
        %v1235 = vsub.f32 %v864, %v1234
        %v1236 = vand.u32 %v1235, 4294901760
        %v1237 = vsub.f32 %v1235, %v1236
        %v1238 = vand.u32 %v1237, 4294901760
        %1239 = vmatmul.mubr.f32.gmra.mrb[0].mxu0 %v1238
        %v1240 = vpop.f32.mrb[0].mxu0
        %v1241 = vadd.f32 %v891, %v1240
        %v1242 = vpop.f32.mrb[0].mxu0
        %1243 = vmatprep.mubr.f32.mxu0 0.0
        %v1244 = vand.u32 %v865, 4294901760
        %v1245 = vsub.f32 %v865, %v1244
        %v1246 = vand.u32 %v1245, 4294901760
        %v1247 = vsub.f32 %v1245, %v1246
        %v1248 = vand.u32 %v1247, 4294901760
        %1249 = vmatmul.mubr.f32.gmra.mrb[0].mxu0 %v1248
        %v1250 = vpop.f32.mrb[0].mxu0
        %v1251 = vadd.f32 %v891, %v1250
        %v1252 = vpop.f32.mrb[0].mxu0
        %1253 = vmatprep.mubr.f32.mxu0 0.0
        %v1254 = vand.u32 %v866, 4294901760
        %v1255 = vsub.f32 %v866, %v1254
        %v1256 = vand.u32 %v1255, 4294901760
        %v1257 = vsub.f32 %v1255, %v1256
        %v1258 = vand.u32 %v1257, 4294901760
        %1259 = vmatmul.mubr.f32.gmra.mrb[0].mxu0 %v1258
        %v1260 = vpop.f32.mrb[0].mxu0
        %v1261 = vadd.f32 %v891, %v1260
        %v1262 = vpop.f32.mrb[0].mxu0
        %1263 = vmatprep.mubr.f32.mxu0 0.0
        %v1264 = vand.u32 %v867, 4294901760
        %v1265 = vsub.f32 %v867, %v1264
        %v1266 = vand.u32 %v1265, 4294901760
        %v1267 = vsub.f32 %v1265, %v1266
        %v1268 = vand.u32 %v1267, 4294901760
        %1269 = vmatmul.mubr.f32.gmra.mrb[0].mxu0 %v1268
        %v1270 = vpop.f32.mrb[0].mxu0
        %v1271 = vadd.f32 %v891, %v1270
        %v1272 = vpop.f32.mrb[0].mxu0
        %1273 = vmatprep.mubr.f32.mxu0 0.0
        %v1274 = vand.u32 %v868, 4294901760
        %v1275 = vsub.f32 %v868, %v1274
        %v1276 = vand.u32 %v1275, 4294901760
        %v1277 = vsub.f32 %v1275, %v1276
        %v1278 = vand.u32 %v1277, 4294901760
        %1279 = vmatmul.mubr.f32.gmra.mrb[0].mxu0 %v1278
        %v1280 = vpop.f32.mrb[0].mxu0
        %v1281 = vadd.f32 %v891, %v1280
        %v1282 = vpop.f32.mrb[0].mxu0
        %1283 = vmatprep.mubr.f32.mxu0 0.0
        %v1284 = vand.u32 %v869, 4294901760
        %v1285 = vsub.f32 %v869, %v1284
        %v1286 = vand.u32 %v1285, 4294901760
        %v1287 = vsub.f32 %v1285, %v1286
        %v1288 = vand.u32 %v1287, 4294901760
        %1289 = vmatmul.mubr.f32.gmra.mrb[0].mxu0 %v1288
        %v1290 = vpop.f32.mrb[0].mxu0
        %v1291 = vadd.f32 %v891, %v1290
        %v1292 = vpop.f32.mrb[0].mxu0
        %1293 = vdwg.mxu0
        %1294 = vmatprep.subr.mxu0 0.0
        %v1295 = vand.u32 %v870, 4294901760
        %v1296 = vsub.f32 %v870, %v1295
        %v1297 = vand.u32 %v1296, 4294901760
        %v1298 = vsub.f32 %v1296, %v1297
        %v1299 = vand.u32 %v1298, 4294901760
        %1300 = vmatpush1.msra.mxu0 %v1299
        %1301 = vmatprep.subr.mxu0 0.0
        %v1302 = vand.u32 %v871, 4294901760
        %v1303 = vsub.f32 %v871, %v1302
        %v1304 = vand.u32 %v1303, 4294901760
        %v1305 = vsub.f32 %v1303, %v1304
        %v1306 = vand.u32 %v1305, 4294901760
        %1307 = vmatpush1.msra.mxu0 %v1306
        %1308 = vmatprep.subr.mxu0 0.0
        %v1309 = vand.u32 %v872, 4294901760
        %v1310 = vsub.f32 %v872, %v1309
        %v1311 = vand.u32 %v1310, 4294901760
        %v1312 = vsub.f32 %v1310, %v1311
        %v1313 = vand.u32 %v1312, 4294901760
        %1314 = vmatpush1.msra.mxu0 %v1313
        %1315 = vmatprep.subr.mxu0 0.0
        %v1316 = vand.u32 %v873, 4294901760
        %v1317 = vsub.f32 %v873, %v1316
        %v1318 = vand.u32 %v1317, 4294901760
        %v1319 = vsub.f32 %v1317, %v1318
        %v1320 = vand.u32 %v1319, 4294901760
        %1321 = vmatpush1.msra.mxu0 %v1320
        %1322 = vmatprep.subr.mxu0 0.0
        %v1323 = vand.u32 %v874, 4294901760
        %v1324 = vsub.f32 %v874, %v1323
        %v1325 = vand.u32 %v1324, 4294901760
        %v1326 = vsub.f32 %v1324, %v1325
        %v1327 = vand.u32 %v1326, 4294901760
        %1328 = vmatpush1.msra.mxu0 %v1327
        %1329 = vmatprep.subr.mxu0 0.0
        %v1330 = vand.u32 %v875, 4294901760
        %v1331 = vsub.f32 %v875, %v1330
        %v1332 = vand.u32 %v1331, 4294901760
        %v1333 = vsub.f32 %v1331, %v1332
        %v1334 = vand.u32 %v1333, 4294901760
        %1335 = vmatpush1.msra.mxu0 %v1334
        %1336 = vmatprep.subr.mxu0 0.0
        %v1337 = vand.u32 %v876, 4294901760
        %v1338 = vsub.f32 %v876, %v1337
        %v1339 = vand.u32 %v1338, 4294901760
        %v1340 = vsub.f32 %v1338, %v1339
        %v1341 = vand.u32 %v1340, 4294901760
        %1342 = vmatpush1.msra.mxu0 %v1341
        %1343 = vmatprep.subr.mxu0 0.0
        %v1344 = vand.u32 %v877, 4294901760
        %v1345 = vsub.f32 %v877, %v1344
        %v1346 = vand.u32 %v1345, 4294901760
        %v1347 = vsub.f32 %v1345, %v1346
        %v1348 = vand.u32 %v1347, 4294901760
        %1349 = vmatpush1.msra.mxu0 %v1348
        %1350 = vmatprep.subr.mxu0 0.0
        %v1351 = vand.u32 %v878, 4294901760
        %v1352 = vsub.f32 %v878, %v1351
        %v1353 = vand.u32 %v1352, 4294901760
        %v1354 = vsub.f32 %v1352, %v1353
        %v1355 = vand.u32 %v1354, 4294901760
        %1356 = vmatpush1.msra.mxu0 %v1355
        %1357 = vmatprep.subr.mxu0 0.0
        %v1358 = vand.u32 %v879, 4294901760
        %v1359 = vsub.f32 %v879, %v1358
        %v1360 = vand.u32 %v1359, 4294901760
        %v1361 = vsub.f32 %v1359, %v1360
        %v1362 = vand.u32 %v1361, 4294901760
        %1363 = vmatpush1.msra.mxu0 %v1362
        %1364 = vmatprep.subr.mxu0 0.0
        %v1365 = vand.u32 %v880, 4294901760
        %v1366 = vsub.f32 %v880, %v1365
        %v1367 = vand.u32 %v1366, 4294901760
        %v1368 = vsub.f32 %v1366, %v1367
        %v1369 = vand.u32 %v1368, 4294901760
        %1370 = vmatpush1.msra.mxu0 %v1369
        %1371 = vmatprep.subr.mxu0 0.0
        %v1372 = vand.u32 %v881, 4294901760
        %v1373 = vsub.f32 %v881, %v1372
        %v1374 = vand.u32 %v1373, 4294901760
        %v1375 = vsub.f32 %v1373, %v1374
        %v1376 = vand.u32 %v1375, 4294901760
        %1377 = vmatpush1.msra.mxu0 %v1376
        %1378 = vmatprep.subr.mxu0 0.0
        %v1379 = vand.u32 %v882, 4294901760
        %v1380 = vsub.f32 %v882, %v1379
        %v1381 = vand.u32 %v1380, 4294901760
        %v1382 = vsub.f32 %v1380, %v1381
        %v1383 = vand.u32 %v1382, 4294901760
        %1384 = vmatpush1.msra.mxu0 %v1383
        %1385 = vmatprep.subr.mxu0 0.0
        %v1386 = vand.u32 %v883, 4294901760
        %v1387 = vsub.f32 %v883, %v1386
        %v1388 = vand.u32 %v1387, 4294901760
        %v1389 = vsub.f32 %v1387, %v1388
        %v1390 = vand.u32 %v1389, 4294901760
        %1391 = vmatpush1.msra.mxu0 %v1390
        %1392 = vmatprep.subr.mxu0 0.0
        %v1393 = vand.u32 %v884, 4294901760
        %v1394 = vsub.f32 %v884, %v1393
        %v1395 = vand.u32 %v1394, 4294901760
        %v1396 = vsub.f32 %v1394, %v1395
        %v1397 = vand.u32 %v1396, 4294901760
        %1398 = vmatpush1.msra.mxu0 %v1397
        %1399 = vmatprep.subr.mxu0 0.0
        %v1400 = vand.u32 %v885, 4294901760
        %v1401 = vsub.f32 %v885, %v1400
        %v1402 = vand.u32 %v1401, 4294901760
        %v1403 = vsub.f32 %v1401, %v1402
        %v1404 = vand.u32 %v1403, 4294901760
        %1405 = vmatpush1.msra.mxu0 %v1404
        %1406 = vmatprep.subr.mxu0 0.0
        %1407 = vmatpush1.msra.mxu0 0.0
        %1408 = vmatprep.subr.mxu0 0.0
        %1409 = vmatpush1.msra.mxu0 0.0
        %1410 = vmatprep.subr.mxu0 0.0
        %1411 = vmatpush1.msra.mxu0 0.0
        %1412 = vmatprep.subr.mxu0 0.0
        %1413 = vmatpush1.msra.mxu0 0.0
        %1414 = vmatprep.subr.mxu0 0.0
        %1415 = vmatpush1.msra.mxu0 0.0
        %1416 = vmatprep.subr.mxu0 0.0
        %1417 = vmatpush1.msra.mxu0 0.0
        %1418 = vmatprep.subr.mxu0 0.0
        %1419 = vmatpush1.msra.mxu0 0.0
        %1420 = vmatprep.subr.mxu0 0.0
        %1421 = vmatpush1.msra.mxu0 0.0
        %1422 = vmatprep.subr.mxu0 0.0
        %1423 = vmatpush1.msra.mxu0 0.0
        %1424 = vmatprep.subr.mxu0 0.0
        %1425 = vmatpush1.msra.mxu0 0.0
        %1426 = vmatprep.subr.mxu0 0.0
        %1427 = vmatpush1.msra.mxu0 0.0
        %1428 = vmatprep.subr.mxu0 0.0
        %1429 = vmatpush1.msra.mxu0 0.0
        %1430 = vmatprep.subr.mxu0 0.0
        %1431 = vmatpush1.msra.mxu0 0.0
        %1432 = vmatprep.subr.mxu0 0.0
        %1433 = vmatpush1.msra.mxu0 0.0
        %1434 = vmatprep.subr.mxu0 0.0
        %1435 = vmatpush1.msra.mxu0 0.0
        %1436 = vmatprep.subr.mxu0 0.0
        %1437 = vmatpush1.msra.mxu0 0.0
        %1438 = vmatprep.mubr.f32.mxu0 0.0
        %v1439 = vand.u32 %v838, 4294901760
        %1440 = vmatmul.mubr.f32.gmra.mrb[0].mxu0 %v1439
        %v1441 = vpop.f32.mrb[0].mxu0
        %v1442 = vadd.f32 %v981, %v1441
        %v1443 = vpop.f32.mrb[0].mxu0
        %1444 = vmatprep.mubr.f32.mxu0 0.0
        %v1445 = vand.u32 %v839, 4294901760
        %1446 = vmatmul.mubr.f32.gmra.mrb[0].mxu0 %v1445
        %v1447 = vpop.f32.mrb[0].mxu0
        %v1448 = vadd.f32 %v991, %v1447
        %v1449 = vpop.f32.mrb[0].mxu0
        %1450 = vmatprep.mubr.f32.mxu0 0.0
        %v1451 = vand.u32 %v840, 4294901760
        %1452 = vmatmul.mubr.f32.gmra.mrb[0].mxu0 %v1451
        %v1453 = vpop.f32.mrb[0].mxu0
        %v1454 = vadd.f32 %v1001, %v1453
        %v1455 = vpop.f32.mrb[0].mxu0
        %1456 = vmatprep.mubr.f32.mxu0 0.0
        %v1457 = vand.u32 %v841, 4294901760
        %1458 = vmatmul.mubr.f32.gmra.mrb[0].mxu0 %v1457
        %v1459 = vpop.f32.mrb[0].mxu0
        %v1460 = vadd.f32 %v1011, %v1459
        %v1461 = vpop.f32.mrb[0].mxu0
        %1462 = vmatprep.mubr.f32.mxu0 0.0
        %v1463 = vand.u32 %v842, 4294901760
        %1464 = vmatmul.mubr.f32.gmra.mrb[0].mxu0 %v1463
        %v1465 = vpop.f32.mrb[0].mxu0
        %v1466 = vadd.f32 %v1021, %v1465
        %v1467 = vpop.f32.mrb[0].mxu0
        %1468 = vmatprep.mubr.f32.mxu0 0.0
        %v1469 = vand.u32 %v843, 4294901760
        %1470 = vmatmul.mubr.f32.gmra.mrb[0].mxu0 %v1469
        %v1471 = vpop.f32.mrb[0].mxu0
        %v1472 = vadd.f32 %v1031, %v1471
        %v1473 = vpop.f32.mrb[0].mxu0
        %1474 = vmatprep.mubr.f32.mxu0 0.0
        %v1475 = vand.u32 %v844, 4294901760
        %1476 = vmatmul.mubr.f32.gmra.mrb[0].mxu0 %v1475
        %v1477 = vpop.f32.mrb[0].mxu0
        %v1478 = vadd.f32 %v1041, %v1477
        %v1479 = vpop.f32.mrb[0].mxu0
        %1480 = vmatprep.mubr.f32.mxu0 0.0
        %v1481 = vand.u32 %v845, 4294901760
        %1482 = vmatmul.mubr.f32.gmra.mrb[0].mxu0 %v1481
        %v1483 = vpop.f32.mrb[0].mxu0
        %v1484 = vadd.f32 %v1051, %v1483
        %v1485 = vpop.f32.mrb[0].mxu0
        %1486 = vmatprep.mubr.f32.mxu0 0.0
        %v1487 = vand.u32 %v846, 4294901760
        %1488 = vmatmul.mubr.f32.gmra.mrb[0].mxu0 %v1487
        %v1489 = vpop.f32.mrb[0].mxu0
        %v1490 = vadd.f32 %v1061, %v1489
        %v1491 = vpop.f32.mrb[0].mxu0
        %1492 = vmatprep.mubr.f32.mxu0 0.0
        %v1493 = vand.u32 %v847, 4294901760
        %1494 = vmatmul.mubr.f32.gmra.mrb[0].mxu0 %v1493
        %v1495 = vpop.f32.mrb[0].mxu0
        %v1496 = vadd.f32 %v1071, %v1495
        %v1497 = vpop.f32.mrb[0].mxu0
        %1498 = vmatprep.mubr.f32.mxu0 0.0
        %v1499 = vand.u32 %v848, 4294901760
        %1500 = vmatmul.mubr.f32.gmra.mrb[0].mxu0 %v1499
        %v1501 = vpop.f32.mrb[0].mxu0
        %v1502 = vadd.f32 %v1081, %v1501
        %v1503 = vpop.f32.mrb[0].mxu0
        %1504 = vmatprep.mubr.f32.mxu0 0.0
        %v1505 = vand.u32 %v849, 4294901760
        %1506 = vmatmul.mubr.f32.gmra.mrb[0].mxu0 %v1505
        %v1507 = vpop.f32.mrb[0].mxu0
        %v1508 = vadd.f32 %v1091, %v1507
        %v1509 = vpop.f32.mrb[0].mxu0
        %1510 = vmatprep.mubr.f32.mxu0 0.0
        %v1511 = vand.u32 %v850, 4294901760
        %1512 = vmatmul.mubr.f32.gmra.mrb[0].mxu0 %v1511
        %v1513 = vpop.f32.mrb[0].mxu0
        %v1514 = vadd.f32 %v1101, %v1513
        %v1515 = vpop.f32.mrb[0].mxu0
        %1516 = vmatprep.mubr.f32.mxu0 0.0
        %v1517 = vand.u32 %v851, 4294901760
        %1518 = vmatmul.mubr.f32.gmra.mrb[0].mxu0 %v1517
        %v1519 = vpop.f32.mrb[0].mxu0
        %v1520 = vadd.f32 %v1111, %v1519
        %v1521 = vpop.f32.mrb[0].mxu0
        %1522 = vmatprep.mubr.f32.mxu0 0.0
        %v1523 = vand.u32 %v852, 4294901760
        %1524 = vmatmul.mubr.f32.gmra.mrb[0].mxu0 %v1523
        %v1525 = vpop.f32.mrb[0].mxu0
        %v1526 = vadd.f32 %v1121, %v1525
        %v1527 = vpop.f32.mrb[0].mxu0
        %1528 = vmatprep.mubr.f32.mxu0 0.0
        %v1529 = vand.u32 %v853, 4294901760
        %1530 = vmatmul.mubr.f32.gmra.mrb[0].mxu0 %v1529
        %v1531 = vpop.f32.mrb[0].mxu0
        %v1532 = vadd.f32 %v1131, %v1531
        %v1533 = vpop.f32.mrb[0].mxu0
        %1534 = vmatprep.mubr.f32.mxu0 0.0
        %v1535 = vand.u32 %v854, 4294901760
        %1536 = vmatmul.mubr.f32.gmra.mrb[0].mxu0 %v1535
        %v1537 = vpop.f32.mrb[0].mxu0
        %v1538 = vadd.f32 %v1141, %v1537
        %v1539 = vpop.f32.mrb[0].mxu0
        %1540 = vmatprep.mubr.f32.mxu0 0.0
        %v1541 = vand.u32 %v855, 4294901760
        %1542 = vmatmul.mubr.f32.gmra.mrb[0].mxu0 %v1541
        %v1543 = vpop.f32.mrb[0].mxu0
        %v1544 = vadd.f32 %v1151, %v1543
        %v1545 = vpop.f32.mrb[0].mxu0
        %1546 = vmatprep.mubr.f32.mxu0 0.0
        %v1547 = vand.u32 %v856, 4294901760
        %1548 = vmatmul.mubr.f32.gmra.mrb[0].mxu0 %v1547
        %v1549 = vpop.f32.mrb[0].mxu0
        %v1550 = vadd.f32 %v1161, %v1549
        %v1551 = vpop.f32.mrb[0].mxu0
        %1552 = vmatprep.mubr.f32.mxu0 0.0
        %v1553 = vand.u32 %v857, 4294901760
        %1554 = vmatmul.mubr.f32.gmra.mrb[0].mxu0 %v1553
        %v1555 = vpop.f32.mrb[0].mxu0
        %v1556 = vadd.f32 %v1171, %v1555
        %v1557 = vpop.f32.mrb[0].mxu0
        %1558 = vmatprep.mubr.f32.mxu0 0.0
        %v1559 = vand.u32 %v858, 4294901760
        %1560 = vmatmul.mubr.f32.gmra.mrb[0].mxu0 %v1559
        %v1561 = vpop.f32.mrb[0].mxu0
        %v1562 = vadd.f32 %v1181, %v1561
        %v1563 = vpop.f32.mrb[0].mxu0
        %1564 = vmatprep.mubr.f32.mxu0 0.0
        %v1565 = vand.u32 %v859, 4294901760
        %1566 = vmatmul.mubr.f32.gmra.mrb[0].mxu0 %v1565
        %v1567 = vpop.f32.mrb[0].mxu0
        %v1568 = vadd.f32 %v1191, %v1567
        %v1569 = vpop.f32.mrb[0].mxu0
        %1570 = vmatprep.mubr.f32.mxu0 0.0
        %v1571 = vand.u32 %v860, 4294901760
        %1572 = vmatmul.mubr.f32.gmra.mrb[0].mxu0 %v1571
        %v1573 = vpop.f32.mrb[0].mxu0
        %v1574 = vadd.f32 %v1201, %v1573
        %v1575 = vpop.f32.mrb[0].mxu0
        %1576 = vmatprep.mubr.f32.mxu0 0.0
        %v1577 = vand.u32 %v861, 4294901760
        %1578 = vmatmul.mubr.f32.gmra.mrb[0].mxu0 %v1577
        %v1579 = vpop.f32.mrb[0].mxu0
        %v1580 = vadd.f32 %v1211, %v1579
        %v1581 = vpop.f32.mrb[0].mxu0
        %1582 = vmatprep.mubr.f32.mxu0 0.0
        %v1583 = vand.u32 %v862, 4294901760
        %1584 = vmatmul.mubr.f32.gmra.mrb[0].mxu0 %v1583
        %v1585 = vpop.f32.mrb[0].mxu0
        %v1586 = vadd.f32 %v1221, %v1585
        %v1587 = vpop.f32.mrb[0].mxu0
        %1588 = vmatprep.mubr.f32.mxu0 0.0
        %v1589 = vand.u32 %v863, 4294901760
        %1590 = vmatmul.mubr.f32.gmra.mrb[0].mxu0 %v1589
        %v1591 = vpop.f32.mrb[0].mxu0
        %v1592 = vadd.f32 %v1231, %v1591
        %v1593 = vpop.f32.mrb[0].mxu0
        %1594 = vmatprep.mubr.f32.mxu0 0.0
        %v1595 = vand.u32 %v864, 4294901760
        %1596 = vmatmul.mubr.f32.gmra.mrb[0].mxu0 %v1595
        %v1597 = vpop.f32.mrb[0].mxu0
        %v1598 = vadd.f32 %v1241, %v1597
        %v1599 = vpop.f32.mrb[0].mxu0
        %1600 = vmatprep.mubr.f32.mxu0 0.0
        %v1601 = vand.u32 %v865, 4294901760
        %1602 = vmatmul.mubr.f32.gmra.mrb[0].mxu0 %v1601
        %v1603 = vpop.f32.mrb[0].mxu0
        %v1604 = vadd.f32 %v1251, %v1603
        %v1605 = vpop.f32.mrb[0].mxu0
        %1606 = vmatprep.mubr.f32.mxu0 0.0
        %v1607 = vand.u32 %v866, 4294901760
        %1608 = vmatmul.mubr.f32.gmra.mrb[0].mxu0 %v1607
        %v1609 = vpop.f32.mrb[0].mxu0
        %v1610 = vadd.f32 %v1261, %v1609
        %v1611 = vpop.f32.mrb[0].mxu0
        %1612 = vmatprep.mubr.f32.mxu0 0.0
        %v1613 = vand.u32 %v867, 4294901760
        %1614 = vmatmul.mubr.f32.gmra.mrb[0].mxu0 %v1613
        %v1615 = vpop.f32.mrb[0].mxu0
        %v1616 = vadd.f32 %v1271, %v1615
        %v1617 = vpop.f32.mrb[0].mxu0
        %1618 = vmatprep.mubr.f32.mxu0 0.0
        %v1619 = vand.u32 %v868, 4294901760
        %1620 = vmatmul.mubr.f32.gmra.mrb[0].mxu0 %v1619
        %v1621 = vpop.f32.mrb[0].mxu0
        %v1622 = vadd.f32 %v1281, %v1621
        %v1623 = vpop.f32.mrb[0].mxu0
        %1624 = vmatprep.mubr.f32.mxu0 0.0
        %v1625 = vand.u32 %v869, 4294901760
        %1626 = vmatmul.mubr.f32.gmra.mrb[0].mxu0 %v1625
        %v1627 = vpop.f32.mrb[0].mxu0
        %v1628 = vadd.f32 %v1291, %v1627
        %v1629 = vpop.f32.mrb[0].mxu0
        %1630 = vdwg.mxu0
        %1631 = vmatprep.subr.mxu0 0.0
        %v1632 = vand.u32 %v870, 4294901760
        %v1633 = vsub.f32 %v870, %v1632
        %1634 = vmatpush1.msra.mxu0 %v1633
        %1635 = vmatprep.subr.mxu0 0.0
        %v1636 = vand.u32 %v871, 4294901760
        %v1637 = vsub.f32 %v871, %v1636
        %1638 = vmatpush1.msra.mxu0 %v1637
        %1639 = vmatprep.subr.mxu0 0.0
        %v1640 = vand.u32 %v872, 4294901760
        %v1641 = vsub.f32 %v872, %v1640
        %1642 = vmatpush1.msra.mxu0 %v1641
        %1643 = vmatprep.subr.mxu0 0.0
        %v1644 = vand.u32 %v873, 4294901760
        %v1645 = vsub.f32 %v873, %v1644
        %1646 = vmatpush1.msra.mxu0 %v1645
        %1647 = vmatprep.subr.mxu0 0.0
        %v1648 = vand.u32 %v874, 4294901760
        %v1649 = vsub.f32 %v874, %v1648
        %1650 = vmatpush1.msra.mxu0 %v1649
        %1651 = vmatprep.subr.mxu0 0.0
        %v1652 = vand.u32 %v875, 4294901760
        %v1653 = vsub.f32 %v875, %v1652
        %1654 = vmatpush1.msra.mxu0 %v1653
        %1655 = vmatprep.subr.mxu0 0.0
        %v1656 = vand.u32 %v876, 4294901760
        %v1657 = vsub.f32 %v876, %v1656
        %1658 = vmatpush1.msra.mxu0 %v1657
        %1659 = vmatprep.subr.mxu0 0.0
        %v1660 = vand.u32 %v877, 4294901760
        %v1661 = vsub.f32 %v877, %v1660
        %1662 = vmatpush1.msra.mxu0 %v1661
        %1663 = vmatprep.subr.mxu0 0.0
        %v1664 = vand.u32 %v878, 4294901760
        %v1665 = vsub.f32 %v878, %v1664
        %1666 = vmatpush1.msra.mxu0 %v1665
        %1667 = vmatprep.subr.mxu0 0.0
        %v1668 = vand.u32 %v879, 4294901760
        %v1669 = vsub.f32 %v879, %v1668
        %1670 = vmatpush1.msra.mxu0 %v1669
        %1671 = vmatprep.subr.mxu0 0.0
        %v1672 = vand.u32 %v880, 4294901760
        %v1673 = vsub.f32 %v880, %v1672
        %1674 = vmatpush1.msra.mxu0 %v1673
        %1675 = vmatprep.subr.mxu0 0.0
        %v1676 = vand.u32 %v881, 4294901760
        %v1677 = vsub.f32 %v881, %v1676
        %1678 = vmatpush1.msra.mxu0 %v1677
        %1679 = vmatprep.subr.mxu0 0.0
        %v1680 = vand.u32 %v882, 4294901760
        %v1681 = vsub.f32 %v882, %v1680
        %1682 = vmatpush1.msra.mxu0 %v1681
        %1683 = vmatprep.subr.mxu0 0.0
        %v1684 = vand.u32 %v883, 4294901760
        %v1685 = vsub.f32 %v883, %v1684
        %1686 = vmatpush1.msra.mxu0 %v1685
        %1687 = vmatprep.subr.mxu0 0.0
        %v1688 = vand.u32 %v884, 4294901760
        %v1689 = vsub.f32 %v884, %v1688
        %1690 = vmatpush1.msra.mxu0 %v1689
        %1691 = vmatprep.subr.mxu0 0.0
        %v1692 = vand.u32 %v885, 4294901760
        %v1693 = vsub.f32 %v885, %v1692
        %1694 = vmatpush1.msra.mxu0 %v1693
        %1695 = vmatprep.subr.mxu0 0.0
        %1696 = vmatpush1.msra.mxu0 0.0
        %1697 = vmatprep.subr.mxu0 0.0
        %1698 = vmatpush1.msra.mxu0 0.0
        %1699 = vmatprep.subr.mxu0 0.0
        %1700 = vmatpush1.msra.mxu0 0.0
        %1701 = vmatprep.subr.mxu0 0.0
        %1702 = vmatpush1.msra.mxu0 0.0
        %1703 = vmatprep.subr.mxu0 0.0
        %1704 = vmatpush1.msra.mxu0 0.0
        %1705 = vmatprep.subr.mxu0 0.0
        %1706 = vmatpush1.msra.mxu0 0.0
        %1707 = vmatprep.subr.mxu0 0.0
        %1708 = vmatpush1.msra.mxu0 0.0
        %1709 = vmatprep.subr.mxu0 0.0
        %1710 = vmatpush1.msra.mxu0 0.0
        %1711 = vmatprep.subr.mxu0 0.0
        %1712 = vmatpush1.msra.mxu0 0.0
        %1713 = vmatprep.subr.mxu0 0.0
        %1714 = vmatpush1.msra.mxu0 0.0
        %1715 = vmatprep.subr.mxu0 0.0
        %1716 = vmatpush1.msra.mxu0 0.0
        %1717 = vmatprep.subr.mxu0 0.0
        %1718 = vmatpush1.msra.mxu0 0.0
        %1719 = vmatprep.subr.mxu0 0.0
        %1720 = vmatpush1.msra.mxu0 0.0
        %1721 = vmatprep.subr.mxu0 0.0
        %1722 = vmatpush1.msra.mxu0 0.0
        %1723 = vmatprep.subr.mxu0 0.0
        %1724 = vmatpush1.msra.mxu0 0.0
        %1725 = vmatprep.subr.mxu0 0.0
        %1726 = vmatpush1.msra.mxu0 0.0
        %1727 = vmatprep.mubr.f32.mxu0 0.0
        %v1728 = vand.u32 %v838, 4294901760
        %v1729 = vsub.f32 %v838, %v1728
        %1730 = vmatmul.mubr.f32.gmra.mrb[0].mxu0 %v1729
        %v1731 = vpop.f32.mrb[0].mxu0
        %v1732 = vadd.f32 %v1442, %v1731
        %v1733 = vpop.f32.mrb[0].mxu0
        %1734 = vmatprep.mubr.f32.mxu0 0.0
        %v1735 = vand.u32 %v839, 4294901760
        %v1736 = vsub.f32 %v839, %v1735
        %1737 = vmatmul.mubr.f32.gmra.mrb[0].mxu0 %v1736
        %v1738 = vpop.f32.mrb[0].mxu0
        %v1739 = vadd.f32 %v1448, %v1738
        %v1740 = vpop.f32.mrb[0].mxu0
        %1741 = vmatprep.mubr.f32.mxu0 0.0
        %v1742 = vand.u32 %v840, 4294901760
        %v1743 = vsub.f32 %v840, %v1742
        %1744 = vmatmul.mubr.f32.gmra.mrb[0].mxu0 %v1743
        %v1745 = vpop.f32.mrb[0].mxu0
        %v1746 = vadd.f32 %v1454, %v1745
        %v1747 = vpop.f32.mrb[0].mxu0
        %1748 = vmatprep.mubr.f32.mxu0 0.0
        %v1749 = vand.u32 %v841, 4294901760
        %v1750 = vsub.f32 %v841, %v1749
        %1751 = vmatmul.mubr.f32.gmra.mrb[0].mxu0 %v1750
        %v1752 = vpop.f32.mrb[0].mxu0
        %v1753 = vadd.f32 %v1460, %v1752
        %v1754 = vpop.f32.mrb[0].mxu0
        %1755 = vmatprep.mubr.f32.mxu0 0.0
        %v1756 = vand.u32 %v842, 4294901760
        %v1757 = vsub.f32 %v842, %v1756
        %1758 = vmatmul.mubr.f32.gmra.mrb[0].mxu0 %v1757
        %v1759 = vpop.f32.mrb[0].mxu0
        %v1760 = vadd.f32 %v1466, %v1759
        %v1761 = vpop.f32.mrb[0].mxu0
        %1762 = vmatprep.mubr.f32.mxu0 0.0
        %v1763 = vand.u32 %v843, 4294901760
        %v1764 = vsub.f32 %v843, %v1763
        %1765 = vmatmul.mubr.f32.gmra.mrb[0].mxu0 %v1764
        %v1766 = vpop.f32.mrb[0].mxu0
        %v1767 = vadd.f32 %v1472, %v1766
        %v1768 = vpop.f32.mrb[0].mxu0
        %1769 = vmatprep.mubr.f32.mxu0 0.0
        %v1770 = vand.u32 %v844, 4294901760
        %v1771 = vsub.f32 %v844, %v1770
        %1772 = vmatmul.mubr.f32.gmra.mrb[0].mxu0 %v1771
        %v1773 = vpop.f32.mrb[0].mxu0
        %v1774 = vadd.f32 %v1478, %v1773
        %v1775 = vpop.f32.mrb[0].mxu0
        %1776 = vmatprep.mubr.f32.mxu0 0.0
        %v1777 = vand.u32 %v845, 4294901760
        %v1778 = vsub.f32 %v845, %v1777
        %1779 = vmatmul.mubr.f32.gmra.mrb[0].mxu0 %v1778
        %v1780 = vpop.f32.mrb[0].mxu0
        %v1781 = vadd.f32 %v1484, %v1780
        %v1782 = vpop.f32.mrb[0].mxu0
        %1783 = vmatprep.mubr.f32.mxu0 0.0
        %v1784 = vand.u32 %v846, 4294901760
        %v1785 = vsub.f32 %v846, %v1784
        %1786 = vmatmul.mubr.f32.gmra.mrb[0].mxu0 %v1785
        %v1787 = vpop.f32.mrb[0].mxu0
        %v1788 = vadd.f32 %v1490, %v1787
        %v1789 = vpop.f32.mrb[0].mxu0
        %1790 = vmatprep.mubr.f32.mxu0 0.0
        %v1791 = vand.u32 %v847, 4294901760
        %v1792 = vsub.f32 %v847, %v1791
        %1793 = vmatmul.mubr.f32.gmra.mrb[0].mxu0 %v1792
        %v1794 = vpop.f32.mrb[0].mxu0
        %v1795 = vadd.f32 %v1496, %v1794
        %v1796 = vpop.f32.mrb[0].mxu0
        %1797 = vmatprep.mubr.f32.mxu0 0.0
        %v1798 = vand.u32 %v848, 4294901760
        %v1799 = vsub.f32 %v848, %v1798
        %1800 = vmatmul.mubr.f32.gmra.mrb[0].mxu0 %v1799
        %v1801 = vpop.f32.mrb[0].mxu0
        %v1802 = vadd.f32 %v1502, %v1801
        %v1803 = vpop.f32.mrb[0].mxu0
        %1804 = vmatprep.mubr.f32.mxu0 0.0
        %v1805 = vand.u32 %v849, 4294901760
        %v1806 = vsub.f32 %v849, %v1805
        %1807 = vmatmul.mubr.f32.gmra.mrb[0].mxu0 %v1806
        %v1808 = vpop.f32.mrb[0].mxu0
        %v1809 = vadd.f32 %v1508, %v1808
        %v1810 = vpop.f32.mrb[0].mxu0
        %1811 = vmatprep.mubr.f32.mxu0 0.0
        %v1812 = vand.u32 %v850, 4294901760
        %v1813 = vsub.f32 %v850, %v1812
        %1814 = vmatmul.mubr.f32.gmra.mrb[0].mxu0 %v1813
        %v1815 = vpop.f32.mrb[0].mxu0
        %v1816 = vadd.f32 %v1514, %v1815
        %v1817 = vpop.f32.mrb[0].mxu0
        %1818 = vmatprep.mubr.f32.mxu0 0.0
        %v1819 = vand.u32 %v851, 4294901760
        %v1820 = vsub.f32 %v851, %v1819
        %1821 = vmatmul.mubr.f32.gmra.mrb[0].mxu0 %v1820
        %v1822 = vpop.f32.mrb[0].mxu0
        %v1823 = vadd.f32 %v1520, %v1822
        %v1824 = vpop.f32.mrb[0].mxu0
        %1825 = vmatprep.mubr.f32.mxu0 0.0
        %v1826 = vand.u32 %v852, 4294901760
        %v1827 = vsub.f32 %v852, %v1826
        %1828 = vmatmul.mubr.f32.gmra.mrb[0].mxu0 %v1827
        %v1829 = vpop.f32.mrb[0].mxu0
        %v1830 = vadd.f32 %v1526, %v1829
        %v1831 = vpop.f32.mrb[0].mxu0
        %1832 = vmatprep.mubr.f32.mxu0 0.0
        %v1833 = vand.u32 %v853, 4294901760
        %v1834 = vsub.f32 %v853, %v1833
        %1835 = vmatmul.mubr.f32.gmra.mrb[0].mxu0 %v1834
        %v1836 = vpop.f32.mrb[0].mxu0
        %v1837 = vadd.f32 %v1532, %v1836
        %v1838 = vpop.f32.mrb[0].mxu0
        %1839 = vmatprep.mubr.f32.mxu0 0.0
        %v1840 = vand.u32 %v854, 4294901760
        %v1841 = vsub.f32 %v854, %v1840
        %1842 = vmatmul.mubr.f32.gmra.mrb[0].mxu0 %v1841
        %v1843 = vpop.f32.mrb[0].mxu0
        %v1844 = vadd.f32 %v1538, %v1843
        %v1845 = vpop.f32.mrb[0].mxu0
        %1846 = vmatprep.mubr.f32.mxu0 0.0
        %v1847 = vand.u32 %v855, 4294901760
        %v1848 = vsub.f32 %v855, %v1847
        %1849 = vmatmul.mubr.f32.gmra.mrb[0].mxu0 %v1848
        %v1850 = vpop.f32.mrb[0].mxu0
        %v1851 = vadd.f32 %v1544, %v1850
        %v1852 = vpop.f32.mrb[0].mxu0
        %1853 = vmatprep.mubr.f32.mxu0 0.0
        %v1854 = vand.u32 %v856, 4294901760
        %v1855 = vsub.f32 %v856, %v1854
        %1856 = vmatmul.mubr.f32.gmra.mrb[0].mxu0 %v1855
        %v1857 = vpop.f32.mrb[0].mxu0
        %v1858 = vadd.f32 %v1550, %v1857
        %v1859 = vpop.f32.mrb[0].mxu0
        %1860 = vmatprep.mubr.f32.mxu0 0.0
        %v1861 = vand.u32 %v857, 4294901760
        %v1862 = vsub.f32 %v857, %v1861
        %1863 = vmatmul.mubr.f32.gmra.mrb[0].mxu0 %v1862
        %v1864 = vpop.f32.mrb[0].mxu0
        %v1865 = vadd.f32 %v1556, %v1864
        %v1866 = vpop.f32.mrb[0].mxu0
        %1867 = vmatprep.mubr.f32.mxu0 0.0
        %v1868 = vand.u32 %v858, 4294901760
        %v1869 = vsub.f32 %v858, %v1868
        %1870 = vmatmul.mubr.f32.gmra.mrb[0].mxu0 %v1869
        %v1871 = vpop.f32.mrb[0].mxu0
        %v1872 = vadd.f32 %v1562, %v1871
        %v1873 = vpop.f32.mrb[0].mxu0
        %1874 = vmatprep.mubr.f32.mxu0 0.0
        %v1875 = vand.u32 %v859, 4294901760
        %v1876 = vsub.f32 %v859, %v1875
        %1877 = vmatmul.mubr.f32.gmra.mrb[0].mxu0 %v1876
        %v1878 = vpop.f32.mrb[0].mxu0
        %v1879 = vadd.f32 %v1568, %v1878
        %v1880 = vpop.f32.mrb[0].mxu0
        %1881 = vmatprep.mubr.f32.mxu0 0.0
        %v1882 = vand.u32 %v860, 4294901760
        %v1883 = vsub.f32 %v860, %v1882
        %1884 = vmatmul.mubr.f32.gmra.mrb[0].mxu0 %v1883
        %v1885 = vpop.f32.mrb[0].mxu0
        %v1886 = vadd.f32 %v1574, %v1885
        %v1887 = vpop.f32.mrb[0].mxu0
        %1888 = vmatprep.mubr.f32.mxu0 0.0
        %v1889 = vand.u32 %v861, 4294901760
        %v1890 = vsub.f32 %v861, %v1889
        %1891 = vmatmul.mubr.f32.gmra.mrb[0].mxu0 %v1890
        %v1892 = vpop.f32.mrb[0].mxu0
        %v1893 = vadd.f32 %v1580, %v1892
        %v1894 = vpop.f32.mrb[0].mxu0
        %1895 = vmatprep.mubr.f32.mxu0 0.0
        %v1896 = vand.u32 %v862, 4294901760
        %v1897 = vsub.f32 %v862, %v1896
        %1898 = vmatmul.mubr.f32.gmra.mrb[0].mxu0 %v1897
        %v1899 = vpop.f32.mrb[0].mxu0
        %v1900 = vadd.f32 %v1586, %v1899
        %v1901 = vpop.f32.mrb[0].mxu0
        %1902 = vmatprep.mubr.f32.mxu0 0.0
        %v1903 = vand.u32 %v863, 4294901760
        %v1904 = vsub.f32 %v863, %v1903
        %1905 = vmatmul.mubr.f32.gmra.mrb[0].mxu0 %v1904
        %v1906 = vpop.f32.mrb[0].mxu0
        %v1907 = vadd.f32 %v1592, %v1906
        %v1908 = vpop.f32.mrb[0].mxu0
        %1909 = vmatprep.mubr.f32.mxu0 0.0
        %v1910 = vand.u32 %v864, 4294901760
        %v1911 = vsub.f32 %v864, %v1910
        %1912 = vmatmul.mubr.f32.gmra.mrb[0].mxu0 %v1911
        %v1913 = vpop.f32.mrb[0].mxu0
        %v1914 = vadd.f32 %v1598, %v1913
        %v1915 = vpop.f32.mrb[0].mxu0
        %1916 = vmatprep.mubr.f32.mxu0 0.0
        %v1917 = vand.u32 %v865, 4294901760
        %v1918 = vsub.f32 %v865, %v1917
        %1919 = vmatmul.mubr.f32.gmra.mrb[0].mxu0 %v1918
        %v1920 = vpop.f32.mrb[0].mxu0
        %v1921 = vadd.f32 %v1604, %v1920
        %v1922 = vpop.f32.mrb[0].mxu0
        %1923 = vmatprep.mubr.f32.mxu0 0.0
        %v1924 = vand.u32 %v866, 4294901760
        %v1925 = vsub.f32 %v866, %v1924
        %1926 = vmatmul.mubr.f32.gmra.mrb[0].mxu0 %v1925
        %v1927 = vpop.f32.mrb[0].mxu0
        %v1928 = vadd.f32 %v1610, %v1927
        %v1929 = vpop.f32.mrb[0].mxu0
        %1930 = vmatprep.mubr.f32.mxu0 0.0
        %v1931 = vand.u32 %v867, 4294901760
        %v1932 = vsub.f32 %v867, %v1931
        %1933 = vmatmul.mubr.f32.gmra.mrb[0].mxu0 %v1932
        %v1934 = vpop.f32.mrb[0].mxu0
        %v1935 = vadd.f32 %v1616, %v1934
        %v1936 = vpop.f32.mrb[0].mxu0
        %1937 = vmatprep.mubr.f32.mxu0 0.0
        %v1938 = vand.u32 %v868, 4294901760
        %v1939 = vsub.f32 %v868, %v1938
        %1940 = vmatmul.mubr.f32.gmra.mrb[0].mxu0 %v1939
        %v1941 = vpop.f32.mrb[0].mxu0
        %v1942 = vadd.f32 %v1622, %v1941
        %v1943 = vpop.f32.mrb[0].mxu0
        %1944 = vmatprep.mubr.f32.mxu0 0.0
        %v1945 = vand.u32 %v869, 4294901760
        %v1946 = vsub.f32 %v869, %v1945
        %1947 = vmatmul.mubr.f32.gmra.mrb[0].mxu0 %v1946
        %v1948 = vpop.f32.mrb[0].mxu0
        %v1949 = vadd.f32 %v1628, %v1948
        %v1950 = vpop.f32.mrb[0].mxu0
        %1951 = vdwg.mxu0
        %1952 = vmatprep.subr.mxu0 0.0
        %v1953 = vand.u32 %v870, 4294901760
        %1954 = vmatpush1.msra.mxu0 %v1953
        %1955 = vmatprep.subr.mxu0 0.0
        %v1956 = vand.u32 %v871, 4294901760
        %1957 = vmatpush1.msra.mxu0 %v1956
        %1958 = vmatprep.subr.mxu0 0.0
        %v1959 = vand.u32 %v872, 4294901760
        %1960 = vmatpush1.msra.mxu0 %v1959
        %1961 = vmatprep.subr.mxu0 0.0
        %v1962 = vand.u32 %v873, 4294901760
        %1963 = vmatpush1.msra.mxu0 %v1962
        %1964 = vmatprep.subr.mxu0 0.0
        %v1965 = vand.u32 %v874, 4294901760
        %1966 = vmatpush1.msra.mxu0 %v1965
        %1967 = vmatprep.subr.mxu0 0.0
        %v1968 = vand.u32 %v875, 4294901760
        %1969 = vmatpush1.msra.mxu0 %v1968
        %1970 = vmatprep.subr.mxu0 0.0
        %v1971 = vand.u32 %v876, 4294901760
        %1972 = vmatpush1.msra.mxu0 %v1971
        %1973 = vmatprep.subr.mxu0 0.0
        %v1974 = vand.u32 %v877, 4294901760
        %1975 = vmatpush1.msra.mxu0 %v1974
        %1976 = vmatprep.subr.mxu0 0.0
        %v1977 = vand.u32 %v878, 4294901760
        %1978 = vmatpush1.msra.mxu0 %v1977
        %1979 = vmatprep.subr.mxu0 0.0
        %v1980 = vand.u32 %v879, 4294901760
        %1981 = vmatpush1.msra.mxu0 %v1980
        %1982 = vmatprep.subr.mxu0 0.0
        %v1983 = vand.u32 %v880, 4294901760
        %1984 = vmatpush1.msra.mxu0 %v1983
        %1985 = vmatprep.subr.mxu0 0.0
        %v1986 = vand.u32 %v881, 4294901760
        %1987 = vmatpush1.msra.mxu0 %v1986
        %1988 = vmatprep.subr.mxu0 0.0
        %v1989 = vand.u32 %v882, 4294901760
        %1990 = vmatpush1.msra.mxu0 %v1989
        %1991 = vmatprep.subr.mxu0 0.0
        %v1992 = vand.u32 %v883, 4294901760
        %1993 = vmatpush1.msra.mxu0 %v1992
        %1994 = vmatprep.subr.mxu0 0.0
        %v1995 = vand.u32 %v884, 4294901760
        %1996 = vmatpush1.msra.mxu0 %v1995
        %1997 = vmatprep.subr.mxu0 0.0
        %v1998 = vand.u32 %v885, 4294901760
        %1999 = vmatpush1.msra.mxu0 %v1998
        %2000 = vmatprep.subr.mxu0 0.0
        %2001 = vmatpush1.msra.mxu0 0.0
        %2002 = vmatprep.subr.mxu0 0.0
        %2003 = vmatpush1.msra.mxu0 0.0
        %2004 = vmatprep.subr.mxu0 0.0
        %2005 = vmatpush1.msra.mxu0 0.0
        %2006 = vmatprep.subr.mxu0 0.0
        %2007 = vmatpush1.msra.mxu0 0.0
        %2008 = vmatprep.subr.mxu0 0.0
        %2009 = vmatpush1.msra.mxu0 0.0
        %2010 = vmatprep.subr.mxu0 0.0
        %2011 = vmatpush1.msra.mxu0 0.0
        %2012 = vmatprep.subr.mxu0 0.0
        %2013 = vmatpush1.msra.mxu0 0.0
        %2014 = vmatprep.subr.mxu0 0.0
        %2015 = vmatpush1.msra.mxu0 0.0
        %2016 = vmatprep.subr.mxu0 0.0
        %2017 = vmatpush1.msra.mxu0 0.0
        %2018 = vmatprep.subr.mxu0 0.0
        %2019 = vmatpush1.msra.mxu0 0.0
        %2020 = vmatprep.subr.mxu0 0.0
        %2021 = vmatpush1.msra.mxu0 0.0
        %2022 = vmatprep.subr.mxu0 0.0
        %2023 = vmatpush1.msra.mxu0 0.0
        %2024 = vmatprep.subr.mxu0 0.0
        %2025 = vmatpush1.msra.mxu0 0.0
        %2026 = vmatprep.subr.mxu0 0.0
        %2027 = vmatpush1.msra.mxu0 0.0
        %2028 = vmatprep.subr.mxu0 0.0
        %2029 = vmatpush1.msra.mxu0 0.0
        %2030 = vmatprep.subr.mxu0 0.0
        %2031 = vmatpush1.msra.mxu0 0.0
        %2032 = vmatprep.mubr.f32.mxu0 0.0
        %v2033 = vand.u32 %v838, 4294901760
        %v2034 = vsub.f32 %v838, %v2033
        %v2035 = vand.u32 %v2034, 4294901760
        %2036 = vmatmul.mubr.f32.gmra.mrb[0].mxu0 %v2035
        %v2037 = vpop.f32.mrb[0].mxu0
        %v2038 = vadd.f32 %v1732, %v2037
        %v2039 = vpop.f32.mrb[0].mxu0
        %2040 = vmatprep.mubr.f32.mxu0 0.0
        %v2041 = vand.u32 %v839, 4294901760
        %v2042 = vsub.f32 %v839, %v2041
        %v2043 = vand.u32 %v2042, 4294901760
        %2044 = vmatmul.mubr.f32.gmra.mrb[0].mxu0 %v2043
        %v2045 = vpop.f32.mrb[0].mxu0
        %v2046 = vadd.f32 %v1739, %v2045
        %v2047 = vpop.f32.mrb[0].mxu0
        %2048 = vmatprep.mubr.f32.mxu0 0.0
        %v2049 = vand.u32 %v840, 4294901760
        %v2050 = vsub.f32 %v840, %v2049
        %v2051 = vand.u32 %v2050, 4294901760
        %2052 = vmatmul.mubr.f32.gmra.mrb[0].mxu0 %v2051
        %v2053 = vpop.f32.mrb[0].mxu0
        %v2054 = vadd.f32 %v1746, %v2053
        %v2055 = vpop.f32.mrb[0].mxu0
        %2056 = vmatprep.mubr.f32.mxu0 0.0
        %v2057 = vand.u32 %v841, 4294901760
        %v2058 = vsub.f32 %v841, %v2057
        %v2059 = vand.u32 %v2058, 4294901760
        %2060 = vmatmul.mubr.f32.gmra.mrb[0].mxu0 %v2059
        %v2061 = vpop.f32.mrb[0].mxu0
        %v2062 = vadd.f32 %v1753, %v2061
        %v2063 = vpop.f32.mrb[0].mxu0
        %2064 = vmatprep.mubr.f32.mxu0 0.0
        %v2065 = vand.u32 %v842, 4294901760
        %v2066 = vsub.f32 %v842, %v2065
        %v2067 = vand.u32 %v2066, 4294901760
        %2068 = vmatmul.mubr.f32.gmra.mrb[0].mxu0 %v2067
        %v2069 = vpop.f32.mrb[0].mxu0
        %v2070 = vadd.f32 %v1760, %v2069
        %v2071 = vpop.f32.mrb[0].mxu0
        %2072 = vmatprep.mubr.f32.mxu0 0.0
        %v2073 = vand.u32 %v843, 4294901760
        %v2074 = vsub.f32 %v843, %v2073
        %v2075 = vand.u32 %v2074, 4294901760
        %2076 = vmatmul.mubr.f32.gmra.mrb[0].mxu0 %v2075
        %v2077 = vpop.f32.mrb[0].mxu0
        %v2078 = vadd.f32 %v1767, %v2077
        %v2079 = vpop.f32.mrb[0].mxu0
        %2080 = vmatprep.mubr.f32.mxu0 0.0
        %v2081 = vand.u32 %v844, 4294901760
        %v2082 = vsub.f32 %v844, %v2081
        %v2083 = vand.u32 %v2082, 4294901760
        %2084 = vmatmul.mubr.f32.gmra.mrb[0].mxu0 %v2083
        %v2085 = vpop.f32.mrb[0].mxu0
        %v2086 = vadd.f32 %v1774, %v2085
        %v2087 = vpop.f32.mrb[0].mxu0
        %2088 = vmatprep.mubr.f32.mxu0 0.0
        %v2089 = vand.u32 %v845, 4294901760
        %v2090 = vsub.f32 %v845, %v2089
        %v2091 = vand.u32 %v2090, 4294901760
        %2092 = vmatmul.mubr.f32.gmra.mrb[0].mxu0 %v2091
        %v2093 = vpop.f32.mrb[0].mxu0
        %v2094 = vadd.f32 %v1781, %v2093
        %v2095 = vpop.f32.mrb[0].mxu0
        %2096 = vmatprep.mubr.f32.mxu0 0.0
        %v2097 = vand.u32 %v846, 4294901760
        %v2098 = vsub.f32 %v846, %v2097
        %v2099 = vand.u32 %v2098, 4294901760
        %2100 = vmatmul.mubr.f32.gmra.mrb[0].mxu0 %v2099
        %v2101 = vpop.f32.mrb[0].mxu0
        %v2102 = vadd.f32 %v1788, %v2101
        %v2103 = vpop.f32.mrb[0].mxu0
        %2104 = vmatprep.mubr.f32.mxu0 0.0
        %v2105 = vand.u32 %v847, 4294901760
        %v2106 = vsub.f32 %v847, %v2105
        %v2107 = vand.u32 %v2106, 4294901760
        %2108 = vmatmul.mubr.f32.gmra.mrb[0].mxu0 %v2107
        %v2109 = vpop.f32.mrb[0].mxu0
        %v2110 = vadd.f32 %v1795, %v2109
        %v2111 = vpop.f32.mrb[0].mxu0
        %2112 = vmatprep.mubr.f32.mxu0 0.0
        %v2113 = vand.u32 %v848, 4294901760
        %v2114 = vsub.f32 %v848, %v2113
        %v2115 = vand.u32 %v2114, 4294901760
        %2116 = vmatmul.mubr.f32.gmra.mrb[0].mxu0 %v2115
        %v2117 = vpop.f32.mrb[0].mxu0
        %v2118 = vadd.f32 %v1802, %v2117
        %v2119 = vpop.f32.mrb[0].mxu0
        %2120 = vmatprep.mubr.f32.mxu0 0.0
        %v2121 = vand.u32 %v849, 4294901760
        %v2122 = vsub.f32 %v849, %v2121
        %v2123 = vand.u32 %v2122, 4294901760
        %2124 = vmatmul.mubr.f32.gmra.mrb[0].mxu0 %v2123
        %v2125 = vpop.f32.mrb[0].mxu0
        %v2126 = vadd.f32 %v1809, %v2125
        %v2127 = vpop.f32.mrb[0].mxu0
        %2128 = vmatprep.mubr.f32.mxu0 0.0
        %v2129 = vand.u32 %v850, 4294901760
        %v2130 = vsub.f32 %v850, %v2129
        %v2131 = vand.u32 %v2130, 4294901760
        %2132 = vmatmul.mubr.f32.gmra.mrb[0].mxu0 %v2131
        %v2133 = vpop.f32.mrb[0].mxu0
        %v2134 = vadd.f32 %v1816, %v2133
        %v2135 = vpop.f32.mrb[0].mxu0
        %2136 = vmatprep.mubr.f32.mxu0 0.0
        %v2137 = vand.u32 %v851, 4294901760
        %v2138 = vsub.f32 %v851, %v2137
        %v2139 = vand.u32 %v2138, 4294901760
        %2140 = vmatmul.mubr.f32.gmra.mrb[0].mxu0 %v2139
        %v2141 = vpop.f32.mrb[0].mxu0
        %v2142 = vadd.f32 %v1823, %v2141
        %v2143 = vpop.f32.mrb[0].mxu0
        %2144 = vmatprep.mubr.f32.mxu0 0.0
        %v2145 = vand.u32 %v852, 4294901760
        %v2146 = vsub.f32 %v852, %v2145
        %v2147 = vand.u32 %v2146, 4294901760
        %2148 = vmatmul.mubr.f32.gmra.mrb[0].mxu0 %v2147
        %v2149 = vpop.f32.mrb[0].mxu0
        %v2150 = vadd.f32 %v1830, %v2149
        %v2151 = vpop.f32.mrb[0].mxu0
        %2152 = vmatprep.mubr.f32.mxu0 0.0
        %v2153 = vand.u32 %v853, 4294901760
        %v2154 = vsub.f32 %v853, %v2153
        %v2155 = vand.u32 %v2154, 4294901760
        %2156 = vmatmul.mubr.f32.gmra.mrb[0].mxu0 %v2155
        %v2157 = vpop.f32.mrb[0].mxu0
        %v2158 = vadd.f32 %v1837, %v2157
        %v2159 = vpop.f32.mrb[0].mxu0
        %2160 = vmatprep.mubr.f32.mxu0 0.0
        %v2161 = vand.u32 %v854, 4294901760
        %v2162 = vsub.f32 %v854, %v2161
        %v2163 = vand.u32 %v2162, 4294901760
        %2164 = vmatmul.mubr.f32.gmra.mrb[0].mxu0 %v2163
        %v2165 = vpop.f32.mrb[0].mxu0
        %v2166 = vadd.f32 %v1844, %v2165
        %v2167 = vpop.f32.mrb[0].mxu0
        %2168 = vmatprep.mubr.f32.mxu0 0.0
        %v2169 = vand.u32 %v855, 4294901760
        %v2170 = vsub.f32 %v855, %v2169
        %v2171 = vand.u32 %v2170, 4294901760
        %2172 = vmatmul.mubr.f32.gmra.mrb[0].mxu0 %v2171
        %v2173 = vpop.f32.mrb[0].mxu0
        %v2174 = vadd.f32 %v1851, %v2173
        %v2175 = vpop.f32.mrb[0].mxu0
        %2176 = vmatprep.mubr.f32.mxu0 0.0
        %v2177 = vand.u32 %v856, 4294901760
        %v2178 = vsub.f32 %v856, %v2177
        %v2179 = vand.u32 %v2178, 4294901760
        %2180 = vmatmul.mubr.f32.gmra.mrb[0].mxu0 %v2179
        %v2181 = vpop.f32.mrb[0].mxu0
        %v2182 = vadd.f32 %v1858, %v2181
        %v2183 = vpop.f32.mrb[0].mxu0
        %2184 = vmatprep.mubr.f32.mxu0 0.0
        %v2185 = vand.u32 %v857, 4294901760
        %v2186 = vsub.f32 %v857, %v2185
        %v2187 = vand.u32 %v2186, 4294901760
        %2188 = vmatmul.mubr.f32.gmra.mrb[0].mxu0 %v2187
        %v2189 = vpop.f32.mrb[0].mxu0
        %v2190 = vadd.f32 %v1865, %v2189
        %v2191 = vpop.f32.mrb[0].mxu0
        %2192 = vmatprep.mubr.f32.mxu0 0.0
        %v2193 = vand.u32 %v858, 4294901760
        %v2194 = vsub.f32 %v858, %v2193
        %v2195 = vand.u32 %v2194, 4294901760
        %2196 = vmatmul.mubr.f32.gmra.mrb[0].mxu0 %v2195
        %v2197 = vpop.f32.mrb[0].mxu0
        %v2198 = vadd.f32 %v1872, %v2197
        %v2199 = vpop.f32.mrb[0].mxu0
        %2200 = vmatprep.mubr.f32.mxu0 0.0
        %v2201 = vand.u32 %v859, 4294901760
        %v2202 = vsub.f32 %v859, %v2201
        %v2203 = vand.u32 %v2202, 4294901760
        %2204 = vmatmul.mubr.f32.gmra.mrb[0].mxu0 %v2203
        %v2205 = vpop.f32.mrb[0].mxu0
        %v2206 = vadd.f32 %v1879, %v2205
        %v2207 = vpop.f32.mrb[0].mxu0
        %2208 = vmatprep.mubr.f32.mxu0 0.0
        %v2209 = vand.u32 %v860, 4294901760
        %v2210 = vsub.f32 %v860, %v2209
        %v2211 = vand.u32 %v2210, 4294901760
        %2212 = vmatmul.mubr.f32.gmra.mrb[0].mxu0 %v2211
        %v2213 = vpop.f32.mrb[0].mxu0
        %v2214 = vadd.f32 %v1886, %v2213
        %v2215 = vpop.f32.mrb[0].mxu0
        %2216 = vmatprep.mubr.f32.mxu0 0.0
        %v2217 = vand.u32 %v861, 4294901760
        %v2218 = vsub.f32 %v861, %v2217
        %v2219 = vand.u32 %v2218, 4294901760
        %2220 = vmatmul.mubr.f32.gmra.mrb[0].mxu0 %v2219
        %v2221 = vpop.f32.mrb[0].mxu0
        %v2222 = vadd.f32 %v1893, %v2221
        %v2223 = vpop.f32.mrb[0].mxu0
        %2224 = vmatprep.mubr.f32.mxu0 0.0
        %v2225 = vand.u32 %v862, 4294901760
        %v2226 = vsub.f32 %v862, %v2225
        %v2227 = vand.u32 %v2226, 4294901760
        %2228 = vmatmul.mubr.f32.gmra.mrb[0].mxu0 %v2227
        %v2229 = vpop.f32.mrb[0].mxu0
        %v2230 = vadd.f32 %v1900, %v2229
        %v2231 = vpop.f32.mrb[0].mxu0
        %2232 = vmatprep.mubr.f32.mxu0 0.0
        %v2233 = vand.u32 %v863, 4294901760
        %v2234 = vsub.f32 %v863, %v2233
        %v2235 = vand.u32 %v2234, 4294901760
        %2236 = vmatmul.mubr.f32.gmra.mrb[0].mxu0 %v2235
        %v2237 = vpop.f32.mrb[0].mxu0
        %v2238 = vadd.f32 %v1907, %v2237
        %v2239 = vpop.f32.mrb[0].mxu0
        %2240 = vmatprep.mubr.f32.mxu0 0.0
        %v2241 = vand.u32 %v864, 4294901760
        %v2242 = vsub.f32 %v864, %v2241
        %v2243 = vand.u32 %v2242, 4294901760
        %2244 = vmatmul.mubr.f32.gmra.mrb[0].mxu0 %v2243
        %v2245 = vpop.f32.mrb[0].mxu0
        %v2246 = vadd.f32 %v1914, %v2245
        %v2247 = vpop.f32.mrb[0].mxu0
        %2248 = vmatprep.mubr.f32.mxu0 0.0
        %v2249 = vand.u32 %v865, 4294901760
        %v2250 = vsub.f32 %v865, %v2249
        %v2251 = vand.u32 %v2250, 4294901760
        %2252 = vmatmul.mubr.f32.gmra.mrb[0].mxu0 %v2251
        %v2253 = vpop.f32.mrb[0].mxu0
        %v2254 = vadd.f32 %v1921, %v2253
        %v2255 = vpop.f32.mrb[0].mxu0
        %2256 = vmatprep.mubr.f32.mxu0 0.0
        %v2257 = vand.u32 %v866, 4294901760
        %v2258 = vsub.f32 %v866, %v2257
        %v2259 = vand.u32 %v2258, 4294901760
        %2260 = vmatmul.mubr.f32.gmra.mrb[0].mxu0 %v2259
        %v2261 = vpop.f32.mrb[0].mxu0
        %v2262 = vadd.f32 %v1928, %v2261
        %v2263 = vpop.f32.mrb[0].mxu0
        %2264 = vmatprep.mubr.f32.mxu0 0.0
        %v2265 = vand.u32 %v867, 4294901760
        %v2266 = vsub.f32 %v867, %v2265
        %v2267 = vand.u32 %v2266, 4294901760
        %2268 = vmatmul.mubr.f32.gmra.mrb[0].mxu0 %v2267
        %v2269 = vpop.f32.mrb[0].mxu0
        %v2270 = vadd.f32 %v1935, %v2269
        %v2271 = vpop.f32.mrb[0].mxu0
        %2272 = vmatprep.mubr.f32.mxu0 0.0
        %v2273 = vand.u32 %v868, 4294901760
        %v2274 = vsub.f32 %v868, %v2273
        %v2275 = vand.u32 %v2274, 4294901760
        %2276 = vmatmul.mubr.f32.gmra.mrb[0].mxu0 %v2275
        %v2277 = vpop.f32.mrb[0].mxu0
        %v2278 = vadd.f32 %v1942, %v2277
        %v2279 = vpop.f32.mrb[0].mxu0
        %2280 = vmatprep.mubr.f32.mxu0 0.0
        %v2281 = vand.u32 %v869, 4294901760
        %v2282 = vsub.f32 %v869, %v2281
        %v2283 = vand.u32 %v2282, 4294901760
        %2284 = vmatmul.mubr.f32.gmra.mrb[0].mxu0 %v2283
        %v2285 = vpop.f32.mrb[0].mxu0
        %v2286 = vadd.f32 %v1949, %v2285
        %v2287 = vpop.f32.mrb[0].mxu0
        %2288 = vdwg.mxu0
        %2289 = vmatprep.subr.mxu0 0.0
        %v2290 = vand.u32 %v870, 4294901760
        %v2291 = vsub.f32 %v870, %v2290
        %v2292 = vand.u32 %v2291, 4294901760
        %2293 = vmatpush1.msra.mxu0 %v2292
        %2294 = vmatprep.subr.mxu0 0.0
        %v2295 = vand.u32 %v871, 4294901760
        %v2296 = vsub.f32 %v871, %v2295
        %v2297 = vand.u32 %v2296, 4294901760
        %2298 = vmatpush1.msra.mxu0 %v2297
        %2299 = vmatprep.subr.mxu0 0.0
        %v2300 = vand.u32 %v872, 4294901760
        %v2301 = vsub.f32 %v872, %v2300
        %v2302 = vand.u32 %v2301, 4294901760
        %2303 = vmatpush1.msra.mxu0 %v2302
        %2304 = vmatprep.subr.mxu0 0.0
        %v2305 = vand.u32 %v873, 4294901760
        %v2306 = vsub.f32 %v873, %v2305
        %v2307 = vand.u32 %v2306, 4294901760
        %2308 = vmatpush1.msra.mxu0 %v2307
        %2309 = vmatprep.subr.mxu0 0.0
        %v2310 = vand.u32 %v874, 4294901760
        %v2311 = vsub.f32 %v874, %v2310
        %v2312 = vand.u32 %v2311, 4294901760
        %2313 = vmatpush1.msra.mxu0 %v2312
        %2314 = vmatprep.subr.mxu0 0.0
        %v2315 = vand.u32 %v875, 4294901760
        %v2316 = vsub.f32 %v875, %v2315
        %v2317 = vand.u32 %v2316, 4294901760
        %2318 = vmatpush1.msra.mxu0 %v2317
        %2319 = vmatprep.subr.mxu0 0.0
        %v2320 = vand.u32 %v876, 4294901760
        %v2321 = vsub.f32 %v876, %v2320
        %v2322 = vand.u32 %v2321, 4294901760
        %2323 = vmatpush1.msra.mxu0 %v2322
        %2324 = vmatprep.subr.mxu0 0.0
        %v2325 = vand.u32 %v877, 4294901760
        %v2326 = vsub.f32 %v877, %v2325
        %v2327 = vand.u32 %v2326, 4294901760
        %2328 = vmatpush1.msra.mxu0 %v2327
        %2329 = vmatprep.subr.mxu0 0.0
        %v2330 = vand.u32 %v878, 4294901760
        %v2331 = vsub.f32 %v878, %v2330
        %v2332 = vand.u32 %v2331, 4294901760
        %2333 = vmatpush1.msra.mxu0 %v2332
        %2334 = vmatprep.subr.mxu0 0.0
        %v2335 = vand.u32 %v879, 4294901760
        %v2336 = vsub.f32 %v879, %v2335
        %v2337 = vand.u32 %v2336, 4294901760
        %2338 = vmatpush1.msra.mxu0 %v2337
        %2339 = vmatprep.subr.mxu0 0.0
        %v2340 = vand.u32 %v880, 4294901760
        %v2341 = vsub.f32 %v880, %v2340
        %v2342 = vand.u32 %v2341, 4294901760
        %2343 = vmatpush1.msra.mxu0 %v2342
        %2344 = vmatprep.subr.mxu0 0.0
        %v2345 = vand.u32 %v881, 4294901760
        %v2346 = vsub.f32 %v881, %v2345
        %v2347 = vand.u32 %v2346, 4294901760
        %2348 = vmatpush1.msra.mxu0 %v2347
        %2349 = vmatprep.subr.mxu0 0.0
        %v2350 = vand.u32 %v882, 4294901760
        %v2351 = vsub.f32 %v882, %v2350
        %v2352 = vand.u32 %v2351, 4294901760
        %2353 = vmatpush1.msra.mxu0 %v2352
        %2354 = vmatprep.subr.mxu0 0.0
        %v2355 = vand.u32 %v883, 4294901760
        %v2356 = vsub.f32 %v883, %v2355
        %v2357 = vand.u32 %v2356, 4294901760
        %2358 = vmatpush1.msra.mxu0 %v2357
        %2359 = vmatprep.subr.mxu0 0.0
        %v2360 = vand.u32 %v884, 4294901760
        %v2361 = vsub.f32 %v884, %v2360
        %v2362 = vand.u32 %v2361, 4294901760
        %2363 = vmatpush1.msra.mxu0 %v2362
        %2364 = vmatprep.subr.mxu0 0.0
        %v2365 = vand.u32 %v885, 4294901760
        %v2366 = vsub.f32 %v885, %v2365
        %v2367 = vand.u32 %v2366, 4294901760
        %2368 = vmatpush1.msra.mxu0 %v2367
        %2369 = vmatprep.subr.mxu0 0.0
        %2370 = vmatpush1.msra.mxu0 0.0
        %2371 = vmatprep.subr.mxu0 0.0
        %2372 = vmatpush1.msra.mxu0 0.0
        %2373 = vmatprep.subr.mxu0 0.0
        %2374 = vmatpush1.msra.mxu0 0.0
        %2375 = vmatprep.subr.mxu0 0.0
        %2376 = vmatpush1.msra.mxu0 0.0
        %2377 = vmatprep.subr.mxu0 0.0
        %2378 = vmatpush1.msra.mxu0 0.0
        %2379 = vmatprep.subr.mxu0 0.0
        %2380 = vmatpush1.msra.mxu0 0.0
        %2381 = vmatprep.subr.mxu0 0.0
        %2382 = vmatpush1.msra.mxu0 0.0
        %2383 = vmatprep.subr.mxu0 0.0
        %2384 = vmatpush1.msra.mxu0 0.0
        %2385 = vmatprep.subr.mxu0 0.0
        %2386 = vmatpush1.msra.mxu0 0.0
        %2387 = vmatprep.subr.mxu0 0.0
        %2388 = vmatpush1.msra.mxu0 0.0
        %2389 = vmatprep.subr.mxu0 0.0
        %2390 = vmatpush1.msra.mxu0 0.0
        %2391 = vmatprep.subr.mxu0 0.0
        %2392 = vmatpush1.msra.mxu0 0.0
        %2393 = vmatprep.subr.mxu0 0.0
        %2394 = vmatpush1.msra.mxu0 0.0
        %2395 = vmatprep.subr.mxu0 0.0
        %2396 = vmatpush1.msra.mxu0 0.0
        %2397 = vmatprep.subr.mxu0 0.0
        %2398 = vmatpush1.msra.mxu0 0.0
        %2399 = vmatprep.subr.mxu0 0.0
        %2400 = vmatpush1.msra.mxu0 0.0
        %2401 = vmatprep.mubr.f32.mxu0 0.0
        %v2402 = vand.u32 %v838, 4294901760
        %2403 = vmatmul.mubr.f32.gmra.mrb[0].mxu0 %v2402
        %v2404 = vpop.f32.mrb[0].mxu0
        %v2405 = vadd.f32 %v2038, %v2404
        %v2406 = vpop.f32.mrb[0].mxu0
        %2407 = vmatprep.mubr.f32.mxu0 0.0
        %v2408 = vand.u32 %v839, 4294901760
        %2409 = vmatmul.mubr.f32.gmra.mrb[0].mxu0 %v2408
        %v2410 = vpop.f32.mrb[0].mxu0
        %v2411 = vadd.f32 %v2046, %v2410
        %v2412 = vpop.f32.mrb[0].mxu0
        %2413 = vmatprep.mubr.f32.mxu0 0.0
        %v2414 = vand.u32 %v840, 4294901760
        %2415 = vmatmul.mubr.f32.gmra.mrb[0].mxu0 %v2414
        %v2416 = vpop.f32.mrb[0].mxu0
        %v2417 = vadd.f32 %v2054, %v2416
        %v2418 = vpop.f32.mrb[0].mxu0
        %2419 = vmatprep.mubr.f32.mxu0 0.0
        %v2420 = vand.u32 %v841, 4294901760
        %2421 = vmatmul.mubr.f32.gmra.mrb[0].mxu0 %v2420
        %v2422 = vpop.f32.mrb[0].mxu0
        %v2423 = vadd.f32 %v2062, %v2422
        %v2424 = vpop.f32.mrb[0].mxu0
        %2425 = vmatprep.mubr.f32.mxu0 0.0
        %v2426 = vand.u32 %v842, 4294901760
        %2427 = vmatmul.mubr.f32.gmra.mrb[0].mxu0 %v2426
        %v2428 = vpop.f32.mrb[0].mxu0
        %v2429 = vadd.f32 %v2070, %v2428
        %v2430 = vpop.f32.mrb[0].mxu0
        %2431 = vmatprep.mubr.f32.mxu0 0.0
        %v2432 = vand.u32 %v843, 4294901760
        %2433 = vmatmul.mubr.f32.gmra.mrb[0].mxu0 %v2432
        %v2434 = vpop.f32.mrb[0].mxu0
        %v2435 = vadd.f32 %v2078, %v2434
        %v2436 = vpop.f32.mrb[0].mxu0
        %2437 = vmatprep.mubr.f32.mxu0 0.0
        %v2438 = vand.u32 %v844, 4294901760
        %2439 = vmatmul.mubr.f32.gmra.mrb[0].mxu0 %v2438
        %v2440 = vpop.f32.mrb[0].mxu0
        %v2441 = vadd.f32 %v2086, %v2440
        %v2442 = vpop.f32.mrb[0].mxu0
        %2443 = vmatprep.mubr.f32.mxu0 0.0
        %v2444 = vand.u32 %v845, 4294901760
        %2445 = vmatmul.mubr.f32.gmra.mrb[0].mxu0 %v2444
        %v2446 = vpop.f32.mrb[0].mxu0
        %v2447 = vadd.f32 %v2094, %v2446
        %v2448 = vpop.f32.mrb[0].mxu0
        %2449 = vmatprep.mubr.f32.mxu0 0.0
        %v2450 = vand.u32 %v846, 4294901760
        %2451 = vmatmul.mubr.f32.gmra.mrb[0].mxu0 %v2450
        %v2452 = vpop.f32.mrb[0].mxu0
        %v2453 = vadd.f32 %v2102, %v2452
        %v2454 = vpop.f32.mrb[0].mxu0
        %2455 = vmatprep.mubr.f32.mxu0 0.0
        %v2456 = vand.u32 %v847, 4294901760
        %2457 = vmatmul.mubr.f32.gmra.mrb[0].mxu0 %v2456
        %v2458 = vpop.f32.mrb[0].mxu0
        %v2459 = vadd.f32 %v2110, %v2458
        %v2460 = vpop.f32.mrb[0].mxu0
        %2461 = vmatprep.mubr.f32.mxu0 0.0
        %v2462 = vand.u32 %v848, 4294901760
        %2463 = vmatmul.mubr.f32.gmra.mrb[0].mxu0 %v2462
        %v2464 = vpop.f32.mrb[0].mxu0
        %v2465 = vadd.f32 %v2118, %v2464
        %v2466 = vpop.f32.mrb[0].mxu0
        %2467 = vmatprep.mubr.f32.mxu0 0.0
        %v2468 = vand.u32 %v849, 4294901760
        %2469 = vmatmul.mubr.f32.gmra.mrb[0].mxu0 %v2468
        %v2470 = vpop.f32.mrb[0].mxu0
        %v2471 = vadd.f32 %v2126, %v2470
        %v2472 = vpop.f32.mrb[0].mxu0
        %2473 = vmatprep.mubr.f32.mxu0 0.0
        %v2474 = vand.u32 %v850, 4294901760
        %2475 = vmatmul.mubr.f32.gmra.mrb[0].mxu0 %v2474
        %v2476 = vpop.f32.mrb[0].mxu0
        %v2477 = vadd.f32 %v2134, %v2476
        %v2478 = vpop.f32.mrb[0].mxu0
        %2479 = vmatprep.mubr.f32.mxu0 0.0
        %v2480 = vand.u32 %v851, 4294901760
        %2481 = vmatmul.mubr.f32.gmra.mrb[0].mxu0 %v2480
        %v2482 = vpop.f32.mrb[0].mxu0
        %v2483 = vadd.f32 %v2142, %v2482
        %v2484 = vpop.f32.mrb[0].mxu0
        %2485 = vmatprep.mubr.f32.mxu0 0.0
        %v2486 = vand.u32 %v852, 4294901760
        %2487 = vmatmul.mubr.f32.gmra.mrb[0].mxu0 %v2486
        %v2488 = vpop.f32.mrb[0].mxu0
        %v2489 = vadd.f32 %v2150, %v2488
        %v2490 = vpop.f32.mrb[0].mxu0
        %2491 = vmatprep.mubr.f32.mxu0 0.0
        %v2492 = vand.u32 %v853, 4294901760
        %2493 = vmatmul.mubr.f32.gmra.mrb[0].mxu0 %v2492
        %v2494 = vpop.f32.mrb[0].mxu0
        %v2495 = vadd.f32 %v2158, %v2494
        %v2496 = vpop.f32.mrb[0].mxu0
        %2497 = vmatprep.mubr.f32.mxu0 0.0
        %v2498 = vand.u32 %v854, 4294901760
        %2499 = vmatmul.mubr.f32.gmra.mrb[0].mxu0 %v2498
        %v2500 = vpop.f32.mrb[0].mxu0
        %v2501 = vadd.f32 %v2166, %v2500
        %v2502 = vpop.f32.mrb[0].mxu0
        %2503 = vmatprep.mubr.f32.mxu0 0.0
        %v2504 = vand.u32 %v855, 4294901760
        %2505 = vmatmul.mubr.f32.gmra.mrb[0].mxu0 %v2504
        %v2506 = vpop.f32.mrb[0].mxu0
        %v2507 = vadd.f32 %v2174, %v2506
        %v2508 = vpop.f32.mrb[0].mxu0
        %2509 = vmatprep.mubr.f32.mxu0 0.0
        %v2510 = vand.u32 %v856, 4294901760
        %2511 = vmatmul.mubr.f32.gmra.mrb[0].mxu0 %v2510
        %v2512 = vpop.f32.mrb[0].mxu0
        %v2513 = vadd.f32 %v2182, %v2512
        %v2514 = vpop.f32.mrb[0].mxu0
        %2515 = vmatprep.mubr.f32.mxu0 0.0
        %v2516 = vand.u32 %v857, 4294901760
        %2517 = vmatmul.mubr.f32.gmra.mrb[0].mxu0 %v2516
        %v2518 = vpop.f32.mrb[0].mxu0
        %v2519 = vadd.f32 %v2190, %v2518
        %v2520 = vpop.f32.mrb[0].mxu0
        %2521 = vmatprep.mubr.f32.mxu0 0.0
        %v2522 = vand.u32 %v858, 4294901760
        %2523 = vmatmul.mubr.f32.gmra.mrb[0].mxu0 %v2522
        %v2524 = vpop.f32.mrb[0].mxu0
        %v2525 = vadd.f32 %v2198, %v2524
        %v2526 = vpop.f32.mrb[0].mxu0
        %2527 = vmatprep.mubr.f32.mxu0 0.0
        %v2528 = vand.u32 %v859, 4294901760
        %2529 = vmatmul.mubr.f32.gmra.mrb[0].mxu0 %v2528
        %v2530 = vpop.f32.mrb[0].mxu0
        %v2531 = vadd.f32 %v2206, %v2530
        %v2532 = vpop.f32.mrb[0].mxu0
        %2533 = vmatprep.mubr.f32.mxu0 0.0
        %v2534 = vand.u32 %v860, 4294901760
        %2535 = vmatmul.mubr.f32.gmra.mrb[0].mxu0 %v2534
        %v2536 = vpop.f32.mrb[0].mxu0
        %v2537 = vadd.f32 %v2214, %v2536
        %v2538 = vpop.f32.mrb[0].mxu0
        %2539 = vmatprep.mubr.f32.mxu0 0.0
        %v2540 = vand.u32 %v861, 4294901760
        %2541 = vmatmul.mubr.f32.gmra.mrb[0].mxu0 %v2540
        %v2542 = vpop.f32.mrb[0].mxu0
        %v2543 = vadd.f32 %v2222, %v2542
        %v2544 = vpop.f32.mrb[0].mxu0
        %2545 = vmatprep.mubr.f32.mxu0 0.0
        %v2546 = vand.u32 %v862, 4294901760
        %2547 = vmatmul.mubr.f32.gmra.mrb[0].mxu0 %v2546
        %v2548 = vpop.f32.mrb[0].mxu0
        %v2549 = vadd.f32 %v2230, %v2548
        %v2550 = vpop.f32.mrb[0].mxu0
        %2551 = vmatprep.mubr.f32.mxu0 0.0
        %v2552 = vand.u32 %v863, 4294901760
        %2553 = vmatmul.mubr.f32.gmra.mrb[0].mxu0 %v2552
        %v2554 = vpop.f32.mrb[0].mxu0
        %v2555 = vadd.f32 %v2238, %v2554
        %v2556 = vpop.f32.mrb[0].mxu0
        %2557 = vmatprep.mubr.f32.mxu0 0.0
        %v2558 = vand.u32 %v864, 4294901760
        %2559 = vmatmul.mubr.f32.gmra.mrb[0].mxu0 %v2558
        %v2560 = vpop.f32.mrb[0].mxu0
        %v2561 = vadd.f32 %v2246, %v2560
        %v2562 = vpop.f32.mrb[0].mxu0
        %2563 = vmatprep.mubr.f32.mxu0 0.0
        %v2564 = vand.u32 %v865, 4294901760
        %2565 = vmatmul.mubr.f32.gmra.mrb[0].mxu0 %v2564
        %v2566 = vpop.f32.mrb[0].mxu0
        %v2567 = vadd.f32 %v2254, %v2566
        %v2568 = vpop.f32.mrb[0].mxu0
        %2569 = vmatprep.mubr.f32.mxu0 0.0
        %v2570 = vand.u32 %v866, 4294901760
        %2571 = vmatmul.mubr.f32.gmra.mrb[0].mxu0 %v2570
        %v2572 = vpop.f32.mrb[0].mxu0
        %v2573 = vadd.f32 %v2262, %v2572
        %v2574 = vpop.f32.mrb[0].mxu0
        %2575 = vmatprep.mubr.f32.mxu0 0.0
        %v2576 = vand.u32 %v867, 4294901760
        %2577 = vmatmul.mubr.f32.gmra.mrb[0].mxu0 %v2576
        %v2578 = vpop.f32.mrb[0].mxu0
        %v2579 = vadd.f32 %v2270, %v2578
        %v2580 = vpop.f32.mrb[0].mxu0
        %2581 = vmatprep.mubr.f32.mxu0 0.0
        %v2582 = vand.u32 %v868, 4294901760
        %2583 = vmatmul.mubr.f32.gmra.mrb[0].mxu0 %v2582
        %v2584 = vpop.f32.mrb[0].mxu0
        %v2585 = vadd.f32 %v2278, %v2584
        %v2586 = vpop.f32.mrb[0].mxu0
        %2587 = vmatprep.mubr.f32.mxu0 0.0
        %v2588 = vand.u32 %v869, 4294901760
        %2589 = vmatmul.mubr.f32.gmra.mrb[0].mxu0 %v2588
        %v2590 = vpop.f32.mrb[0].mxu0
        %v2591 = vadd.f32 %v2286, %v2590
        %v2592 = vpop.f32.mrb[0].mxu0
        %2593 = vdwg.mxu0
        %2594 = vmatprep.subr.mxu0 0.0
        %v2595 = vand.u32 %v870, 4294901760
        %2596 = vmatpush1.msra.mxu0 %v2595
        %2597 = vmatprep.subr.mxu0 0.0
        %v2598 = vand.u32 %v871, 4294901760
        %2599 = vmatpush1.msra.mxu0 %v2598
        %2600 = vmatprep.subr.mxu0 0.0
        %v2601 = vand.u32 %v872, 4294901760
        %2602 = vmatpush1.msra.mxu0 %v2601
        %2603 = vmatprep.subr.mxu0 0.0
        %v2604 = vand.u32 %v873, 4294901760
        %2605 = vmatpush1.msra.mxu0 %v2604
        %2606 = vmatprep.subr.mxu0 0.0
        %v2607 = vand.u32 %v874, 4294901760
        %2608 = vmatpush1.msra.mxu0 %v2607
        %2609 = vmatprep.subr.mxu0 0.0
        %v2610 = vand.u32 %v875, 4294901760
        %2611 = vmatpush1.msra.mxu0 %v2610
        %2612 = vmatprep.subr.mxu0 0.0
        %v2613 = vand.u32 %v876, 4294901760
        %2614 = vmatpush1.msra.mxu0 %v2613
        %2615 = vmatprep.subr.mxu0 0.0
        %v2616 = vand.u32 %v877, 4294901760
        %2617 = vmatpush1.msra.mxu0 %v2616
        %2618 = vmatprep.subr.mxu0 0.0
        %v2619 = vand.u32 %v878, 4294901760
        %2620 = vmatpush1.msra.mxu0 %v2619
        %2621 = vmatprep.subr.mxu0 0.0
        %v2622 = vand.u32 %v879, 4294901760
        %2623 = vmatpush1.msra.mxu0 %v2622
        %2624 = vmatprep.subr.mxu0 0.0
        %v2625 = vand.u32 %v880, 4294901760
        %2626 = vmatpush1.msra.mxu0 %v2625
        %2627 = vmatprep.subr.mxu0 0.0
        %v2628 = vand.u32 %v881, 4294901760
        %2629 = vmatpush1.msra.mxu0 %v2628
        %2630 = vmatprep.subr.mxu0 0.0
        %v2631 = vand.u32 %v882, 4294901760
        %2632 = vmatpush1.msra.mxu0 %v2631
        %2633 = vmatprep.subr.mxu0 0.0
        %v2634 = vand.u32 %v883, 4294901760
        %2635 = vmatpush1.msra.mxu0 %v2634
        %2636 = vmatprep.subr.mxu0 0.0
        %v2637 = vand.u32 %v884, 4294901760
        %2638 = vmatpush1.msra.mxu0 %v2637
        %2639 = vmatprep.subr.mxu0 0.0
        %v2640 = vand.u32 %v885, 4294901760
        %2641 = vmatpush1.msra.mxu0 %v2640
        %2642 = vmatprep.subr.mxu0 0.0
        %2643 = vmatpush1.msra.mxu0 0.0
        %2644 = vmatprep.subr.mxu0 0.0
        %2645 = vmatpush1.msra.mxu0 0.0
        %2646 = vmatprep.subr.mxu0 0.0
        %2647 = vmatpush1.msra.mxu0 0.0
        %2648 = vmatprep.subr.mxu0 0.0
        %2649 = vmatpush1.msra.mxu0 0.0
        %2650 = vmatprep.subr.mxu0 0.0
        %2651 = vmatpush1.msra.mxu0 0.0
        %2652 = vmatprep.subr.mxu0 0.0
        %2653 = vmatpush1.msra.mxu0 0.0
        %2654 = vmatprep.subr.mxu0 0.0
        %2655 = vmatpush1.msra.mxu0 0.0
        %2656 = vmatprep.subr.mxu0 0.0
        %2657 = vmatpush1.msra.mxu0 0.0
        %2658 = vmatprep.subr.mxu0 0.0
        %2659 = vmatpush1.msra.mxu0 0.0
        %2660 = vmatprep.subr.mxu0 0.0
        %2661 = vmatpush1.msra.mxu0 0.0
        %2662 = vmatprep.subr.mxu0 0.0
        %2663 = vmatpush1.msra.mxu0 0.0
        %2664 = vmatprep.subr.mxu0 0.0
        %2665 = vmatpush1.msra.mxu0 0.0
        %2666 = vmatprep.subr.mxu0 0.0
        %2667 = vmatpush1.msra.mxu0 0.0
        %2668 = vmatprep.subr.mxu0 0.0
        %2669 = vmatpush1.msra.mxu0 0.0
        %2670 = vmatprep.subr.mxu0 0.0
        %2671 = vmatpush1.msra.mxu0 0.0
        %2672 = vmatprep.subr.mxu0 0.0
        %2673 = vmatpush1.msra.mxu0 0.0
        %2674 = vmatprep.mubr.f32.mxu0 0.0
        %v2675 = vand.u32 %v838, 4294901760
        %2676 = vmatmul.mubr.f32.gmra.mrb[0].mxu0 %v2675
        %v2677 = vpop.f32.mrb[0].mxu0
        %v2678 = vadd.f32 %v2405, %v2677
        %v2679 = vpop.f32.mrb[0].mxu0
        %2680 = vmatprep.mubr.f32.mxu0 0.0
        %v2681 = vand.u32 %v839, 4294901760
        %2682 = vmatmul.mubr.f32.gmra.mrb[0].mxu0 %v2681
        %v2683 = vpop.f32.mrb[0].mxu0
        %v2684 = vadd.f32 %v2411, %v2683
        %v2685 = vpop.f32.mrb[0].mxu0
        %2686 = vmatprep.mubr.f32.mxu0 0.0
        %v2687 = vand.u32 %v840, 4294901760
        %2688 = vmatmul.mubr.f32.gmra.mrb[0].mxu0 %v2687
        %v2689 = vpop.f32.mrb[0].mxu0
        %v2690 = vadd.f32 %v2417, %v2689
        %v2691 = vpop.f32.mrb[0].mxu0
        %2692 = vmatprep.mubr.f32.mxu0 0.0
        %v2693 = vand.u32 %v841, 4294901760
        %2694 = vmatmul.mubr.f32.gmra.mrb[0].mxu0 %v2693
        %v2695 = vpop.f32.mrb[0].mxu0
        %v2696 = vadd.f32 %v2423, %v2695
        %v2697 = vpop.f32.mrb[0].mxu0
        %2698 = vmatprep.mubr.f32.mxu0 0.0
        %v2699 = vand.u32 %v842, 4294901760
        %2700 = vmatmul.mubr.f32.gmra.mrb[0].mxu0 %v2699
        %v2701 = vpop.f32.mrb[0].mxu0
        %v2702 = vadd.f32 %v2429, %v2701
        %v2703 = vpop.f32.mrb[0].mxu0
        %2704 = vmatprep.mubr.f32.mxu0 0.0
        %v2705 = vand.u32 %v843, 4294901760
        %2706 = vmatmul.mubr.f32.gmra.mrb[0].mxu0 %v2705
        %v2707 = vpop.f32.mrb[0].mxu0
        %v2708 = vadd.f32 %v2435, %v2707
        %v2709 = vpop.f32.mrb[0].mxu0
        %2710 = vmatprep.mubr.f32.mxu0 0.0
        %v2711 = vand.u32 %v844, 4294901760
        %2712 = vmatmul.mubr.f32.gmra.mrb[0].mxu0 %v2711
        %v2713 = vpop.f32.mrb[0].mxu0
        %v2714 = vadd.f32 %v2441, %v2713
        %v2715 = vpop.f32.mrb[0].mxu0
        %2716 = vmatprep.mubr.f32.mxu0 0.0
        %v2717 = vand.u32 %v845, 4294901760
        %2718 = vmatmul.mubr.f32.gmra.mrb[0].mxu0 %v2717
        %v2719 = vpop.f32.mrb[0].mxu0
        %v2720 = vadd.f32 %v2447, %v2719
        %v2721 = vpop.f32.mrb[0].mxu0
        %2722 = vmatprep.mubr.f32.mxu0 0.0
        %v2723 = vand.u32 %v846, 4294901760
        %2724 = vmatmul.mubr.f32.gmra.mrb[0].mxu0 %v2723
        %v2725 = vpop.f32.mrb[0].mxu0
        %v2726 = vadd.f32 %v2453, %v2725
        %v2727 = vpop.f32.mrb[0].mxu0
        %2728 = vmatprep.mubr.f32.mxu0 0.0
        %v2729 = vand.u32 %v847, 4294901760
        %2730 = vmatmul.mubr.f32.gmra.mrb[0].mxu0 %v2729
        %v2731 = vpop.f32.mrb[0].mxu0
        %v2732 = vadd.f32 %v2459, %v2731
        %v2733 = vpop.f32.mrb[0].mxu0
        %2734 = vmatprep.mubr.f32.mxu0 0.0
        %v2735 = vand.u32 %v848, 4294901760
        %2736 = vmatmul.mubr.f32.gmra.mrb[0].mxu0 %v2735
        %v2737 = vpop.f32.mrb[0].mxu0
        %v2738 = vadd.f32 %v2465, %v2737
        %v2739 = vpop.f32.mrb[0].mxu0
        %2740 = vmatprep.mubr.f32.mxu0 0.0
        %v2741 = vand.u32 %v849, 4294901760
        %2742 = vmatmul.mubr.f32.gmra.mrb[0].mxu0 %v2741
        %v2743 = vpop.f32.mrb[0].mxu0
        %v2744 = vadd.f32 %v2471, %v2743
        %v2745 = vpop.f32.mrb[0].mxu0
        %2746 = vmatprep.mubr.f32.mxu0 0.0
        %v2747 = vand.u32 %v850, 4294901760
        %2748 = vmatmul.mubr.f32.gmra.mrb[0].mxu0 %v2747
        %v2749 = vpop.f32.mrb[0].mxu0
        %v2750 = vadd.f32 %v2477, %v2749
        %v2751 = vpop.f32.mrb[0].mxu0
        %2752 = vmatprep.mubr.f32.mxu0 0.0
        %v2753 = vand.u32 %v851, 4294901760
        %2754 = vmatmul.mubr.f32.gmra.mrb[0].mxu0 %v2753
        %v2755 = vpop.f32.mrb[0].mxu0
        %v2756 = vadd.f32 %v2483, %v2755
        %v2757 = vpop.f32.mrb[0].mxu0
        %2758 = vmatprep.mubr.f32.mxu0 0.0
        %v2759 = vand.u32 %v852, 4294901760
        %2760 = vmatmul.mubr.f32.gmra.mrb[0].mxu0 %v2759
        %v2761 = vpop.f32.mrb[0].mxu0
        %v2762 = vadd.f32 %v2489, %v2761
        %v2763 = vpop.f32.mrb[0].mxu0
        %2764 = vmatprep.mubr.f32.mxu0 0.0
        %v2765 = vand.u32 %v853, 4294901760
        %2766 = vmatmul.mubr.f32.gmra.mrb[0].mxu0 %v2765
        %v2767 = vpop.f32.mrb[0].mxu0
        %v2768 = vadd.f32 %v2495, %v2767
        %v2769 = vpop.f32.mrb[0].mxu0
        %2770 = vmatprep.mubr.f32.mxu0 0.0
        %v2771 = vand.u32 %v854, 4294901760
        %2772 = vmatmul.mubr.f32.gmra.mrb[0].mxu0 %v2771
        %v2773 = vpop.f32.mrb[0].mxu0
        %v2774 = vadd.f32 %v2501, %v2773
        %v2775 = vpop.f32.mrb[0].mxu0
        %2776 = vmatprep.mubr.f32.mxu0 0.0
        %v2777 = vand.u32 %v855, 4294901760
        %2778 = vmatmul.mubr.f32.gmra.mrb[0].mxu0 %v2777
        %v2779 = vpop.f32.mrb[0].mxu0
        %v2780 = vadd.f32 %v2507, %v2779
        %v2781 = vpop.f32.mrb[0].mxu0
        %2782 = vmatprep.mubr.f32.mxu0 0.0
        %v2783 = vand.u32 %v856, 4294901760
        %2784 = vmatmul.mubr.f32.gmra.mrb[0].mxu0 %v2783
        %v2785 = vpop.f32.mrb[0].mxu0
        %v2786 = vadd.f32 %v2513, %v2785
        %v2787 = vpop.f32.mrb[0].mxu0
        %2788 = vmatprep.mubr.f32.mxu0 0.0
        %v2789 = vand.u32 %v857, 4294901760
        %2790 = vmatmul.mubr.f32.gmra.mrb[0].mxu0 %v2789
        %v2791 = vpop.f32.mrb[0].mxu0
        %v2792 = vadd.f32 %v2519, %v2791
        %v2793 = vpop.f32.mrb[0].mxu0
        %2794 = vmatprep.mubr.f32.mxu0 0.0
        %v2795 = vand.u32 %v858, 4294901760
        %2796 = vmatmul.mubr.f32.gmra.mrb[0].mxu0 %v2795
        %v2797 = vpop.f32.mrb[0].mxu0
        %v2798 = vadd.f32 %v2525, %v2797
        %v2799 = vpop.f32.mrb[0].mxu0
        %2800 = vmatprep.mubr.f32.mxu0 0.0
        %v2801 = vand.u32 %v859, 4294901760
        %2802 = vmatmul.mubr.f32.gmra.mrb[0].mxu0 %v2801
        %v2803 = vpop.f32.mrb[0].mxu0
        %v2804 = vadd.f32 %v2531, %v2803
        %v2805 = vpop.f32.mrb[0].mxu0
        %2806 = vmatprep.mubr.f32.mxu0 0.0
        %v2807 = vand.u32 %v860, 4294901760
        %2808 = vmatmul.mubr.f32.gmra.mrb[0].mxu0 %v2807
        %v2809 = vpop.f32.mrb[0].mxu0
        %v2810 = vadd.f32 %v2537, %v2809
        %v2811 = vpop.f32.mrb[0].mxu0
        %2812 = vmatprep.mubr.f32.mxu0 0.0
        %v2813 = vand.u32 %v861, 4294901760
        %2814 = vmatmul.mubr.f32.gmra.mrb[0].mxu0 %v2813
        %v2815 = vpop.f32.mrb[0].mxu0
        %v2816 = vadd.f32 %v2543, %v2815
        %v2817 = vpop.f32.mrb[0].mxu0
        %2818 = vmatprep.mubr.f32.mxu0 0.0
        %v2819 = vand.u32 %v862, 4294901760
        %2820 = vmatmul.mubr.f32.gmra.mrb[0].mxu0 %v2819
        %v2821 = vpop.f32.mrb[0].mxu0
        %v2822 = vadd.f32 %v2549, %v2821
        %v2823 = vpop.f32.mrb[0].mxu0
        %2824 = vmatprep.mubr.f32.mxu0 0.0
        %v2825 = vand.u32 %v863, 4294901760
        %2826 = vmatmul.mubr.f32.gmra.mrb[0].mxu0 %v2825
        %v2827 = vpop.f32.mrb[0].mxu0
        %v2828 = vadd.f32 %v2555, %v2827
        %v2829 = vpop.f32.mrb[0].mxu0
        %2830 = vmatprep.mubr.f32.mxu0 0.0
        %v2831 = vand.u32 %v864, 4294901760
        %2832 = vmatmul.mubr.f32.gmra.mrb[0].mxu0 %v2831
        %v2833 = vpop.f32.mrb[0].mxu0
        %v2834 = vadd.f32 %v2561, %v2833
        %v2835 = vpop.f32.mrb[0].mxu0
        %2836 = vmatprep.mubr.f32.mxu0 0.0
        %v2837 = vand.u32 %v865, 4294901760
        %2838 = vmatmul.mubr.f32.gmra.mrb[0].mxu0 %v2837
        %v2839 = vpop.f32.mrb[0].mxu0
        %v2840 = vadd.f32 %v2567, %v2839
        %v2841 = vpop.f32.mrb[0].mxu0
        %2842 = vmatprep.mubr.f32.mxu0 0.0
        %v2843 = vand.u32 %v866, 4294901760
        %2844 = vmatmul.mubr.f32.gmra.mrb[0].mxu0 %v2843
        %v2845 = vpop.f32.mrb[0].mxu0
        %v2846 = vadd.f32 %v2573, %v2845
        %v2847 = vpop.f32.mrb[0].mxu0
        %2848 = vmatprep.mubr.f32.mxu0 0.0
        %v2849 = vand.u32 %v867, 4294901760
        %2850 = vmatmul.mubr.f32.gmra.mrb[0].mxu0 %v2849
        %v2851 = vpop.f32.mrb[0].mxu0
        %v2852 = vadd.f32 %v2579, %v2851
        %v2853 = vpop.f32.mrb[0].mxu0
        %2854 = vmatprep.mubr.f32.mxu0 0.0
        %v2855 = vand.u32 %v868, 4294901760
        %2856 = vmatmul.mubr.f32.gmra.mrb[0].mxu0 %v2855
        %v2857 = vpop.f32.mrb[0].mxu0
        %v2858 = vadd.f32 %v2585, %v2857
        %v2859 = vpop.f32.mrb[0].mxu0
        %2860 = vmatprep.mubr.f32.mxu0 0.0
        %v2861 = vand.u32 %v869, 4294901760
        %2862 = vmatmul.mubr.f32.gmra.mrb[0].mxu0 %v2861
        %v2863 = vpop.f32.mrb[0].mxu0
        %v2864 = vadd.f32 %v2591, %v2863
        %v2865 = vpop.f32.mrb[0].mxu0
        %2866 = vdwg.mxu0
        %v2867 = vld [vmem:[#allocation6] sm:$0xff]
        %v2868 = vld [vmem:[#allocation6 + $0x8] sm:$0xff]
        %v2869 = vld [vmem:[#allocation6 + $0x10] sm:$0xff]
        %v2870 = vld [vmem:[#allocation6 + $0x18] sm:$0xff]
        %v2871 = vld [vmem:[#allocation6 + $0x20] sm:$0xff]
        %v2872 = vld [vmem:[#allocation6 + $0x28] sm:$0xff]
        %v2873 = vld [vmem:[#allocation6 + $0x30] sm:$0xff]
        %v2874 = vld [vmem:[#allocation6 + $0x38] sm:$0xff]
        %v2875 = vld [vmem:[#allocation6 + $0x40] sm:$0xff]
        %v2876 = vld [vmem:[#allocation6 + $0x48] sm:$0xff]
        %v2877 = vld [vmem:[#allocation6 + $0x50] sm:$0xff]
        %v2878 = vld [vmem:[#allocation6 + $0x58] sm:$0xff]
        %v2879 = vld [vmem:[#allocation6 + $0x60] sm:$0xff]
        %v2880 = vld [vmem:[#allocation6 + $0x68] sm:$0xff]
        %v2881 = vld [vmem:[#allocation6 + $0x70] sm:$0xff]
        %v2882 = vld [vmem:[#allocation6 + $0x78] sm:$0xff]
        %v2883 = vld [vmem:[%s6] sm:$0x1]
        %v2885 = vlaneseq
        %v2886 = vshrl.u32 %v2885, 7
        %v2887 = vsub.s32 0, %v2886
        %v2888 = vrot.slane %v2883, %v2887
        %2890 = vmatprep.subr.mxu0 0.0
        %v2891 = vand.u32 %v2867, 4294901760
        %2892 = vmatpush1.msra.mxu0 %v2891
        %2893 = vmatprep.subr.mxu0 0.0
        %v2894 = vand.u32 %v2868, 4294901760
        %2895 = vmatpush1.msra.mxu0 %v2894
        %2896 = vmatprep.subr.mxu0 0.0
        %v2897 = vand.u32 %v2869, 4294901760
        %2898 = vmatpush1.msra.mxu0 %v2897
        %2899 = vmatprep.subr.mxu0 0.0
        %v2900 = vand.u32 %v2870, 4294901760
        %2901 = vmatpush1.msra.mxu0 %v2900
        %2902 = vmatprep.subr.mxu0 0.0
        %v2903 = vand.u32 %v2871, 4294901760
        %2904 = vmatpush1.msra.mxu0 %v2903
        %2905 = vmatprep.subr.mxu0 0.0
        %v2906 = vand.u32 %v2872, 4294901760
        %2907 = vmatpush1.msra.mxu0 %v2906
        %2908 = vmatprep.subr.mxu0 0.0
        %v2909 = vand.u32 %v2873, 4294901760
        %2910 = vmatpush1.msra.mxu0 %v2909
        %2911 = vmatprep.subr.mxu0 0.0
        %v2912 = vand.u32 %v2874, 4294901760
        %2913 = vmatpush1.msra.mxu0 %v2912
        %2914 = vmatprep.subr.mxu0 0.0
        %v2915 = vand.u32 %v2875, 4294901760
        %2916 = vmatpush1.msra.mxu0 %v2915
        %2917 = vmatprep.subr.mxu0 0.0
        %v2918 = vand.u32 %v2876, 4294901760
        %2919 = vmatpush1.msra.mxu0 %v2918
        %2920 = vmatprep.subr.mxu0 0.0
        %v2921 = vand.u32 %v2877, 4294901760
        %2922 = vmatpush1.msra.mxu0 %v2921
        %2923 = vmatprep.subr.mxu0 0.0
        %v2924 = vand.u32 %v2878, 4294901760
        %2925 = vmatpush1.msra.mxu0 %v2924
        %2926 = vmatprep.subr.mxu0 0.0
        %v2927 = vand.u32 %v2879, 4294901760
        %2928 = vmatpush1.msra.mxu0 %v2927
        %2929 = vmatprep.subr.mxu0 0.0
        %v2930 = vand.u32 %v2880, 4294901760
        %2931 = vmatpush1.msra.mxu0 %v2930
        %2932 = vmatprep.subr.mxu0 0.0
        %v2933 = vand.u32 %v2881, 4294901760
        %2934 = vmatpush1.msra.mxu0 %v2933
        %2935 = vmatprep.subr.mxu0 0.0
        %v2936 = vand.u32 %v2882, 4294901760
        %2937 = vmatpush1.msra.mxu0 %v2936
        %2938 = vmatprep.subr.mxu0 0.0
        %2939 = vmatpush1.msra.mxu0 0.0
        %2940 = vmatprep.subr.mxu0 0.0
        %2941 = vmatpush1.msra.mxu0 0.0
        %2942 = vmatprep.subr.mxu0 0.0
        %2943 = vmatpush1.msra.mxu0 0.0
        %2944 = vmatprep.subr.mxu0 0.0
        %2945 = vmatpush1.msra.mxu0 0.0
        %2946 = vmatprep.subr.mxu0 0.0
        %2947 = vmatpush1.msra.mxu0 0.0
        %2948 = vmatprep.subr.mxu0 0.0
        %2949 = vmatpush1.msra.mxu0 0.0
        %2950 = vmatprep.subr.mxu0 0.0
        %2951 = vmatpush1.msra.mxu0 0.0
        %2952 = vmatprep.subr.mxu0 0.0
        %2953 = vmatpush1.msra.mxu0 0.0
        %2954 = vmatprep.subr.mxu0 0.0
        %2955 = vmatpush1.msra.mxu0 0.0
        %2956 = vmatprep.subr.mxu0 0.0
        %2957 = vmatpush1.msra.mxu0 0.0
        %2958 = vmatprep.subr.mxu0 0.0
        %2959 = vmatpush1.msra.mxu0 0.0
        %2960 = vmatprep.subr.mxu0 0.0
        %2961 = vmatpush1.msra.mxu0 0.0
        %2962 = vmatprep.subr.mxu0 0.0
        %2963 = vmatpush1.msra.mxu0 0.0
        %2964 = vmatprep.subr.mxu0 0.0
        %2965 = vmatpush1.msra.mxu0 0.0
        %2966 = vmatprep.subr.mxu0 0.0
        %2967 = vmatpush1.msra.mxu0 0.0
        %2968 = vmatprep.subr.mxu0 0.0
        %2969 = vmatpush1.msra.mxu0 0.0
        %2970 = vmatprep.mubr.f32.mxu0 0.0
        %v2971 = vand.u32 %v838, 4294901760
        %v2972 = vsub.f32 %v838, %v2971
        %v2973 = vand.u32 %v2972, 4294901760
        %v2974 = vsub.f32 %v2972, %v2973
        %v2975 = vand.u32 %v2974, 4294901760
        %2976 = vmatmul.mubr.f32.gmra.mrb[0].mxu0 %v2975
        %v2977 = vpop.f32.mrb[0].mxu0
        %v2978 = vadd.f32 %v2888, %v2977
        %v2979 = vpop.f32.mrb[0].mxu0
        %2980 = vmatprep.mubr.f32.mxu0 0.0
        %v2981 = vand.u32 %v839, 4294901760
        %v2982 = vsub.f32 %v839, %v2981
        %v2983 = vand.u32 %v2982, 4294901760
        %v2984 = vsub.f32 %v2982, %v2983
        %v2985 = vand.u32 %v2984, 4294901760
        %2986 = vmatmul.mubr.f32.gmra.mrb[0].mxu0 %v2985
        %v2987 = vpop.f32.mrb[0].mxu0
        %v2988 = vadd.f32 %v2888, %v2987
        %v2989 = vpop.f32.mrb[0].mxu0
        %2990 = vmatprep.mubr.f32.mxu0 0.0
        %v2991 = vand.u32 %v840, 4294901760
        %v2992 = vsub.f32 %v840, %v2991
        %v2993 = vand.u32 %v2992, 4294901760
        %v2994 = vsub.f32 %v2992, %v2993
        %v2995 = vand.u32 %v2994, 4294901760
        %2996 = vmatmul.mubr.f32.gmra.mrb[0].mxu0 %v2995
        %v2997 = vpop.f32.mrb[0].mxu0
        %v2998 = vadd.f32 %v2888, %v2997
        %v2999 = vpop.f32.mrb[0].mxu0
        %3000 = vmatprep.mubr.f32.mxu0 0.0
        %v3001 = vand.u32 %v841, 4294901760
        %v3002 = vsub.f32 %v841, %v3001
        %v3003 = vand.u32 %v3002, 4294901760
        %v3004 = vsub.f32 %v3002, %v3003
        %v3005 = vand.u32 %v3004, 4294901760
        %3006 = vmatmul.mubr.f32.gmra.mrb[0].mxu0 %v3005
        %v3007 = vpop.f32.mrb[0].mxu0
        %v3008 = vadd.f32 %v2888, %v3007
        %v3009 = vpop.f32.mrb[0].mxu0
        %3010 = vmatprep.mubr.f32.mxu0 0.0
        %v3011 = vand.u32 %v842, 4294901760
        %v3012 = vsub.f32 %v842, %v3011
        %v3013 = vand.u32 %v3012, 4294901760
        %v3014 = vsub.f32 %v3012, %v3013
        %v3015 = vand.u32 %v3014, 4294901760
        %3016 = vmatmul.mubr.f32.gmra.mrb[0].mxu0 %v3015
        %v3017 = vpop.f32.mrb[0].mxu0
        %v3018 = vadd.f32 %v2888, %v3017
        %v3019 = vpop.f32.mrb[0].mxu0
        %3020 = vmatprep.mubr.f32.mxu0 0.0
        %v3021 = vand.u32 %v843, 4294901760
        %v3022 = vsub.f32 %v843, %v3021
        %v3023 = vand.u32 %v3022, 4294901760
        %v3024 = vsub.f32 %v3022, %v3023
        %v3025 = vand.u32 %v3024, 4294901760
        %3026 = vmatmul.mubr.f32.gmra.mrb[0].mxu0 %v3025
        %v3027 = vpop.f32.mrb[0].mxu0
        %v3028 = vadd.f32 %v2888, %v3027
        %v3029 = vpop.f32.mrb[0].mxu0
        %3030 = vmatprep.mubr.f32.mxu0 0.0
        %v3031 = vand.u32 %v844, 4294901760
        %v3032 = vsub.f32 %v844, %v3031
        %v3033 = vand.u32 %v3032, 4294901760
        %v3034 = vsub.f32 %v3032, %v3033
        %v3035 = vand.u32 %v3034, 4294901760
        %3036 = vmatmul.mubr.f32.gmra.mrb[0].mxu0 %v3035
        %v3037 = vpop.f32.mrb[0].mxu0
        %v3038 = vadd.f32 %v2888, %v3037
        %v3039 = vpop.f32.mrb[0].mxu0
        %3040 = vmatprep.mubr.f32.mxu0 0.0
        %v3041 = vand.u32 %v845, 4294901760
        %v3042 = vsub.f32 %v845, %v3041
        %v3043 = vand.u32 %v3042, 4294901760
        %v3044 = vsub.f32 %v3042, %v3043
        %v3045 = vand.u32 %v3044, 4294901760
        %3046 = vmatmul.mubr.f32.gmra.mrb[0].mxu0 %v3045
        %v3047 = vpop.f32.mrb[0].mxu0
        %v3048 = vadd.f32 %v2888, %v3047
        %v3049 = vpop.f32.mrb[0].mxu0
        %3050 = vmatprep.mubr.f32.mxu0 0.0
        %v3051 = vand.u32 %v846, 4294901760
        %v3052 = vsub.f32 %v846, %v3051
        %v3053 = vand.u32 %v3052, 4294901760
        %v3054 = vsub.f32 %v3052, %v3053
        %v3055 = vand.u32 %v3054, 4294901760
        %3056 = vmatmul.mubr.f32.gmra.mrb[0].mxu0 %v3055
        %v3057 = vpop.f32.mrb[0].mxu0
        %v3058 = vadd.f32 %v2888, %v3057
        %v3059 = vpop.f32.mrb[0].mxu0
        %3060 = vmatprep.mubr.f32.mxu0 0.0
        %v3061 = vand.u32 %v847, 4294901760
        %v3062 = vsub.f32 %v847, %v3061
        %v3063 = vand.u32 %v3062, 4294901760
        %v3064 = vsub.f32 %v3062, %v3063
        %v3065 = vand.u32 %v3064, 4294901760
        %3066 = vmatmul.mubr.f32.gmra.mrb[0].mxu0 %v3065
        %v3067 = vpop.f32.mrb[0].mxu0
        %v3068 = vadd.f32 %v2888, %v3067
        %v3069 = vpop.f32.mrb[0].mxu0
        %3070 = vmatprep.mubr.f32.mxu0 0.0
        %v3071 = vand.u32 %v848, 4294901760
        %v3072 = vsub.f32 %v848, %v3071
        %v3073 = vand.u32 %v3072, 4294901760
        %v3074 = vsub.f32 %v3072, %v3073
        %v3075 = vand.u32 %v3074, 4294901760
        %3076 = vmatmul.mubr.f32.gmra.mrb[0].mxu0 %v3075
        %v3077 = vpop.f32.mrb[0].mxu0
        %v3078 = vadd.f32 %v2888, %v3077
        %v3079 = vpop.f32.mrb[0].mxu0
        %3080 = vmatprep.mubr.f32.mxu0 0.0
        %v3081 = vand.u32 %v849, 4294901760
        %v3082 = vsub.f32 %v849, %v3081
        %v3083 = vand.u32 %v3082, 4294901760
        %v3084 = vsub.f32 %v3082, %v3083
        %v3085 = vand.u32 %v3084, 4294901760
        %3086 = vmatmul.mubr.f32.gmra.mrb[0].mxu0 %v3085
        %v3087 = vpop.f32.mrb[0].mxu0
        %v3088 = vadd.f32 %v2888, %v3087
        %v3089 = vpop.f32.mrb[0].mxu0
        %3090 = vmatprep.mubr.f32.mxu0 0.0
        %v3091 = vand.u32 %v850, 4294901760
        %v3092 = vsub.f32 %v850, %v3091
        %v3093 = vand.u32 %v3092, 4294901760
        %v3094 = vsub.f32 %v3092, %v3093
        %v3095 = vand.u32 %v3094, 4294901760
        %3096 = vmatmul.mubr.f32.gmra.mrb[0].mxu0 %v3095
        %v3097 = vpop.f32.mrb[0].mxu0
        %v3098 = vadd.f32 %v2888, %v3097
        %v3099 = vpop.f32.mrb[0].mxu0
        %3100 = vmatprep.mubr.f32.mxu0 0.0
        %v3101 = vand.u32 %v851, 4294901760
        %v3102 = vsub.f32 %v851, %v3101
        %v3103 = vand.u32 %v3102, 4294901760
        %v3104 = vsub.f32 %v3102, %v3103
        %v3105 = vand.u32 %v3104, 4294901760
        %3106 = vmatmul.mubr.f32.gmra.mrb[0].mxu0 %v3105
        %v3107 = vpop.f32.mrb[0].mxu0
        %v3108 = vadd.f32 %v2888, %v3107
        %v3109 = vpop.f32.mrb[0].mxu0
        %3110 = vmatprep.mubr.f32.mxu0 0.0
        %v3111 = vand.u32 %v852, 4294901760
        %v3112 = vsub.f32 %v852, %v3111
        %v3113 = vand.u32 %v3112, 4294901760
        %v3114 = vsub.f32 %v3112, %v3113
        %v3115 = vand.u32 %v3114, 4294901760
        %3116 = vmatmul.mubr.f32.gmra.mrb[0].mxu0 %v3115
        %v3117 = vpop.f32.mrb[0].mxu0
        %v3118 = vadd.f32 %v2888, %v3117
        %v3119 = vpop.f32.mrb[0].mxu0
        %3120 = vmatprep.mubr.f32.mxu0 0.0
        %v3121 = vand.u32 %v853, 4294901760
        %v3122 = vsub.f32 %v853, %v3121
        %v3123 = vand.u32 %v3122, 4294901760
        %v3124 = vsub.f32 %v3122, %v3123
        %v3125 = vand.u32 %v3124, 4294901760
        %3126 = vmatmul.mubr.f32.gmra.mrb[0].mxu0 %v3125
        %v3127 = vpop.f32.mrb[0].mxu0
        %v3128 = vadd.f32 %v2888, %v3127
        %v3129 = vpop.f32.mrb[0].mxu0
        %3130 = vmatprep.mubr.f32.mxu0 0.0
        %v3131 = vand.u32 %v854, 4294901760
        %v3132 = vsub.f32 %v854, %v3131
        %v3133 = vand.u32 %v3132, 4294901760
        %v3134 = vsub.f32 %v3132, %v3133
        %v3135 = vand.u32 %v3134, 4294901760
        %3136 = vmatmul.mubr.f32.gmra.mrb[0].mxu0 %v3135
        %v3137 = vpop.f32.mrb[0].mxu0
        %v3138 = vadd.f32 %v2888, %v3137
        %v3139 = vpop.f32.mrb[0].mxu0
        %3140 = vmatprep.mubr.f32.mxu0 0.0
        %v3141 = vand.u32 %v855, 4294901760
        %v3142 = vsub.f32 %v855, %v3141
        %v3143 = vand.u32 %v3142, 4294901760
        %v3144 = vsub.f32 %v3142, %v3143
        %v3145 = vand.u32 %v3144, 4294901760
        %3146 = vmatmul.mubr.f32.gmra.mrb[0].mxu0 %v3145
        %v3147 = vpop.f32.mrb[0].mxu0
        %v3148 = vadd.f32 %v2888, %v3147
        %v3149 = vpop.f32.mrb[0].mxu0
        %3150 = vmatprep.mubr.f32.mxu0 0.0
        %v3151 = vand.u32 %v856, 4294901760
        %v3152 = vsub.f32 %v856, %v3151
        %v3153 = vand.u32 %v3152, 4294901760
        %v3154 = vsub.f32 %v3152, %v3153
        %v3155 = vand.u32 %v3154, 4294901760
        %3156 = vmatmul.mubr.f32.gmra.mrb[0].mxu0 %v3155
        %v3157 = vpop.f32.mrb[0].mxu0
        %v3158 = vadd.f32 %v2888, %v3157
        %v3159 = vpop.f32.mrb[0].mxu0
        %3160 = vmatprep.mubr.f32.mxu0 0.0
        %v3161 = vand.u32 %v857, 4294901760
        %v3162 = vsub.f32 %v857, %v3161
        %v3163 = vand.u32 %v3162, 4294901760
        %v3164 = vsub.f32 %v3162, %v3163
        %v3165 = vand.u32 %v3164, 4294901760
        %3166 = vmatmul.mubr.f32.gmra.mrb[0].mxu0 %v3165
        %v3167 = vpop.f32.mrb[0].mxu0
        %v3168 = vadd.f32 %v2888, %v3167
        %v3169 = vpop.f32.mrb[0].mxu0
        %3170 = vmatprep.mubr.f32.mxu0 0.0
        %v3171 = vand.u32 %v858, 4294901760
        %v3172 = vsub.f32 %v858, %v3171
        %v3173 = vand.u32 %v3172, 4294901760
        %v3174 = vsub.f32 %v3172, %v3173
        %v3175 = vand.u32 %v3174, 4294901760
        %3176 = vmatmul.mubr.f32.gmra.mrb[0].mxu0 %v3175
        %v3177 = vpop.f32.mrb[0].mxu0
        %v3178 = vadd.f32 %v2888, %v3177
        %v3179 = vpop.f32.mrb[0].mxu0
        %3180 = vmatprep.mubr.f32.mxu0 0.0
        %v3181 = vand.u32 %v859, 4294901760
        %v3182 = vsub.f32 %v859, %v3181
        %v3183 = vand.u32 %v3182, 4294901760
        %v3184 = vsub.f32 %v3182, %v3183
        %v3185 = vand.u32 %v3184, 4294901760
        %3186 = vmatmul.mubr.f32.gmra.mrb[0].mxu0 %v3185
        %v3187 = vpop.f32.mrb[0].mxu0
        %v3188 = vadd.f32 %v2888, %v3187
        %v3189 = vpop.f32.mrb[0].mxu0
        %3190 = vmatprep.mubr.f32.mxu0 0.0
        %v3191 = vand.u32 %v860, 4294901760
        %v3192 = vsub.f32 %v860, %v3191
        %v3193 = vand.u32 %v3192, 4294901760
        %v3194 = vsub.f32 %v3192, %v3193
        %v3195 = vand.u32 %v3194, 4294901760
        %3196 = vmatmul.mubr.f32.gmra.mrb[0].mxu0 %v3195
        %v3197 = vpop.f32.mrb[0].mxu0
        %v3198 = vadd.f32 %v2888, %v3197
        %v3199 = vpop.f32.mrb[0].mxu0
        %3200 = vmatprep.mubr.f32.mxu0 0.0
        %v3201 = vand.u32 %v861, 4294901760
        %v3202 = vsub.f32 %v861, %v3201
        %v3203 = vand.u32 %v3202, 4294901760
        %v3204 = vsub.f32 %v3202, %v3203
        %v3205 = vand.u32 %v3204, 4294901760
        %3206 = vmatmul.mubr.f32.gmra.mrb[0].mxu0 %v3205
        %v3207 = vpop.f32.mrb[0].mxu0
        %v3208 = vadd.f32 %v2888, %v3207
        %v3209 = vpop.f32.mrb[0].mxu0
        %3210 = vmatprep.mubr.f32.mxu0 0.0
        %v3211 = vand.u32 %v862, 4294901760
        %v3212 = vsub.f32 %v862, %v3211
        %v3213 = vand.u32 %v3212, 4294901760
        %v3214 = vsub.f32 %v3212, %v3213
        %v3215 = vand.u32 %v3214, 4294901760
        %3216 = vmatmul.mubr.f32.gmra.mrb[0].mxu0 %v3215
        %v3217 = vpop.f32.mrb[0].mxu0
        %v3218 = vadd.f32 %v2888, %v3217
        %v3219 = vpop.f32.mrb[0].mxu0
        %3220 = vmatprep.mubr.f32.mxu0 0.0
        %v3221 = vand.u32 %v863, 4294901760
        %v3222 = vsub.f32 %v863, %v3221
        %v3223 = vand.u32 %v3222, 4294901760
        %v3224 = vsub.f32 %v3222, %v3223
        %v3225 = vand.u32 %v3224, 4294901760
        %3226 = vmatmul.mubr.f32.gmra.mrb[0].mxu0 %v3225
        %v3227 = vpop.f32.mrb[0].mxu0
        %v3228 = vadd.f32 %v2888, %v3227
        %v3229 = vpop.f32.mrb[0].mxu0
        %3230 = vmatprep.mubr.f32.mxu0 0.0
        %v3231 = vand.u32 %v864, 4294901760
        %v3232 = vsub.f32 %v864, %v3231
        %v3233 = vand.u32 %v3232, 4294901760
        %v3234 = vsub.f32 %v3232, %v3233
        %v3235 = vand.u32 %v3234, 4294901760
        %3236 = vmatmul.mubr.f32.gmra.mrb[0].mxu0 %v3235
        %v3237 = vpop.f32.mrb[0].mxu0
        %v3238 = vadd.f32 %v2888, %v3237
        %v3239 = vpop.f32.mrb[0].mxu0
        %3240 = vmatprep.mubr.f32.mxu0 0.0
        %v3241 = vand.u32 %v865, 4294901760
        %v3242 = vsub.f32 %v865, %v3241
        %v3243 = vand.u32 %v3242, 4294901760
        %v3244 = vsub.f32 %v3242, %v3243
        %v3245 = vand.u32 %v3244, 4294901760
        %3246 = vmatmul.mubr.f32.gmra.mrb[0].mxu0 %v3245
        %v3247 = vpop.f32.mrb[0].mxu0
        %v3248 = vadd.f32 %v2888, %v3247
        %v3249 = vpop.f32.mrb[0].mxu0
        %3250 = vmatprep.mubr.f32.mxu0 0.0
        %v3251 = vand.u32 %v866, 4294901760
        %v3252 = vsub.f32 %v866, %v3251
        %v3253 = vand.u32 %v3252, 4294901760
        %v3254 = vsub.f32 %v3252, %v3253
        %v3255 = vand.u32 %v3254, 4294901760
        %3256 = vmatmul.mubr.f32.gmra.mrb[0].mxu0 %v3255
        %v3257 = vpop.f32.mrb[0].mxu0
        %v3258 = vadd.f32 %v2888, %v3257
        %v3259 = vpop.f32.mrb[0].mxu0
        %3260 = vmatprep.mubr.f32.mxu0 0.0
        %v3261 = vand.u32 %v867, 4294901760
        %v3262 = vsub.f32 %v867, %v3261
        %v3263 = vand.u32 %v3262, 4294901760
        %v3264 = vsub.f32 %v3262, %v3263
        %v3265 = vand.u32 %v3264, 4294901760
        %3266 = vmatmul.mubr.f32.gmra.mrb[0].mxu0 %v3265
        %v3267 = vpop.f32.mrb[0].mxu0
        %v3268 = vadd.f32 %v2888, %v3267
        %v3269 = vpop.f32.mrb[0].mxu0
        %3270 = vmatprep.mubr.f32.mxu0 0.0
        %v3271 = vand.u32 %v868, 4294901760
        %v3272 = vsub.f32 %v868, %v3271
        %v3273 = vand.u32 %v3272, 4294901760
        %v3274 = vsub.f32 %v3272, %v3273
        %v3275 = vand.u32 %v3274, 4294901760
        %3276 = vmatmul.mubr.f32.gmra.mrb[0].mxu0 %v3275
        %v3277 = vpop.f32.mrb[0].mxu0
        %v3278 = vadd.f32 %v2888, %v3277
        %v3279 = vpop.f32.mrb[0].mxu0
        %3280 = vmatprep.mubr.f32.mxu0 0.0
        %v3281 = vand.u32 %v869, 4294901760
        %v3282 = vsub.f32 %v869, %v3281
        %v3283 = vand.u32 %v3282, 4294901760
        %v3284 = vsub.f32 %v3282, %v3283
        %v3285 = vand.u32 %v3284, 4294901760
        %3286 = vmatmul.mubr.f32.gmra.mrb[0].mxu0 %v3285
        %v3287 = vpop.f32.mrb[0].mxu0
        %v3288 = vadd.f32 %v2888, %v3287
        %v3289 = vpop.f32.mrb[0].mxu0
        %3290 = vdwg.mxu0
        %3291 = vmatprep.subr.mxu0 0.0
        %v3292 = vand.u32 %v2867, 4294901760
        %v3293 = vsub.f32 %v2867, %v3292
        %v3294 = vand.u32 %v3293, 4294901760
        %v3295 = vsub.f32 %v3293, %v3294
        %v3296 = vand.u32 %v3295, 4294901760
        %3297 = vmatpush1.msra.mxu0 %v3296
        %3298 = vmatprep.subr.mxu0 0.0
        %v3299 = vand.u32 %v2868, 4294901760
        %v3300 = vsub.f32 %v2868, %v3299
        %v3301 = vand.u32 %v3300, 4294901760
        %v3302 = vsub.f32 %v3300, %v3301
        %v3303 = vand.u32 %v3302, 4294901760
        %3304 = vmatpush1.msra.mxu0 %v3303
        %3305 = vmatprep.subr.mxu0 0.0
        %v3306 = vand.u32 %v2869, 4294901760
        %v3307 = vsub.f32 %v2869, %v3306
        %v3308 = vand.u32 %v3307, 4294901760
        %v3309 = vsub.f32 %v3307, %v3308
        %v3310 = vand.u32 %v3309, 4294901760
        %3311 = vmatpush1.msra.mxu0 %v3310
        %3312 = vmatprep.subr.mxu0 0.0
        %v3313 = vand.u32 %v2870, 4294901760
        %v3314 = vsub.f32 %v2870, %v3313
        %v3315 = vand.u32 %v3314, 4294901760
        %v3316 = vsub.f32 %v3314, %v3315
        %v3317 = vand.u32 %v3316, 4294901760
        %3318 = vmatpush1.msra.mxu0 %v3317
        %3319 = vmatprep.subr.mxu0 0.0
        %v3320 = vand.u32 %v2871, 4294901760
        %v3321 = vsub.f32 %v2871, %v3320
        %v3322 = vand.u32 %v3321, 4294901760
        %v3323 = vsub.f32 %v3321, %v3322
        %v3324 = vand.u32 %v3323, 4294901760
        %3325 = vmatpush1.msra.mxu0 %v3324
        %3326 = vmatprep.subr.mxu0 0.0
        %v3327 = vand.u32 %v2872, 4294901760
        %v3328 = vsub.f32 %v2872, %v3327
        %v3329 = vand.u32 %v3328, 4294901760
        %v3330 = vsub.f32 %v3328, %v3329
        %v3331 = vand.u32 %v3330, 4294901760
        %3332 = vmatpush1.msra.mxu0 %v3331
        %3333 = vmatprep.subr.mxu0 0.0
        %v3334 = vand.u32 %v2873, 4294901760
        %v3335 = vsub.f32 %v2873, %v3334
        %v3336 = vand.u32 %v3335, 4294901760
        %v3337 = vsub.f32 %v3335, %v3336
        %v3338 = vand.u32 %v3337, 4294901760
        %3339 = vmatpush1.msra.mxu0 %v3338
        %3340 = vmatprep.subr.mxu0 0.0
        %v3341 = vand.u32 %v2874, 4294901760
        %v3342 = vsub.f32 %v2874, %v3341
        %v3343 = vand.u32 %v3342, 4294901760
        %v3344 = vsub.f32 %v3342, %v3343
        %v3345 = vand.u32 %v3344, 4294901760
        %3346 = vmatpush1.msra.mxu0 %v3345
        %3347 = vmatprep.subr.mxu0 0.0
        %v3348 = vand.u32 %v2875, 4294901760
        %v3349 = vsub.f32 %v2875, %v3348
        %v3350 = vand.u32 %v3349, 4294901760
        %v3351 = vsub.f32 %v3349, %v3350
        %v3352 = vand.u32 %v3351, 4294901760
        %3353 = vmatpush1.msra.mxu0 %v3352
        %3354 = vmatprep.subr.mxu0 0.0
        %v3355 = vand.u32 %v2876, 4294901760
        %v3356 = vsub.f32 %v2876, %v3355
        %v3357 = vand.u32 %v3356, 4294901760
        %v3358 = vsub.f32 %v3356, %v3357
        %v3359 = vand.u32 %v3358, 4294901760
        %3360 = vmatpush1.msra.mxu0 %v3359
        %3361 = vmatprep.subr.mxu0 0.0
        %v3362 = vand.u32 %v2877, 4294901760
        %v3363 = vsub.f32 %v2877, %v3362
        %v3364 = vand.u32 %v3363, 4294901760
        %v3365 = vsub.f32 %v3363, %v3364
        %v3366 = vand.u32 %v3365, 4294901760
        %3367 = vmatpush1.msra.mxu0 %v3366
        %3368 = vmatprep.subr.mxu0 0.0
        %v3369 = vand.u32 %v2878, 4294901760
        %v3370 = vsub.f32 %v2878, %v3369
        %v3371 = vand.u32 %v3370, 4294901760
        %v3372 = vsub.f32 %v3370, %v3371
        %v3373 = vand.u32 %v3372, 4294901760
        %3374 = vmatpush1.msra.mxu0 %v3373
        %3375 = vmatprep.subr.mxu0 0.0
        %v3376 = vand.u32 %v2879, 4294901760
        %v3377 = vsub.f32 %v2879, %v3376
        %v3378 = vand.u32 %v3377, 4294901760
        %v3379 = vsub.f32 %v3377, %v3378
        %v3380 = vand.u32 %v3379, 4294901760
        %3381 = vmatpush1.msra.mxu0 %v3380
        %3382 = vmatprep.subr.mxu0 0.0
        %v3383 = vand.u32 %v2880, 4294901760
        %v3384 = vsub.f32 %v2880, %v3383
        %v3385 = vand.u32 %v3384, 4294901760
        %v3386 = vsub.f32 %v3384, %v3385
        %v3387 = vand.u32 %v3386, 4294901760
        %3388 = vmatpush1.msra.mxu0 %v3387
        %3389 = vmatprep.subr.mxu0 0.0
        %v3390 = vand.u32 %v2881, 4294901760
        %v3391 = vsub.f32 %v2881, %v3390
        %v3392 = vand.u32 %v3391, 4294901760
        %v3393 = vsub.f32 %v3391, %v3392
        %v3394 = vand.u32 %v3393, 4294901760
        %3395 = vmatpush1.msra.mxu0 %v3394
        %3396 = vmatprep.subr.mxu0 0.0
        %v3397 = vand.u32 %v2882, 4294901760
        %v3398 = vsub.f32 %v2882, %v3397
        %v3399 = vand.u32 %v3398, 4294901760
        %v3400 = vsub.f32 %v3398, %v3399
        %v3401 = vand.u32 %v3400, 4294901760
        %3402 = vmatpush1.msra.mxu0 %v3401
        %3403 = vmatprep.subr.mxu0 0.0
        %3404 = vmatpush1.msra.mxu0 0.0
        %3405 = vmatprep.subr.mxu0 0.0
        %3406 = vmatpush1.msra.mxu0 0.0
        %3407 = vmatprep.subr.mxu0 0.0
        %3408 = vmatpush1.msra.mxu0 0.0
        %3409 = vmatprep.subr.mxu0 0.0
        %3410 = vmatpush1.msra.mxu0 0.0
        %3411 = vmatprep.subr.mxu0 0.0
        %3412 = vmatpush1.msra.mxu0 0.0
        %3413 = vmatprep.subr.mxu0 0.0
        %3414 = vmatpush1.msra.mxu0 0.0
        %3415 = vmatprep.subr.mxu0 0.0
        %3416 = vmatpush1.msra.mxu0 0.0
        %3417 = vmatprep.subr.mxu0 0.0
        %3418 = vmatpush1.msra.mxu0 0.0
        %3419 = vmatprep.subr.mxu0 0.0
        %3420 = vmatpush1.msra.mxu0 0.0
        %3421 = vmatprep.subr.mxu0 0.0
        %3422 = vmatpush1.msra.mxu0 0.0
        %3423 = vmatprep.subr.mxu0 0.0
        %3424 = vmatpush1.msra.mxu0 0.0
        %3425 = vmatprep.subr.mxu0 0.0
        %3426 = vmatpush1.msra.mxu0 0.0
        %3427 = vmatprep.subr.mxu0 0.0
        %3428 = vmatpush1.msra.mxu0 0.0
        %3429 = vmatprep.subr.mxu0 0.0
        %3430 = vmatpush1.msra.mxu0 0.0
        %3431 = vmatprep.subr.mxu0 0.0
        %3432 = vmatpush1.msra.mxu0 0.0
        %3433 = vmatprep.subr.mxu0 0.0
        %3434 = vmatpush1.msra.mxu0 0.0
        %3435 = vmatprep.mubr.f32.mxu0 0.0
        %v3436 = vand.u32 %v838, 4294901760
        %3437 = vmatmul.mubr.f32.gmra.mrb[0].mxu0 %v3436
        %v3438 = vpop.f32.mrb[0].mxu0
        %v3439 = vadd.f32 %v2978, %v3438
        %v3440 = vpop.f32.mrb[0].mxu0
        %3441 = vmatprep.mubr.f32.mxu0 0.0
        %v3442 = vand.u32 %v839, 4294901760
        %3443 = vmatmul.mubr.f32.gmra.mrb[0].mxu0 %v3442
        %v3444 = vpop.f32.mrb[0].mxu0
        %v3445 = vadd.f32 %v2988, %v3444
        %v3446 = vpop.f32.mrb[0].mxu0
        %3447 = vmatprep.mubr.f32.mxu0 0.0
        %v3448 = vand.u32 %v840, 4294901760
        %3449 = vmatmul.mubr.f32.gmra.mrb[0].mxu0 %v3448
        %v3450 = vpop.f32.mrb[0].mxu0
        %v3451 = vadd.f32 %v2998, %v3450
        %v3452 = vpop.f32.mrb[0].mxu0
        %3453 = vmatprep.mubr.f32.mxu0 0.0
        %v3454 = vand.u32 %v841, 4294901760
        %3455 = vmatmul.mubr.f32.gmra.mrb[0].mxu0 %v3454
        %v3456 = vpop.f32.mrb[0].mxu0
        %v3457 = vadd.f32 %v3008, %v3456
        %v3458 = vpop.f32.mrb[0].mxu0
        %3459 = vmatprep.mubr.f32.mxu0 0.0
        %v3460 = vand.u32 %v842, 4294901760
        %3461 = vmatmul.mubr.f32.gmra.mrb[0].mxu0 %v3460
        %v3462 = vpop.f32.mrb[0].mxu0
        %v3463 = vadd.f32 %v3018, %v3462
        %v3464 = vpop.f32.mrb[0].mxu0
        %3465 = vmatprep.mubr.f32.mxu0 0.0
        %v3466 = vand.u32 %v843, 4294901760
        %3467 = vmatmul.mubr.f32.gmra.mrb[0].mxu0 %v3466
        %v3468 = vpop.f32.mrb[0].mxu0
        %v3469 = vadd.f32 %v3028, %v3468
        %v3470 = vpop.f32.mrb[0].mxu0
        %3471 = vmatprep.mubr.f32.mxu0 0.0
        %v3472 = vand.u32 %v844, 4294901760
        %3473 = vmatmul.mubr.f32.gmra.mrb[0].mxu0 %v3472
        %v3474 = vpop.f32.mrb[0].mxu0
        %v3475 = vadd.f32 %v3038, %v3474
        %v3476 = vpop.f32.mrb[0].mxu0
        %3477 = vmatprep.mubr.f32.mxu0 0.0
        %v3478 = vand.u32 %v845, 4294901760
        %3479 = vmatmul.mubr.f32.gmra.mrb[0].mxu0 %v3478
        %v3480 = vpop.f32.mrb[0].mxu0
        %v3481 = vadd.f32 %v3048, %v3480
        %v3482 = vpop.f32.mrb[0].mxu0
        %3483 = vmatprep.mubr.f32.mxu0 0.0
        %v3484 = vand.u32 %v846, 4294901760
        %3485 = vmatmul.mubr.f32.gmra.mrb[0].mxu0 %v3484
        %v3486 = vpop.f32.mrb[0].mxu0
        %v3487 = vadd.f32 %v3058, %v3486
        %v3488 = vpop.f32.mrb[0].mxu0
        %3489 = vmatprep.mubr.f32.mxu0 0.0
        %v3490 = vand.u32 %v847, 4294901760
        %3491 = vmatmul.mubr.f32.gmra.mrb[0].mxu0 %v3490
        %v3492 = vpop.f32.mrb[0].mxu0
        %v3493 = vadd.f32 %v3068, %v3492
        %v3494 = vpop.f32.mrb[0].mxu0
        %3495 = vmatprep.mubr.f32.mxu0 0.0
        %v3496 = vand.u32 %v848, 4294901760
        %3497 = vmatmul.mubr.f32.gmra.mrb[0].mxu0 %v3496
        %v3498 = vpop.f32.mrb[0].mxu0
        %v3499 = vadd.f32 %v3078, %v3498
        %v3500 = vpop.f32.mrb[0].mxu0
        %3501 = vmatprep.mubr.f32.mxu0 0.0
        %v3502 = vand.u32 %v849, 4294901760
        %3503 = vmatmul.mubr.f32.gmra.mrb[0].mxu0 %v3502
        %v3504 = vpop.f32.mrb[0].mxu0
        %v3505 = vadd.f32 %v3088, %v3504
        %v3506 = vpop.f32.mrb[0].mxu0
        %3507 = vmatprep.mubr.f32.mxu0 0.0
        %v3508 = vand.u32 %v850, 4294901760
        %3509 = vmatmul.mubr.f32.gmra.mrb[0].mxu0 %v3508
        %v3510 = vpop.f32.mrb[0].mxu0
        %v3511 = vadd.f32 %v3098, %v3510
        %v3512 = vpop.f32.mrb[0].mxu0
        %3513 = vmatprep.mubr.f32.mxu0 0.0
        %v3514 = vand.u32 %v851, 4294901760
        %3515 = vmatmul.mubr.f32.gmra.mrb[0].mxu0 %v3514
        %v3516 = vpop.f32.mrb[0].mxu0
        %v3517 = vadd.f32 %v3108, %v3516
        %v3518 = vpop.f32.mrb[0].mxu0
        %3519 = vmatprep.mubr.f32.mxu0 0.0
        %v3520 = vand.u32 %v852, 4294901760
        %3521 = vmatmul.mubr.f32.gmra.mrb[0].mxu0 %v3520
        %v3522 = vpop.f32.mrb[0].mxu0
        %v3523 = vadd.f32 %v3118, %v3522
        %v3524 = vpop.f32.mrb[0].mxu0
        %3525 = vmatprep.mubr.f32.mxu0 0.0
        %v3526 = vand.u32 %v853, 4294901760
        %3527 = vmatmul.mubr.f32.gmra.mrb[0].mxu0 %v3526
        %v3528 = vpop.f32.mrb[0].mxu0
        %v3529 = vadd.f32 %v3128, %v3528
        %v3530 = vpop.f32.mrb[0].mxu0
        %3531 = vmatprep.mubr.f32.mxu0 0.0
        %v3532 = vand.u32 %v854, 4294901760
        %3533 = vmatmul.mubr.f32.gmra.mrb[0].mxu0 %v3532
        %v3534 = vpop.f32.mrb[0].mxu0
        %v3535 = vadd.f32 %v3138, %v3534
        %v3536 = vpop.f32.mrb[0].mxu0
        %3537 = vmatprep.mubr.f32.mxu0 0.0
        %v3538 = vand.u32 %v855, 4294901760
        %3539 = vmatmul.mubr.f32.gmra.mrb[0].mxu0 %v3538
        %v3540 = vpop.f32.mrb[0].mxu0
        %v3541 = vadd.f32 %v3148, %v3540
        %v3542 = vpop.f32.mrb[0].mxu0
        %3543 = vmatprep.mubr.f32.mxu0 0.0
        %v3544 = vand.u32 %v856, 4294901760
        %3545 = vmatmul.mubr.f32.gmra.mrb[0].mxu0 %v3544
        %v3546 = vpop.f32.mrb[0].mxu0
        %v3547 = vadd.f32 %v3158, %v3546
        %v3548 = vpop.f32.mrb[0].mxu0
        %3549 = vmatprep.mubr.f32.mxu0 0.0
        %v3550 = vand.u32 %v857, 4294901760
        %3551 = vmatmul.mubr.f32.gmra.mrb[0].mxu0 %v3550
        %v3552 = vpop.f32.mrb[0].mxu0
        %v3553 = vadd.f32 %v3168, %v3552
        %v3554 = vpop.f32.mrb[0].mxu0
        %3555 = vmatprep.mubr.f32.mxu0 0.0
        %v3556 = vand.u32 %v858, 4294901760
        %3557 = vmatmul.mubr.f32.gmra.mrb[0].mxu0 %v3556
        %v3558 = vpop.f32.mrb[0].mxu0
        %v3559 = vadd.f32 %v3178, %v3558
        %v3560 = vpop.f32.mrb[0].mxu0
        %3561 = vmatprep.mubr.f32.mxu0 0.0
        %v3562 = vand.u32 %v859, 4294901760
        %3563 = vmatmul.mubr.f32.gmra.mrb[0].mxu0 %v3562
        %v3564 = vpop.f32.mrb[0].mxu0
        %v3565 = vadd.f32 %v3188, %v3564
        %v3566 = vpop.f32.mrb[0].mxu0
        %3567 = vmatprep.mubr.f32.mxu0 0.0
        %v3568 = vand.u32 %v860, 4294901760
        %3569 = vmatmul.mubr.f32.gmra.mrb[0].mxu0 %v3568
        %v3570 = vpop.f32.mrb[0].mxu0
        %v3571 = vadd.f32 %v3198, %v3570
        %v3572 = vpop.f32.mrb[0].mxu0
        %3573 = vmatprep.mubr.f32.mxu0 0.0
        %v3574 = vand.u32 %v861, 4294901760
        %3575 = vmatmul.mubr.f32.gmra.mrb[0].mxu0 %v3574
        %v3576 = vpop.f32.mrb[0].mxu0
        %v3577 = vadd.f32 %v3208, %v3576
        %v3578 = vpop.f32.mrb[0].mxu0
        %3579 = vmatprep.mubr.f32.mxu0 0.0
        %v3580 = vand.u32 %v862, 4294901760
        %3581 = vmatmul.mubr.f32.gmra.mrb[0].mxu0 %v3580
        %v3582 = vpop.f32.mrb[0].mxu0
        %v3583 = vadd.f32 %v3218, %v3582
        %v3584 = vpop.f32.mrb[0].mxu0
        %3585 = vmatprep.mubr.f32.mxu0 0.0
        %v3586 = vand.u32 %v863, 4294901760
        %3587 = vmatmul.mubr.f32.gmra.mrb[0].mxu0 %v3586
        %v3588 = vpop.f32.mrb[0].mxu0
        %v3589 = vadd.f32 %v3228, %v3588
        %v3590 = vpop.f32.mrb[0].mxu0
        %3591 = vmatprep.mubr.f32.mxu0 0.0
        %v3592 = vand.u32 %v864, 4294901760
        %3593 = vmatmul.mubr.f32.gmra.mrb[0].mxu0 %v3592
        %v3594 = vpop.f32.mrb[0].mxu0
        %v3595 = vadd.f32 %v3238, %v3594
        %v3596 = vpop.f32.mrb[0].mxu0
        %3597 = vmatprep.mubr.f32.mxu0 0.0
        %v3598 = vand.u32 %v865, 4294901760
        %3599 = vmatmul.mubr.f32.gmra.mrb[0].mxu0 %v3598
        %v3600 = vpop.f32.mrb[0].mxu0
        %v3601 = vadd.f32 %v3248, %v3600
        %v3602 = vpop.f32.mrb[0].mxu0
        %3603 = vmatprep.mubr.f32.mxu0 0.0
        %v3604 = vand.u32 %v866, 4294901760
        %3605 = vmatmul.mubr.f32.gmra.mrb[0].mxu0 %v3604
        %v3606 = vpop.f32.mrb[0].mxu0
        %v3607 = vadd.f32 %v3258, %v3606
        %v3608 = vpop.f32.mrb[0].mxu0
        %3609 = vmatprep.mubr.f32.mxu0 0.0
        %v3610 = vand.u32 %v867, 4294901760
        %3611 = vmatmul.mubr.f32.gmra.mrb[0].mxu0 %v3610
        %v3612 = vpop.f32.mrb[0].mxu0
        %v3613 = vadd.f32 %v3268, %v3612
        %v3614 = vpop.f32.mrb[0].mxu0
        %3615 = vmatprep.mubr.f32.mxu0 0.0
        %v3616 = vand.u32 %v868, 4294901760
        %3617 = vmatmul.mubr.f32.gmra.mrb[0].mxu0 %v3616
        %v3618 = vpop.f32.mrb[0].mxu0
        %v3619 = vadd.f32 %v3278, %v3618
        %v3620 = vpop.f32.mrb[0].mxu0
        %3621 = vmatprep.mubr.f32.mxu0 0.0
        %v3622 = vand.u32 %v869, 4294901760
        %3623 = vmatmul.mubr.f32.gmra.mrb[0].mxu0 %v3622
        %v3624 = vpop.f32.mrb[0].mxu0
        %v3625 = vadd.f32 %v3288, %v3624
        %v3626 = vpop.f32.mrb[0].mxu0
        %3627 = vdwg.mxu0
        %3628 = vmatprep.subr.mxu0 0.0
        %v3629 = vand.u32 %v2867, 4294901760
        %v3630 = vsub.f32 %v2867, %v3629
        %3631 = vmatpush1.msra.mxu0 %v3630
        %3632 = vmatprep.subr.mxu0 0.0
        %v3633 = vand.u32 %v2868, 4294901760
        %v3634 = vsub.f32 %v2868, %v3633
        %3635 = vmatpush1.msra.mxu0 %v3634
        %3636 = vmatprep.subr.mxu0 0.0
        %v3637 = vand.u32 %v2869, 4294901760
        %v3638 = vsub.f32 %v2869, %v3637
        %3639 = vmatpush1.msra.mxu0 %v3638
        %3640 = vmatprep.subr.mxu0 0.0
        %v3641 = vand.u32 %v2870, 4294901760
        %v3642 = vsub.f32 %v2870, %v3641
        %3643 = vmatpush1.msra.mxu0 %v3642
        %3644 = vmatprep.subr.mxu0 0.0
        %v3645 = vand.u32 %v2871, 4294901760
        %v3646 = vsub.f32 %v2871, %v3645
        %3647 = vmatpush1.msra.mxu0 %v3646
        %3648 = vmatprep.subr.mxu0 0.0
        %v3649 = vand.u32 %v2872, 4294901760
        %v3650 = vsub.f32 %v2872, %v3649
        %3651 = vmatpush1.msra.mxu0 %v3650
        %3652 = vmatprep.subr.mxu0 0.0
        %v3653 = vand.u32 %v2873, 4294901760
        %v3654 = vsub.f32 %v2873, %v3653
        %3655 = vmatpush1.msra.mxu0 %v3654
        %3656 = vmatprep.subr.mxu0 0.0
        %v3657 = vand.u32 %v2874, 4294901760
        %v3658 = vsub.f32 %v2874, %v3657
        %3659 = vmatpush1.msra.mxu0 %v3658
        %3660 = vmatprep.subr.mxu0 0.0
        %v3661 = vand.u32 %v2875, 4294901760
        %v3662 = vsub.f32 %v2875, %v3661
        %3663 = vmatpush1.msra.mxu0 %v3662
        %3664 = vmatprep.subr.mxu0 0.0
        %v3665 = vand.u32 %v2876, 4294901760
        %v3666 = vsub.f32 %v2876, %v3665
        %3667 = vmatpush1.msra.mxu0 %v3666
        %3668 = vmatprep.subr.mxu0 0.0
        %v3669 = vand.u32 %v2877, 4294901760
        %v3670 = vsub.f32 %v2877, %v3669
        %3671 = vmatpush1.msra.mxu0 %v3670
        %3672 = vmatprep.subr.mxu0 0.0
        %v3673 = vand.u32 %v2878, 4294901760
        %v3674 = vsub.f32 %v2878, %v3673
        %3675 = vmatpush1.msra.mxu0 %v3674
        %3676 = vmatprep.subr.mxu0 0.0
        %v3677 = vand.u32 %v2879, 4294901760
        %v3678 = vsub.f32 %v2879, %v3677
        %3679 = vmatpush1.msra.mxu0 %v3678
        %3680 = vmatprep.subr.mxu0 0.0
        %v3681 = vand.u32 %v2880, 4294901760
        %v3682 = vsub.f32 %v2880, %v3681
        %3683 = vmatpush1.msra.mxu0 %v3682
        %3684 = vmatprep.subr.mxu0 0.0
        %v3685 = vand.u32 %v2881, 4294901760
        %v3686 = vsub.f32 %v2881, %v3685
        %3687 = vmatpush1.msra.mxu0 %v3686
        %3688 = vmatprep.subr.mxu0 0.0
        %v3689 = vand.u32 %v2882, 4294901760
        %v3690 = vsub.f32 %v2882, %v3689
        %3691 = vmatpush1.msra.mxu0 %v3690
        %3692 = vmatprep.subr.mxu0 0.0
        %3693 = vmatpush1.msra.mxu0 0.0
        %3694 = vmatprep.subr.mxu0 0.0
        %3695 = vmatpush1.msra.mxu0 0.0
        %3696 = vmatprep.subr.mxu0 0.0
        %3697 = vmatpush1.msra.mxu0 0.0
        %3698 = vmatprep.subr.mxu0 0.0
        %3699 = vmatpush1.msra.mxu0 0.0
        %3700 = vmatprep.subr.mxu0 0.0
        %3701 = vmatpush1.msra.mxu0 0.0
        %3702 = vmatprep.subr.mxu0 0.0
        %3703 = vmatpush1.msra.mxu0 0.0
        %3704 = vmatprep.subr.mxu0 0.0
        %3705 = vmatpush1.msra.mxu0 0.0
        %3706 = vmatprep.subr.mxu0 0.0
        %3707 = vmatpush1.msra.mxu0 0.0
        %3708 = vmatprep.subr.mxu0 0.0
        %3709 = vmatpush1.msra.mxu0 0.0
        %3710 = vmatprep.subr.mxu0 0.0
        %3711 = vmatpush1.msra.mxu0 0.0
        %3712 = vmatprep.subr.mxu0 0.0
        %3713 = vmatpush1.msra.mxu0 0.0
        %3714 = vmatprep.subr.mxu0 0.0
        %3715 = vmatpush1.msra.mxu0 0.0
        %3716 = vmatprep.subr.mxu0 0.0
        %3717 = vmatpush1.msra.mxu0 0.0
        %3718 = vmatprep.subr.mxu0 0.0
        %3719 = vmatpush1.msra.mxu0 0.0
        %3720 = vmatprep.subr.mxu0 0.0
        %3721 = vmatpush1.msra.mxu0 0.0
        %3722 = vmatprep.subr.mxu0 0.0
        %3723 = vmatpush1.msra.mxu0 0.0
        %3724 = vmatprep.mubr.f32.mxu0 0.0
        %v3725 = vand.u32 %v838, 4294901760
        %v3726 = vsub.f32 %v838, %v3725
        %3727 = vmatmul.mubr.f32.gmra.mrb[0].mxu0 %v3726
        %v3728 = vpop.f32.mrb[0].mxu0
        %v3729 = vadd.f32 %v3439, %v3728
        %v3730 = vpop.f32.mrb[0].mxu0
        %3731 = vmatprep.mubr.f32.mxu0 0.0
        %v3732 = vand.u32 %v839, 4294901760
        %v3733 = vsub.f32 %v839, %v3732
        %3734 = vmatmul.mubr.f32.gmra.mrb[0].mxu0 %v3733
        %v3735 = vpop.f32.mrb[0].mxu0
        %v3736 = vadd.f32 %v3445, %v3735
        %v3737 = vpop.f32.mrb[0].mxu0
        %3738 = vmatprep.mubr.f32.mxu0 0.0
        %v3739 = vand.u32 %v840, 4294901760
        %v3740 = vsub.f32 %v840, %v3739
        %3741 = vmatmul.mubr.f32.gmra.mrb[0].mxu0 %v3740
        %v3742 = vpop.f32.mrb[0].mxu0
        %v3743 = vadd.f32 %v3451, %v3742
        %v3744 = vpop.f32.mrb[0].mxu0
        %3745 = vmatprep.mubr.f32.mxu0 0.0
        %v3746 = vand.u32 %v841, 4294901760
        %v3747 = vsub.f32 %v841, %v3746
        %3748 = vmatmul.mubr.f32.gmra.mrb[0].mxu0 %v3747
        %v3749 = vpop.f32.mrb[0].mxu0
        %v3750 = vadd.f32 %v3457, %v3749
        %v3751 = vpop.f32.mrb[0].mxu0
        %3752 = vmatprep.mubr.f32.mxu0 0.0
        %v3753 = vand.u32 %v842, 4294901760
        %v3754 = vsub.f32 %v842, %v3753
        %3755 = vmatmul.mubr.f32.gmra.mrb[0].mxu0 %v3754
        %v3756 = vpop.f32.mrb[0].mxu0
        %v3757 = vadd.f32 %v3463, %v3756
        %v3758 = vpop.f32.mrb[0].mxu0
        %3759 = vmatprep.mubr.f32.mxu0 0.0
        %v3760 = vand.u32 %v843, 4294901760
        %v3761 = vsub.f32 %v843, %v3760
        %3762 = vmatmul.mubr.f32.gmra.mrb[0].mxu0 %v3761
        %v3763 = vpop.f32.mrb[0].mxu0
        %v3764 = vadd.f32 %v3469, %v3763
        %v3765 = vpop.f32.mrb[0].mxu0
        %3766 = vmatprep.mubr.f32.mxu0 0.0
        %v3767 = vand.u32 %v844, 4294901760
        %v3768 = vsub.f32 %v844, %v3767
        %3769 = vmatmul.mubr.f32.gmra.mrb[0].mxu0 %v3768
        %v3770 = vpop.f32.mrb[0].mxu0
        %v3771 = vadd.f32 %v3475, %v3770
        %v3772 = vpop.f32.mrb[0].mxu0
        %3773 = vmatprep.mubr.f32.mxu0 0.0
        %v3774 = vand.u32 %v845, 4294901760
        %v3775 = vsub.f32 %v845, %v3774
        %3776 = vmatmul.mubr.f32.gmra.mrb[0].mxu0 %v3775
        %v3777 = vpop.f32.mrb[0].mxu0
        %v3778 = vadd.f32 %v3481, %v3777
        %v3779 = vpop.f32.mrb[0].mxu0
        %3780 = vmatprep.mubr.f32.mxu0 0.0
        %v3781 = vand.u32 %v846, 4294901760
        %v3782 = vsub.f32 %v846, %v3781
        %3783 = vmatmul.mubr.f32.gmra.mrb[0].mxu0 %v3782
        %v3784 = vpop.f32.mrb[0].mxu0
        %v3785 = vadd.f32 %v3487, %v3784
        %v3786 = vpop.f32.mrb[0].mxu0
        %3787 = vmatprep.mubr.f32.mxu0 0.0
        %v3788 = vand.u32 %v847, 4294901760
        %v3789 = vsub.f32 %v847, %v3788
        %3790 = vmatmul.mubr.f32.gmra.mrb[0].mxu0 %v3789
        %v3791 = vpop.f32.mrb[0].mxu0
        %v3792 = vadd.f32 %v3493, %v3791
        %v3793 = vpop.f32.mrb[0].mxu0
        %3794 = vmatprep.mubr.f32.mxu0 0.0
        %v3795 = vand.u32 %v848, 4294901760
        %v3796 = vsub.f32 %v848, %v3795
        %3797 = vmatmul.mubr.f32.gmra.mrb[0].mxu0 %v3796
        %v3798 = vpop.f32.mrb[0].mxu0
        %v3799 = vadd.f32 %v3499, %v3798
        %v3800 = vpop.f32.mrb[0].mxu0
        %3801 = vmatprep.mubr.f32.mxu0 0.0
        %v3802 = vand.u32 %v849, 4294901760
        %v3803 = vsub.f32 %v849, %v3802
        %3804 = vmatmul.mubr.f32.gmra.mrb[0].mxu0 %v3803
        %v3805 = vpop.f32.mrb[0].mxu0
        %v3806 = vadd.f32 %v3505, %v3805
        %v3807 = vpop.f32.mrb[0].mxu0
        %3808 = vmatprep.mubr.f32.mxu0 0.0
        %v3809 = vand.u32 %v850, 4294901760
        %v3810 = vsub.f32 %v850, %v3809
        %3811 = vmatmul.mubr.f32.gmra.mrb[0].mxu0 %v3810
        %v3812 = vpop.f32.mrb[0].mxu0
        %v3813 = vadd.f32 %v3511, %v3812
        %v3814 = vpop.f32.mrb[0].mxu0
        %3815 = vmatprep.mubr.f32.mxu0 0.0
        %v3816 = vand.u32 %v851, 4294901760
        %v3817 = vsub.f32 %v851, %v3816
        %3818 = vmatmul.mubr.f32.gmra.mrb[0].mxu0 %v3817
        %v3819 = vpop.f32.mrb[0].mxu0
        %v3820 = vadd.f32 %v3517, %v3819
        %v3821 = vpop.f32.mrb[0].mxu0
        %3822 = vmatprep.mubr.f32.mxu0 0.0
        %v3823 = vand.u32 %v852, 4294901760
        %v3824 = vsub.f32 %v852, %v3823
        %3825 = vmatmul.mubr.f32.gmra.mrb[0].mxu0 %v3824
        %v3826 = vpop.f32.mrb[0].mxu0
        %v3827 = vadd.f32 %v3523, %v3826
        %v3828 = vpop.f32.mrb[0].mxu0
        %3829 = vmatprep.mubr.f32.mxu0 0.0
        %v3830 = vand.u32 %v853, 4294901760
        %v3831 = vsub.f32 %v853, %v3830
        %3832 = vmatmul.mubr.f32.gmra.mrb[0].mxu0 %v3831
        %v3833 = vpop.f32.mrb[0].mxu0
        %v3834 = vadd.f32 %v3529, %v3833
        %v3835 = vpop.f32.mrb[0].mxu0
        %3836 = vmatprep.mubr.f32.mxu0 0.0
        %v3837 = vand.u32 %v854, 4294901760
        %v3838 = vsub.f32 %v854, %v3837
        %3839 = vmatmul.mubr.f32.gmra.mrb[0].mxu0 %v3838
        %v3840 = vpop.f32.mrb[0].mxu0
        %v3841 = vadd.f32 %v3535, %v3840
        %v3842 = vpop.f32.mrb[0].mxu0
        %3843 = vmatprep.mubr.f32.mxu0 0.0
        %v3844 = vand.u32 %v855, 4294901760
        %v3845 = vsub.f32 %v855, %v3844
        %3846 = vmatmul.mubr.f32.gmra.mrb[0].mxu0 %v3845
        %v3847 = vpop.f32.mrb[0].mxu0
        %v3848 = vadd.f32 %v3541, %v3847
        %v3849 = vpop.f32.mrb[0].mxu0
        %3850 = vmatprep.mubr.f32.mxu0 0.0
        %v3851 = vand.u32 %v856, 4294901760
        %v3852 = vsub.f32 %v856, %v3851
        %3853 = vmatmul.mubr.f32.gmra.mrb[0].mxu0 %v3852
        %v3854 = vpop.f32.mrb[0].mxu0
        %v3855 = vadd.f32 %v3547, %v3854
        %v3856 = vpop.f32.mrb[0].mxu0
        %3857 = vmatprep.mubr.f32.mxu0 0.0
        %v3858 = vand.u32 %v857, 4294901760
        %v3859 = vsub.f32 %v857, %v3858
        %3860 = vmatmul.mubr.f32.gmra.mrb[0].mxu0 %v3859
        %v3861 = vpop.f32.mrb[0].mxu0
        %v3862 = vadd.f32 %v3553, %v3861
        %v3863 = vpop.f32.mrb[0].mxu0
        %3864 = vmatprep.mubr.f32.mxu0 0.0
        %v3865 = vand.u32 %v858, 4294901760
        %v3866 = vsub.f32 %v858, %v3865
        %3867 = vmatmul.mubr.f32.gmra.mrb[0].mxu0 %v3866
        %v3868 = vpop.f32.mrb[0].mxu0
        %v3869 = vadd.f32 %v3559, %v3868
        %v3870 = vpop.f32.mrb[0].mxu0
        %3871 = vmatprep.mubr.f32.mxu0 0.0
        %v3872 = vand.u32 %v859, 4294901760
        %v3873 = vsub.f32 %v859, %v3872
        %3874 = vmatmul.mubr.f32.gmra.mrb[0].mxu0 %v3873
        %v3875 = vpop.f32.mrb[0].mxu0
        %v3876 = vadd.f32 %v3565, %v3875
        %v3877 = vpop.f32.mrb[0].mxu0
        %3878 = vmatprep.mubr.f32.mxu0 0.0
        %v3879 = vand.u32 %v860, 4294901760
        %v3880 = vsub.f32 %v860, %v3879
        %3881 = vmatmul.mubr.f32.gmra.mrb[0].mxu0 %v3880
        %v3882 = vpop.f32.mrb[0].mxu0
        %v3883 = vadd.f32 %v3571, %v3882
        %v3884 = vpop.f32.mrb[0].mxu0
        %3885 = vmatprep.mubr.f32.mxu0 0.0
        %v3886 = vand.u32 %v861, 4294901760
        %v3887 = vsub.f32 %v861, %v3886
        %3888 = vmatmul.mubr.f32.gmra.mrb[0].mxu0 %v3887
        %v3889 = vpop.f32.mrb[0].mxu0
        %v3890 = vadd.f32 %v3577, %v3889
        %v3891 = vpop.f32.mrb[0].mxu0
        %3892 = vmatprep.mubr.f32.mxu0 0.0
        %v3893 = vand.u32 %v862, 4294901760
        %v3894 = vsub.f32 %v862, %v3893
        %3895 = vmatmul.mubr.f32.gmra.mrb[0].mxu0 %v3894
        %v3896 = vpop.f32.mrb[0].mxu0
        %v3897 = vadd.f32 %v3583, %v3896
        %v3898 = vpop.f32.mrb[0].mxu0
        %3899 = vmatprep.mubr.f32.mxu0 0.0
        %v3900 = vand.u32 %v863, 4294901760
        %v3901 = vsub.f32 %v863, %v3900
        %3902 = vmatmul.mubr.f32.gmra.mrb[0].mxu0 %v3901
        %v3903 = vpop.f32.mrb[0].mxu0
        %v3904 = vadd.f32 %v3589, %v3903
        %v3905 = vpop.f32.mrb[0].mxu0
        %3906 = vmatprep.mubr.f32.mxu0 0.0
        %v3907 = vand.u32 %v864, 4294901760
        %v3908 = vsub.f32 %v864, %v3907
        %3909 = vmatmul.mubr.f32.gmra.mrb[0].mxu0 %v3908
        %v3910 = vpop.f32.mrb[0].mxu0
        %v3911 = vadd.f32 %v3595, %v3910
        %v3912 = vpop.f32.mrb[0].mxu0
        %3913 = vmatprep.mubr.f32.mxu0 0.0
        %v3914 = vand.u32 %v865, 4294901760
        %v3915 = vsub.f32 %v865, %v3914
        %3916 = vmatmul.mubr.f32.gmra.mrb[0].mxu0 %v3915
        %v3917 = vpop.f32.mrb[0].mxu0
        %v3918 = vadd.f32 %v3601, %v3917
        %v3919 = vpop.f32.mrb[0].mxu0
        %3920 = vmatprep.mubr.f32.mxu0 0.0
        %v3921 = vand.u32 %v866, 4294901760
        %v3922 = vsub.f32 %v866, %v3921
        %3923 = vmatmul.mubr.f32.gmra.mrb[0].mxu0 %v3922
        %v3924 = vpop.f32.mrb[0].mxu0
        %v3925 = vadd.f32 %v3607, %v3924
        %v3926 = vpop.f32.mrb[0].mxu0
        %3927 = vmatprep.mubr.f32.mxu0 0.0
        %v3928 = vand.u32 %v867, 4294901760
        %v3929 = vsub.f32 %v867, %v3928
        %3930 = vmatmul.mubr.f32.gmra.mrb[0].mxu0 %v3929
        %v3931 = vpop.f32.mrb[0].mxu0
        %v3932 = vadd.f32 %v3613, %v3931
        %v3933 = vpop.f32.mrb[0].mxu0
        %3934 = vmatprep.mubr.f32.mxu0 0.0
        %v3935 = vand.u32 %v868, 4294901760
        %v3936 = vsub.f32 %v868, %v3935
        %3937 = vmatmul.mubr.f32.gmra.mrb[0].mxu0 %v3936
        %v3938 = vpop.f32.mrb[0].mxu0
        %v3939 = vadd.f32 %v3619, %v3938
        %v3940 = vpop.f32.mrb[0].mxu0
        %3941 = vmatprep.mubr.f32.mxu0 0.0
        %v3942 = vand.u32 %v869, 4294901760
        %v3943 = vsub.f32 %v869, %v3942
        %3944 = vmatmul.mubr.f32.gmra.mrb[0].mxu0 %v3943
        %v3945 = vpop.f32.mrb[0].mxu0
        %v3946 = vadd.f32 %v3625, %v3945
        %v3947 = vpop.f32.mrb[0].mxu0
        %3948 = vdwg.mxu0
        %3949 = vmatprep.subr.mxu0 0.0
        %v3950 = vand.u32 %v2867, 4294901760
        %3951 = vmatpush1.msra.mxu0 %v3950
        %3952 = vmatprep.subr.mxu0 0.0
        %v3953 = vand.u32 %v2868, 4294901760
        %3954 = vmatpush1.msra.mxu0 %v3953
        %3955 = vmatprep.subr.mxu0 0.0
        %v3956 = vand.u32 %v2869, 4294901760
        %3957 = vmatpush1.msra.mxu0 %v3956
        %3958 = vmatprep.subr.mxu0 0.0
        %v3959 = vand.u32 %v2870, 4294901760
        %3960 = vmatpush1.msra.mxu0 %v3959
        %3961 = vmatprep.subr.mxu0 0.0
        %v3962 = vand.u32 %v2871, 4294901760
        %3963 = vmatpush1.msra.mxu0 %v3962
        %3964 = vmatprep.subr.mxu0 0.0
        %v3965 = vand.u32 %v2872, 4294901760
        %3966 = vmatpush1.msra.mxu0 %v3965
        %3967 = vmatprep.subr.mxu0 0.0
        %v3968 = vand.u32 %v2873, 4294901760
        %3969 = vmatpush1.msra.mxu0 %v3968
        %3970 = vmatprep.subr.mxu0 0.0
        %v3971 = vand.u32 %v2874, 4294901760
        %3972 = vmatpush1.msra.mxu0 %v3971
        %3973 = vmatprep.subr.mxu0 0.0
        %v3974 = vand.u32 %v2875, 4294901760
        %3975 = vmatpush1.msra.mxu0 %v3974
        %3976 = vmatprep.subr.mxu0 0.0
        %v3977 = vand.u32 %v2876, 4294901760
        %3978 = vmatpush1.msra.mxu0 %v3977
        %3979 = vmatprep.subr.mxu0 0.0
        %v3980 = vand.u32 %v2877, 4294901760
        %3981 = vmatpush1.msra.mxu0 %v3980
        %3982 = vmatprep.subr.mxu0 0.0
        %v3983 = vand.u32 %v2878, 4294901760
        %3984 = vmatpush1.msra.mxu0 %v3983
        %3985 = vmatprep.subr.mxu0 0.0
        %v3986 = vand.u32 %v2879, 4294901760
        %3987 = vmatpush1.msra.mxu0 %v3986
        %3988 = vmatprep.subr.mxu0 0.0
        %v3989 = vand.u32 %v2880, 4294901760
        %3990 = vmatpush1.msra.mxu0 %v3989
        %3991 = vmatprep.subr.mxu0 0.0
        %v3992 = vand.u32 %v2881, 4294901760
        %3993 = vmatpush1.msra.mxu0 %v3992
        %3994 = vmatprep.subr.mxu0 0.0
        %v3995 = vand.u32 %v2882, 4294901760
        %3996 = vmatpush1.msra.mxu0 %v3995
        %3997 = vmatprep.subr.mxu0 0.0
        %3998 = vmatpush1.msra.mxu0 0.0
        %3999 = vmatprep.subr.mxu0 0.0
        %4000 = vmatpush1.msra.mxu0 0.0
        %4001 = vmatprep.subr.mxu0 0.0
        %4002 = vmatpush1.msra.mxu0 0.0
        %4003 = vmatprep.subr.mxu0 0.0
        %4004 = vmatpush1.msra.mxu0 0.0
        %4005 = vmatprep.subr.mxu0 0.0
        %4006 = vmatpush1.msra.mxu0 0.0
        %4007 = vmatprep.subr.mxu0 0.0
        %4008 = vmatpush1.msra.mxu0 0.0
        %4009 = vmatprep.subr.mxu0 0.0
        %4010 = vmatpush1.msra.mxu0 0.0
        %4011 = vmatprep.subr.mxu0 0.0
        %4012 = vmatpush1.msra.mxu0 0.0
        %4013 = vmatprep.subr.mxu0 0.0
        %4014 = vmatpush1.msra.mxu0 0.0
        %4015 = vmatprep.subr.mxu0 0.0
        %4016 = vmatpush1.msra.mxu0 0.0
        %4017 = vmatprep.subr.mxu0 0.0
        %4018 = vmatpush1.msra.mxu0 0.0
        %4019 = vmatprep.subr.mxu0 0.0
        %4020 = vmatpush1.msra.mxu0 0.0
        %4021 = vmatprep.subr.mxu0 0.0
        %4022 = vmatpush1.msra.mxu0 0.0
        %4023 = vmatprep.subr.mxu0 0.0
        %4024 = vmatpush1.msra.mxu0 0.0
        %4025 = vmatprep.subr.mxu0 0.0
        %4026 = vmatpush1.msra.mxu0 0.0
        %4027 = vmatprep.subr.mxu0 0.0
        %4028 = vmatpush1.msra.mxu0 0.0
        %4029 = vmatprep.mubr.f32.mxu0 0.0
        %v4030 = vand.u32 %v838, 4294901760
        %v4031 = vsub.f32 %v838, %v4030
        %v4032 = vand.u32 %v4031, 4294901760
        %4033 = vmatmul.mubr.f32.gmra.mrb[0].mxu0 %v4032
        %v4034 = vpop.f32.mrb[0].mxu0
        %v4035 = vadd.f32 %v3729, %v4034
        %v4036 = vpop.f32.mrb[0].mxu0
        %4037 = vmatprep.mubr.f32.mxu0 0.0
        %v4038 = vand.u32 %v839, 4294901760
        %v4039 = vsub.f32 %v839, %v4038
        %v4040 = vand.u32 %v4039, 4294901760
        %4041 = vmatmul.mubr.f32.gmra.mrb[0].mxu0 %v4040
        %v4042 = vpop.f32.mrb[0].mxu0
        %v4043 = vadd.f32 %v3736, %v4042
        %v4044 = vpop.f32.mrb[0].mxu0
        %4045 = vmatprep.mubr.f32.mxu0 0.0
        %v4046 = vand.u32 %v840, 4294901760
        %v4047 = vsub.f32 %v840, %v4046
        %v4048 = vand.u32 %v4047, 4294901760
        %4049 = vmatmul.mubr.f32.gmra.mrb[0].mxu0 %v4048
        %v4050 = vpop.f32.mrb[0].mxu0
        %v4051 = vadd.f32 %v3743, %v4050
        %v4052 = vpop.f32.mrb[0].mxu0
        %4053 = vmatprep.mubr.f32.mxu0 0.0
        %v4054 = vand.u32 %v841, 4294901760
        %v4055 = vsub.f32 %v841, %v4054
        %v4056 = vand.u32 %v4055, 4294901760
        %4057 = vmatmul.mubr.f32.gmra.mrb[0].mxu0 %v4056
        %v4058 = vpop.f32.mrb[0].mxu0
        %v4059 = vadd.f32 %v3750, %v4058
        %v4060 = vpop.f32.mrb[0].mxu0
        %4061 = vmatprep.mubr.f32.mxu0 0.0
        %v4062 = vand.u32 %v842, 4294901760
        %v4063 = vsub.f32 %v842, %v4062
        %v4064 = vand.u32 %v4063, 4294901760
        %4065 = vmatmul.mubr.f32.gmra.mrb[0].mxu0 %v4064
        %v4066 = vpop.f32.mrb[0].mxu0
        %v4067 = vadd.f32 %v3757, %v4066
        %v4068 = vpop.f32.mrb[0].mxu0
        %4069 = vmatprep.mubr.f32.mxu0 0.0
        %v4070 = vand.u32 %v843, 4294901760
        %v4071 = vsub.f32 %v843, %v4070
        %v4072 = vand.u32 %v4071, 4294901760
        %4073 = vmatmul.mubr.f32.gmra.mrb[0].mxu0 %v4072
        %v4074 = vpop.f32.mrb[0].mxu0
        %v4075 = vadd.f32 %v3764, %v4074
        %v4076 = vpop.f32.mrb[0].mxu0
        %4077 = vmatprep.mubr.f32.mxu0 0.0
        %v4078 = vand.u32 %v844, 4294901760
        %v4079 = vsub.f32 %v844, %v4078
        %v4080 = vand.u32 %v4079, 4294901760
        %4081 = vmatmul.mubr.f32.gmra.mrb[0].mxu0 %v4080
        %v4082 = vpop.f32.mrb[0].mxu0
        %v4083 = vadd.f32 %v3771, %v4082
        %v4084 = vpop.f32.mrb[0].mxu0
        %4085 = vmatprep.mubr.f32.mxu0 0.0
        %v4086 = vand.u32 %v845, 4294901760
        %v4087 = vsub.f32 %v845, %v4086
        %v4088 = vand.u32 %v4087, 4294901760
        %4089 = vmatmul.mubr.f32.gmra.mrb[0].mxu0 %v4088
        %v4090 = vpop.f32.mrb[0].mxu0
        %v4091 = vadd.f32 %v3778, %v4090
        %v4092 = vpop.f32.mrb[0].mxu0
        %4093 = vmatprep.mubr.f32.mxu0 0.0
        %v4094 = vand.u32 %v846, 4294901760
        %v4095 = vsub.f32 %v846, %v4094
        %v4096 = vand.u32 %v4095, 4294901760
        %4097 = vmatmul.mubr.f32.gmra.mrb[0].mxu0 %v4096
        %v4098 = vpop.f32.mrb[0].mxu0
        %v4099 = vadd.f32 %v3785, %v4098
        %v4100 = vpop.f32.mrb[0].mxu0
        %4101 = vmatprep.mubr.f32.mxu0 0.0
        %v4102 = vand.u32 %v847, 4294901760
        %v4103 = vsub.f32 %v847, %v4102
        %v4104 = vand.u32 %v4103, 4294901760
        %4105 = vmatmul.mubr.f32.gmra.mrb[0].mxu0 %v4104
        %v4106 = vpop.f32.mrb[0].mxu0
        %v4107 = vadd.f32 %v3792, %v4106
        %v4108 = vpop.f32.mrb[0].mxu0
        %4109 = vmatprep.mubr.f32.mxu0 0.0
        %v4110 = vand.u32 %v848, 4294901760
        %v4111 = vsub.f32 %v848, %v4110
        %v4112 = vand.u32 %v4111, 4294901760
        %4113 = vmatmul.mubr.f32.gmra.mrb[0].mxu0 %v4112
        %v4114 = vpop.f32.mrb[0].mxu0
        %v4115 = vadd.f32 %v3799, %v4114
        %v4116 = vpop.f32.mrb[0].mxu0
        %4117 = vmatprep.mubr.f32.mxu0 0.0
        %v4118 = vand.u32 %v849, 4294901760
        %v4119 = vsub.f32 %v849, %v4118
        %v4120 = vand.u32 %v4119, 4294901760
        %4121 = vmatmul.mubr.f32.gmra.mrb[0].mxu0 %v4120
        %v4122 = vpop.f32.mrb[0].mxu0
        %v4123 = vadd.f32 %v3806, %v4122
        %v4124 = vpop.f32.mrb[0].mxu0
        %4125 = vmatprep.mubr.f32.mxu0 0.0
        %v4126 = vand.u32 %v850, 4294901760
        %v4127 = vsub.f32 %v850, %v4126
        %v4128 = vand.u32 %v4127, 4294901760
        %4129 = vmatmul.mubr.f32.gmra.mrb[0].mxu0 %v4128
        %v4130 = vpop.f32.mrb[0].mxu0
        %v4131 = vadd.f32 %v3813, %v4130
        %v4132 = vpop.f32.mrb[0].mxu0
        %4133 = vmatprep.mubr.f32.mxu0 0.0
        %v4134 = vand.u32 %v851, 4294901760
        %v4135 = vsub.f32 %v851, %v4134
        %v4136 = vand.u32 %v4135, 4294901760
        %4137 = vmatmul.mubr.f32.gmra.mrb[0].mxu0 %v4136
        %v4138 = vpop.f32.mrb[0].mxu0
        %v4139 = vadd.f32 %v3820, %v4138
        %v4140 = vpop.f32.mrb[0].mxu0
        %4141 = vmatprep.mubr.f32.mxu0 0.0
        %v4142 = vand.u32 %v852, 4294901760
        %v4143 = vsub.f32 %v852, %v4142
        %v4144 = vand.u32 %v4143, 4294901760
        %4145 = vmatmul.mubr.f32.gmra.mrb[0].mxu0 %v4144
        %v4146 = vpop.f32.mrb[0].mxu0
        %v4147 = vadd.f32 %v3827, %v4146
        %v4148 = vpop.f32.mrb[0].mxu0
        %4149 = vmatprep.mubr.f32.mxu0 0.0
        %v4150 = vand.u32 %v853, 4294901760
        %v4151 = vsub.f32 %v853, %v4150
        %v4152 = vand.u32 %v4151, 4294901760
        %4153 = vmatmul.mubr.f32.gmra.mrb[0].mxu0 %v4152
        %v4154 = vpop.f32.mrb[0].mxu0
        %v4155 = vadd.f32 %v3834, %v4154
        %v4156 = vpop.f32.mrb[0].mxu0
        %4157 = vmatprep.mubr.f32.mxu0 0.0
        %v4158 = vand.u32 %v854, 4294901760
        %v4159 = vsub.f32 %v854, %v4158
        %v4160 = vand.u32 %v4159, 4294901760
        %4161 = vmatmul.mubr.f32.gmra.mrb[0].mxu0 %v4160
        %v4162 = vpop.f32.mrb[0].mxu0
        %v4163 = vadd.f32 %v3841, %v4162
        %v4164 = vpop.f32.mrb[0].mxu0
        %4165 = vmatprep.mubr.f32.mxu0 0.0
        %v4166 = vand.u32 %v855, 4294901760
        %v4167 = vsub.f32 %v855, %v4166
        %v4168 = vand.u32 %v4167, 4294901760
        %4169 = vmatmul.mubr.f32.gmra.mrb[0].mxu0 %v4168
        %v4170 = vpop.f32.mrb[0].mxu0
        %v4171 = vadd.f32 %v3848, %v4170
        %v4172 = vpop.f32.mrb[0].mxu0
        %4173 = vmatprep.mubr.f32.mxu0 0.0
        %v4174 = vand.u32 %v856, 4294901760
        %v4175 = vsub.f32 %v856, %v4174
        %v4176 = vand.u32 %v4175, 4294901760
        %4177 = vmatmul.mubr.f32.gmra.mrb[0].mxu0 %v4176
        %v4178 = vpop.f32.mrb[0].mxu0
        %v4179 = vadd.f32 %v3855, %v4178
        %v4180 = vpop.f32.mrb[0].mxu0
        %4181 = vmatprep.mubr.f32.mxu0 0.0
        %v4182 = vand.u32 %v857, 4294901760
        %v4183 = vsub.f32 %v857, %v4182
        %v4184 = vand.u32 %v4183, 4294901760
        %4185 = vmatmul.mubr.f32.gmra.mrb[0].mxu0 %v4184
        %v4186 = vpop.f32.mrb[0].mxu0
        %v4187 = vadd.f32 %v3862, %v4186
        %v4188 = vpop.f32.mrb[0].mxu0
        %4189 = vmatprep.mubr.f32.mxu0 0.0
        %v4190 = vand.u32 %v858, 4294901760
        %v4191 = vsub.f32 %v858, %v4190
        %v4192 = vand.u32 %v4191, 4294901760
        %4193 = vmatmul.mubr.f32.gmra.mrb[0].mxu0 %v4192
        %v4194 = vpop.f32.mrb[0].mxu0
        %v4195 = vadd.f32 %v3869, %v4194
        %v4196 = vpop.f32.mrb[0].mxu0
        %4197 = vmatprep.mubr.f32.mxu0 0.0
        %v4198 = vand.u32 %v859, 4294901760
        %v4199 = vsub.f32 %v859, %v4198
        %v4200 = vand.u32 %v4199, 4294901760
        %4201 = vmatmul.mubr.f32.gmra.mrb[0].mxu0 %v4200
        %v4202 = vpop.f32.mrb[0].mxu0
        %v4203 = vadd.f32 %v3876, %v4202
        %v4204 = vpop.f32.mrb[0].mxu0
        %4205 = vmatprep.mubr.f32.mxu0 0.0
        %v4206 = vand.u32 %v860, 4294901760
        %v4207 = vsub.f32 %v860, %v4206
        %v4208 = vand.u32 %v4207, 4294901760
        %4209 = vmatmul.mubr.f32.gmra.mrb[0].mxu0 %v4208
        %v4210 = vpop.f32.mrb[0].mxu0
        %v4211 = vadd.f32 %v3883, %v4210
        %v4212 = vpop.f32.mrb[0].mxu0
        %4213 = vmatprep.mubr.f32.mxu0 0.0
        %v4214 = vand.u32 %v861, 4294901760
        %v4215 = vsub.f32 %v861, %v4214
        %v4216 = vand.u32 %v4215, 4294901760
        %4217 = vmatmul.mubr.f32.gmra.mrb[0].mxu0 %v4216
        %v4218 = vpop.f32.mrb[0].mxu0
        %v4219 = vadd.f32 %v3890, %v4218
        %v4220 = vpop.f32.mrb[0].mxu0
        %4221 = vmatprep.mubr.f32.mxu0 0.0
        %v4222 = vand.u32 %v862, 4294901760
        %v4223 = vsub.f32 %v862, %v4222
        %v4224 = vand.u32 %v4223, 4294901760
        %4225 = vmatmul.mubr.f32.gmra.mrb[0].mxu0 %v4224
        %v4226 = vpop.f32.mrb[0].mxu0
        %v4227 = vadd.f32 %v3897, %v4226
        %v4228 = vpop.f32.mrb[0].mxu0
        %4229 = vmatprep.mubr.f32.mxu0 0.0
        %v4230 = vand.u32 %v863, 4294901760
        %v4231 = vsub.f32 %v863, %v4230
        %v4232 = vand.u32 %v4231, 4294901760
        %4233 = vmatmul.mubr.f32.gmra.mrb[0].mxu0 %v4232
        %v4234 = vpop.f32.mrb[0].mxu0
        %v4235 = vadd.f32 %v3904, %v4234
        %v4236 = vpop.f32.mrb[0].mxu0
        %4237 = vmatprep.mubr.f32.mxu0 0.0
        %v4238 = vand.u32 %v864, 4294901760
        %v4239 = vsub.f32 %v864, %v4238
        %v4240 = vand.u32 %v4239, 4294901760
        %4241 = vmatmul.mubr.f32.gmra.mrb[0].mxu0 %v4240
        %v4242 = vpop.f32.mrb[0].mxu0
        %v4243 = vadd.f32 %v3911, %v4242
        %v4244 = vpop.f32.mrb[0].mxu0
        %4245 = vmatprep.mubr.f32.mxu0 0.0
        %v4246 = vand.u32 %v865, 4294901760
        %v4247 = vsub.f32 %v865, %v4246
        %v4248 = vand.u32 %v4247, 4294901760
        %4249 = vmatmul.mubr.f32.gmra.mrb[0].mxu0 %v4248
        %v4250 = vpop.f32.mrb[0].mxu0
        %v4251 = vadd.f32 %v3918, %v4250
        %v4252 = vpop.f32.mrb[0].mxu0
        %4253 = vmatprep.mubr.f32.mxu0 0.0
        %v4254 = vand.u32 %v866, 4294901760
        %v4255 = vsub.f32 %v866, %v4254
        %v4256 = vand.u32 %v4255, 4294901760
        %4257 = vmatmul.mubr.f32.gmra.mrb[0].mxu0 %v4256
        %v4258 = vpop.f32.mrb[0].mxu0
        %v4259 = vadd.f32 %v3925, %v4258
        %v4260 = vpop.f32.mrb[0].mxu0
        %4261 = vmatprep.mubr.f32.mxu0 0.0
        %v4262 = vand.u32 %v867, 4294901760
        %v4263 = vsub.f32 %v867, %v4262
        %v4264 = vand.u32 %v4263, 4294901760
        %4265 = vmatmul.mubr.f32.gmra.mrb[0].mxu0 %v4264
        %v4266 = vpop.f32.mrb[0].mxu0
        %v4267 = vadd.f32 %v3932, %v4266
        %v4268 = vpop.f32.mrb[0].mxu0
        %4269 = vmatprep.mubr.f32.mxu0 0.0
        %v4270 = vand.u32 %v868, 4294901760
        %v4271 = vsub.f32 %v868, %v4270
        %v4272 = vand.u32 %v4271, 4294901760
        %4273 = vmatmul.mubr.f32.gmra.mrb[0].mxu0 %v4272
        %v4274 = vpop.f32.mrb[0].mxu0
        %v4275 = vadd.f32 %v3939, %v4274
        %v4276 = vpop.f32.mrb[0].mxu0
        %4277 = vmatprep.mubr.f32.mxu0 0.0
        %v4278 = vand.u32 %v869, 4294901760
        %v4279 = vsub.f32 %v869, %v4278
        %v4280 = vand.u32 %v4279, 4294901760
        %4281 = vmatmul.mubr.f32.gmra.mrb[0].mxu0 %v4280
        %v4282 = vpop.f32.mrb[0].mxu0
        %v4283 = vadd.f32 %v3946, %v4282
        %v4284 = vpop.f32.mrb[0].mxu0
        %4285 = vdwg.mxu0
        %4286 = vmatprep.subr.mxu0 0.0
        %v4287 = vand.u32 %v2867, 4294901760
        %v4288 = vsub.f32 %v2867, %v4287
        %v4289 = vand.u32 %v4288, 4294901760
        %4290 = vmatpush1.msra.mxu0 %v4289
        %4291 = vmatprep.subr.mxu0 0.0
        %v4292 = vand.u32 %v2868, 4294901760
        %v4293 = vsub.f32 %v2868, %v4292
        %v4294 = vand.u32 %v4293, 4294901760
        %4295 = vmatpush1.msra.mxu0 %v4294
        %4296 = vmatprep.subr.mxu0 0.0
        %v4297 = vand.u32 %v2869, 4294901760
        %v4298 = vsub.f32 %v2869, %v4297
        %v4299 = vand.u32 %v4298, 4294901760
        %4300 = vmatpush1.msra.mxu0 %v4299
        %4301 = vmatprep.subr.mxu0 0.0
        %v4302 = vand.u32 %v2870, 4294901760
        %v4303 = vsub.f32 %v2870, %v4302
        %v4304 = vand.u32 %v4303, 4294901760
        %4305 = vmatpush1.msra.mxu0 %v4304
        %4306 = vmatprep.subr.mxu0 0.0
        %v4307 = vand.u32 %v2871, 4294901760
        %v4308 = vsub.f32 %v2871, %v4307
        %v4309 = vand.u32 %v4308, 4294901760
        %4310 = vmatpush1.msra.mxu0 %v4309
        %4311 = vmatprep.subr.mxu0 0.0
        %v4312 = vand.u32 %v2872, 4294901760
        %v4313 = vsub.f32 %v2872, %v4312
        %v4314 = vand.u32 %v4313, 4294901760
        %4315 = vmatpush1.msra.mxu0 %v4314
        %4316 = vmatprep.subr.mxu0 0.0
        %v4317 = vand.u32 %v2873, 4294901760
        %v4318 = vsub.f32 %v2873, %v4317
        %v4319 = vand.u32 %v4318, 4294901760
        %4320 = vmatpush1.msra.mxu0 %v4319
        %4321 = vmatprep.subr.mxu0 0.0
        %v4322 = vand.u32 %v2874, 4294901760
        %v4323 = vsub.f32 %v2874, %v4322
        %v4324 = vand.u32 %v4323, 4294901760
        %4325 = vmatpush1.msra.mxu0 %v4324
        %4326 = vmatprep.subr.mxu0 0.0
        %v4327 = vand.u32 %v2875, 4294901760
        %v4328 = vsub.f32 %v2875, %v4327
        %v4329 = vand.u32 %v4328, 4294901760
        %4330 = vmatpush1.msra.mxu0 %v4329
        %4331 = vmatprep.subr.mxu0 0.0
        %v4332 = vand.u32 %v2876, 4294901760
        %v4333 = vsub.f32 %v2876, %v4332
        %v4334 = vand.u32 %v4333, 4294901760
        %4335 = vmatpush1.msra.mxu0 %v4334
        %4336 = vmatprep.subr.mxu0 0.0
        %v4337 = vand.u32 %v2877, 4294901760
        %v4338 = vsub.f32 %v2877, %v4337
        %v4339 = vand.u32 %v4338, 4294901760
        %4340 = vmatpush1.msra.mxu0 %v4339
        %4341 = vmatprep.subr.mxu0 0.0
        %v4342 = vand.u32 %v2878, 4294901760
        %v4343 = vsub.f32 %v2878, %v4342
        %v4344 = vand.u32 %v4343, 4294901760
        %4345 = vmatpush1.msra.mxu0 %v4344
        %4346 = vmatprep.subr.mxu0 0.0
        %v4347 = vand.u32 %v2879, 4294901760
        %v4348 = vsub.f32 %v2879, %v4347
        %v4349 = vand.u32 %v4348, 4294901760
        %4350 = vmatpush1.msra.mxu0 %v4349
        %4351 = vmatprep.subr.mxu0 0.0
        %v4352 = vand.u32 %v2880, 4294901760
        %v4353 = vsub.f32 %v2880, %v4352
        %v4354 = vand.u32 %v4353, 4294901760
        %4355 = vmatpush1.msra.mxu0 %v4354
        %4356 = vmatprep.subr.mxu0 0.0
        %v4357 = vand.u32 %v2881, 4294901760
        %v4358 = vsub.f32 %v2881, %v4357
        %v4359 = vand.u32 %v4358, 4294901760
        %4360 = vmatpush1.msra.mxu0 %v4359
        %4361 = vmatprep.subr.mxu0 0.0
        %v4362 = vand.u32 %v2882, 4294901760
        %v4363 = vsub.f32 %v2882, %v4362
        %v4364 = vand.u32 %v4363, 4294901760
        %4365 = vmatpush1.msra.mxu0 %v4364
        %4366 = vmatprep.subr.mxu0 0.0
        %4367 = vmatpush1.msra.mxu0 0.0
        %4368 = vmatprep.subr.mxu0 0.0
        %4369 = vmatpush1.msra.mxu0 0.0
        %4370 = vmatprep.subr.mxu0 0.0
        %4371 = vmatpush1.msra.mxu0 0.0
        %4372 = vmatprep.subr.mxu0 0.0
        %4373 = vmatpush1.msra.mxu0 0.0
        %4374 = vmatprep.subr.mxu0 0.0
        %4375 = vmatpush1.msra.mxu0 0.0
        %4376 = vmatprep.subr.mxu0 0.0
        %4377 = vmatpush1.msra.mxu0 0.0
        %4378 = vmatprep.subr.mxu0 0.0
        %4379 = vmatpush1.msra.mxu0 0.0
        %4380 = vmatprep.subr.mxu0 0.0
        %4381 = vmatpush1.msra.mxu0 0.0
        %4382 = vmatprep.subr.mxu0 0.0
        %4383 = vmatpush1.msra.mxu0 0.0
        %4384 = vmatprep.subr.mxu0 0.0
        %4385 = vmatpush1.msra.mxu0 0.0
        %4386 = vmatprep.subr.mxu0 0.0
        %4387 = vmatpush1.msra.mxu0 0.0
        %4388 = vmatprep.subr.mxu0 0.0
        %4389 = vmatpush1.msra.mxu0 0.0
        %4390 = vmatprep.subr.mxu0 0.0
        %4391 = vmatpush1.msra.mxu0 0.0
        %4392 = vmatprep.subr.mxu0 0.0
        %4393 = vmatpush1.msra.mxu0 0.0
        %4394 = vmatprep.subr.mxu0 0.0
        %4395 = vmatpush1.msra.mxu0 0.0
        %4396 = vmatprep.subr.mxu0 0.0
        %4397 = vmatpush1.msra.mxu0 0.0
        %4398 = vmatprep.mubr.f32.mxu0 0.0
        %v4399 = vand.u32 %v838, 4294901760
        %4400 = vmatmul.mubr.f32.gmra.mrb[0].mxu0 %v4399
        %v4401 = vpop.f32.mrb[0].mxu0
        %v4402 = vadd.f32 %v4035, %v4401
        %v4403 = vpop.f32.mrb[0].mxu0
        %4404 = vmatprep.mubr.f32.mxu0 0.0
        %v4405 = vand.u32 %v839, 4294901760
        %4406 = vmatmul.mubr.f32.gmra.mrb[0].mxu0 %v4405
        %v4407 = vpop.f32.mrb[0].mxu0
        %v4408 = vadd.f32 %v4043, %v4407
        %v4409 = vpop.f32.mrb[0].mxu0
        %4410 = vmatprep.mubr.f32.mxu0 0.0
        %v4411 = vand.u32 %v840, 4294901760
        %4412 = vmatmul.mubr.f32.gmra.mrb[0].mxu0 %v4411
        %v4413 = vpop.f32.mrb[0].mxu0
        %v4414 = vadd.f32 %v4051, %v4413
        %v4415 = vpop.f32.mrb[0].mxu0
        %4416 = vmatprep.mubr.f32.mxu0 0.0
        %v4417 = vand.u32 %v841, 4294901760
        %4418 = vmatmul.mubr.f32.gmra.mrb[0].mxu0 %v4417
        %v4419 = vpop.f32.mrb[0].mxu0
        %v4420 = vadd.f32 %v4059, %v4419
        %v4421 = vpop.f32.mrb[0].mxu0
        %4422 = vmatprep.mubr.f32.mxu0 0.0
        %v4423 = vand.u32 %v842, 4294901760
        %4424 = vmatmul.mubr.f32.gmra.mrb[0].mxu0 %v4423
        %v4425 = vpop.f32.mrb[0].mxu0
        %v4426 = vadd.f32 %v4067, %v4425
        %v4427 = vpop.f32.mrb[0].mxu0
        %4428 = vmatprep.mubr.f32.mxu0 0.0
        %v4429 = vand.u32 %v843, 4294901760
        %4430 = vmatmul.mubr.f32.gmra.mrb[0].mxu0 %v4429
        %v4431 = vpop.f32.mrb[0].mxu0
        %v4432 = vadd.f32 %v4075, %v4431
        %v4433 = vpop.f32.mrb[0].mxu0
        %4434 = vmatprep.mubr.f32.mxu0 0.0
        %v4435 = vand.u32 %v844, 4294901760
        %4436 = vmatmul.mubr.f32.gmra.mrb[0].mxu0 %v4435
        %v4437 = vpop.f32.mrb[0].mxu0
        %v4438 = vadd.f32 %v4083, %v4437
        %v4439 = vpop.f32.mrb[0].mxu0
        %4440 = vmatprep.mubr.f32.mxu0 0.0
        %v4441 = vand.u32 %v845, 4294901760
        %4442 = vmatmul.mubr.f32.gmra.mrb[0].mxu0 %v4441
        %v4443 = vpop.f32.mrb[0].mxu0
        %v4444 = vadd.f32 %v4091, %v4443
        %v4445 = vpop.f32.mrb[0].mxu0
        %4446 = vmatprep.mubr.f32.mxu0 0.0
        %v4447 = vand.u32 %v846, 4294901760
        %4448 = vmatmul.mubr.f32.gmra.mrb[0].mxu0 %v4447
        %v4449 = vpop.f32.mrb[0].mxu0
        %v4450 = vadd.f32 %v4099, %v4449
        %v4451 = vpop.f32.mrb[0].mxu0
        %4452 = vmatprep.mubr.f32.mxu0 0.0
        %v4453 = vand.u32 %v847, 4294901760
        %4454 = vmatmul.mubr.f32.gmra.mrb[0].mxu0 %v4453
        %v4455 = vpop.f32.mrb[0].mxu0
        %v4456 = vadd.f32 %v4107, %v4455
        %v4457 = vpop.f32.mrb[0].mxu0
        %4458 = vmatprep.mubr.f32.mxu0 0.0
        %v4459 = vand.u32 %v848, 4294901760
        %4460 = vmatmul.mubr.f32.gmra.mrb[0].mxu0 %v4459
        %v4461 = vpop.f32.mrb[0].mxu0
        %v4462 = vadd.f32 %v4115, %v4461
        %v4463 = vpop.f32.mrb[0].mxu0
        %4464 = vmatprep.mubr.f32.mxu0 0.0
        %v4465 = vand.u32 %v849, 4294901760
        %4466 = vmatmul.mubr.f32.gmra.mrb[0].mxu0 %v4465
        %v4467 = vpop.f32.mrb[0].mxu0
        %v4468 = vadd.f32 %v4123, %v4467
        %v4469 = vpop.f32.mrb[0].mxu0
        %4470 = vmatprep.mubr.f32.mxu0 0.0
        %v4471 = vand.u32 %v850, 4294901760
        %4472 = vmatmul.mubr.f32.gmra.mrb[0].mxu0 %v4471
        %v4473 = vpop.f32.mrb[0].mxu0
        %v4474 = vadd.f32 %v4131, %v4473
        %v4475 = vpop.f32.mrb[0].mxu0
        %4476 = vmatprep.mubr.f32.mxu0 0.0
        %v4477 = vand.u32 %v851, 4294901760
        %4478 = vmatmul.mubr.f32.gmra.mrb[0].mxu0 %v4477
        %v4479 = vpop.f32.mrb[0].mxu0
        %v4480 = vadd.f32 %v4139, %v4479
        %v4481 = vpop.f32.mrb[0].mxu0
        %4482 = vmatprep.mubr.f32.mxu0 0.0
        %v4483 = vand.u32 %v852, 4294901760
        %4484 = vmatmul.mubr.f32.gmra.mrb[0].mxu0 %v4483
        %v4485 = vpop.f32.mrb[0].mxu0
        %v4486 = vadd.f32 %v4147, %v4485
        %v4487 = vpop.f32.mrb[0].mxu0
        %4488 = vmatprep.mubr.f32.mxu0 0.0
        %v4489 = vand.u32 %v853, 4294901760
        %4490 = vmatmul.mubr.f32.gmra.mrb[0].mxu0 %v4489
        %v4491 = vpop.f32.mrb[0].mxu0
        %v4492 = vadd.f32 %v4155, %v4491
        %v4493 = vpop.f32.mrb[0].mxu0
        %4494 = vmatprep.mubr.f32.mxu0 0.0
        %v4495 = vand.u32 %v854, 4294901760
        %4496 = vmatmul.mubr.f32.gmra.mrb[0].mxu0 %v4495
        %v4497 = vpop.f32.mrb[0].mxu0
        %v4498 = vadd.f32 %v4163, %v4497
        %v4499 = vpop.f32.mrb[0].mxu0
        %4500 = vmatprep.mubr.f32.mxu0 0.0
        %v4501 = vand.u32 %v855, 4294901760
        %4502 = vmatmul.mubr.f32.gmra.mrb[0].mxu0 %v4501
        %v4503 = vpop.f32.mrb[0].mxu0
        %v4504 = vadd.f32 %v4171, %v4503
        %v4505 = vpop.f32.mrb[0].mxu0
        %4506 = vmatprep.mubr.f32.mxu0 0.0
        %v4507 = vand.u32 %v856, 4294901760
        %4508 = vmatmul.mubr.f32.gmra.mrb[0].mxu0 %v4507
        %v4509 = vpop.f32.mrb[0].mxu0
        %v4510 = vadd.f32 %v4179, %v4509
        %v4511 = vpop.f32.mrb[0].mxu0
        %4512 = vmatprep.mubr.f32.mxu0 0.0
        %v4513 = vand.u32 %v857, 4294901760
        %4514 = vmatmul.mubr.f32.gmra.mrb[0].mxu0 %v4513
        %v4515 = vpop.f32.mrb[0].mxu0
        %v4516 = vadd.f32 %v4187, %v4515
        %v4517 = vpop.f32.mrb[0].mxu0
        %4518 = vmatprep.mubr.f32.mxu0 0.0
        %v4519 = vand.u32 %v858, 4294901760
        %4520 = vmatmul.mubr.f32.gmra.mrb[0].mxu0 %v4519
        %v4521 = vpop.f32.mrb[0].mxu0
        %v4522 = vadd.f32 %v4195, %v4521
        %v4523 = vpop.f32.mrb[0].mxu0
        %4524 = vmatprep.mubr.f32.mxu0 0.0
        %v4525 = vand.u32 %v859, 4294901760
        %4526 = vmatmul.mubr.f32.gmra.mrb[0].mxu0 %v4525
        %v4527 = vpop.f32.mrb[0].mxu0
        %v4528 = vadd.f32 %v4203, %v4527
        %v4529 = vpop.f32.mrb[0].mxu0
        %4530 = vmatprep.mubr.f32.mxu0 0.0
        %v4531 = vand.u32 %v860, 4294901760
        %4532 = vmatmul.mubr.f32.gmra.mrb[0].mxu0 %v4531
        %v4533 = vpop.f32.mrb[0].mxu0
        %v4534 = vadd.f32 %v4211, %v4533
        %v4535 = vpop.f32.mrb[0].mxu0
        %4536 = vmatprep.mubr.f32.mxu0 0.0
        %v4537 = vand.u32 %v861, 4294901760
        %4538 = vmatmul.mubr.f32.gmra.mrb[0].mxu0 %v4537
        %v4539 = vpop.f32.mrb[0].mxu0
        %v4540 = vadd.f32 %v4219, %v4539
        %v4541 = vpop.f32.mrb[0].mxu0
        %4542 = vmatprep.mubr.f32.mxu0 0.0
        %v4543 = vand.u32 %v862, 4294901760
        %4544 = vmatmul.mubr.f32.gmra.mrb[0].mxu0 %v4543
        %v4545 = vpop.f32.mrb[0].mxu0
        %v4546 = vadd.f32 %v4227, %v4545
        %v4547 = vpop.f32.mrb[0].mxu0
        %4548 = vmatprep.mubr.f32.mxu0 0.0
        %v4549 = vand.u32 %v863, 4294901760
        %4550 = vmatmul.mubr.f32.gmra.mrb[0].mxu0 %v4549
        %v4551 = vpop.f32.mrb[0].mxu0
        %v4552 = vadd.f32 %v4235, %v4551
        %v4553 = vpop.f32.mrb[0].mxu0
        %4554 = vmatprep.mubr.f32.mxu0 0.0
        %v4555 = vand.u32 %v864, 4294901760
        %4556 = vmatmul.mubr.f32.gmra.mrb[0].mxu0 %v4555
        %v4557 = vpop.f32.mrb[0].mxu0
        %v4558 = vadd.f32 %v4243, %v4557
        %v4559 = vpop.f32.mrb[0].mxu0
        %4560 = vmatprep.mubr.f32.mxu0 0.0
        %v4561 = vand.u32 %v865, 4294901760
        %4562 = vmatmul.mubr.f32.gmra.mrb[0].mxu0 %v4561
        %v4563 = vpop.f32.mrb[0].mxu0
        %v4564 = vadd.f32 %v4251, %v4563
        %v4565 = vpop.f32.mrb[0].mxu0
        %4566 = vmatprep.mubr.f32.mxu0 0.0
        %v4567 = vand.u32 %v866, 4294901760
        %4568 = vmatmul.mubr.f32.gmra.mrb[0].mxu0 %v4567
        %v4569 = vpop.f32.mrb[0].mxu0
        %v4570 = vadd.f32 %v4259, %v4569
        %v4571 = vpop.f32.mrb[0].mxu0
        %4572 = vmatprep.mubr.f32.mxu0 0.0
        %v4573 = vand.u32 %v867, 4294901760
        %4574 = vmatmul.mubr.f32.gmra.mrb[0].mxu0 %v4573
        %v4575 = vpop.f32.mrb[0].mxu0
        %v4576 = vadd.f32 %v4267, %v4575
        %v4577 = vpop.f32.mrb[0].mxu0
        %4578 = vmatprep.mubr.f32.mxu0 0.0
        %v4579 = vand.u32 %v868, 4294901760
        %4580 = vmatmul.mubr.f32.gmra.mrb[0].mxu0 %v4579
        %v4581 = vpop.f32.mrb[0].mxu0
        %v4582 = vadd.f32 %v4275, %v4581
        %v4583 = vpop.f32.mrb[0].mxu0
        %4584 = vmatprep.mubr.f32.mxu0 0.0
        %v4585 = vand.u32 %v869, 4294901760
        %4586 = vmatmul.mubr.f32.gmra.mrb[0].mxu0 %v4585
        %v4587 = vpop.f32.mrb[0].mxu0
        %v4588 = vadd.f32 %v4283, %v4587
        %v4589 = vpop.f32.mrb[0].mxu0
        %4590 = vdwg.mxu0
        %4591 = vmatprep.subr.mxu0 0.0
        %v4592 = vand.u32 %v2867, 4294901760
        %4593 = vmatpush1.msra.mxu0 %v4592
        %4594 = vmatprep.subr.mxu0 0.0
        %v4595 = vand.u32 %v2868, 4294901760
        %4596 = vmatpush1.msra.mxu0 %v4595
        %4597 = vmatprep.subr.mxu0 0.0
        %v4598 = vand.u32 %v2869, 4294901760
        %4599 = vmatpush1.msra.mxu0 %v4598
        %4600 = vmatprep.subr.mxu0 0.0
        %v4601 = vand.u32 %v2870, 4294901760
        %4602 = vmatpush1.msra.mxu0 %v4601
        %4603 = vmatprep.subr.mxu0 0.0
        %v4604 = vand.u32 %v2871, 4294901760
        %4605 = vmatpush1.msra.mxu0 %v4604
        %4606 = vmatprep.subr.mxu0 0.0
        %v4607 = vand.u32 %v2872, 4294901760
        %4608 = vmatpush1.msra.mxu0 %v4607
        %4609 = vmatprep.subr.mxu0 0.0
        %v4610 = vand.u32 %v2873, 4294901760
        %4611 = vmatpush1.msra.mxu0 %v4610
        %4612 = vmatprep.subr.mxu0 0.0
        %v4613 = vand.u32 %v2874, 4294901760
        %4614 = vmatpush1.msra.mxu0 %v4613
        %4615 = vmatprep.subr.mxu0 0.0
        %v4616 = vand.u32 %v2875, 4294901760
        %4617 = vmatpush1.msra.mxu0 %v4616
        %4618 = vmatprep.subr.mxu0 0.0
        %v4619 = vand.u32 %v2876, 4294901760
        %4620 = vmatpush1.msra.mxu0 %v4619
        %4621 = vmatprep.subr.mxu0 0.0
        %v4622 = vand.u32 %v2877, 4294901760
        %4623 = vmatpush1.msra.mxu0 %v4622
        %4624 = vmatprep.subr.mxu0 0.0
        %v4625 = vand.u32 %v2878, 4294901760
        %4626 = vmatpush1.msra.mxu0 %v4625
        %4627 = vmatprep.subr.mxu0 0.0
        %v4628 = vand.u32 %v2879, 4294901760
        %4629 = vmatpush1.msra.mxu0 %v4628
        %4630 = vmatprep.subr.mxu0 0.0
        %v4631 = vand.u32 %v2880, 4294901760
        %4632 = vmatpush1.msra.mxu0 %v4631
        %4633 = vmatprep.subr.mxu0 0.0
        %v4634 = vand.u32 %v2881, 4294901760
        %4635 = vmatpush1.msra.mxu0 %v4634
        %4636 = vmatprep.subr.mxu0 0.0
        %v4637 = vand.u32 %v2882, 4294901760
        %4638 = vmatpush1.msra.mxu0 %v4637
        %4639 = vmatprep.subr.mxu0 0.0
        %4640 = vmatpush1.msra.mxu0 0.0
        %4641 = vmatprep.subr.mxu0 0.0
        %4642 = vmatpush1.msra.mxu0 0.0
        %4643 = vmatprep.subr.mxu0 0.0
        %4644 = vmatpush1.msra.mxu0 0.0
        %4645 = vmatprep.subr.mxu0 0.0
        %4646 = vmatpush1.msra.mxu0 0.0
        %4647 = vmatprep.subr.mxu0 0.0
        %4648 = vmatpush1.msra.mxu0 0.0
        %4649 = vmatprep.subr.mxu0 0.0
        %4650 = vmatpush1.msra.mxu0 0.0
        %4651 = vmatprep.subr.mxu0 0.0
        %4652 = vmatpush1.msra.mxu0 0.0
        %4653 = vmatprep.subr.mxu0 0.0
        %4654 = vmatpush1.msra.mxu0 0.0
        %4655 = vmatprep.subr.mxu0 0.0
        %4656 = vmatpush1.msra.mxu0 0.0
        %4657 = vmatprep.subr.mxu0 0.0
        %4658 = vmatpush1.msra.mxu0 0.0
        %4659 = vmatprep.subr.mxu0 0.0
        %4660 = vmatpush1.msra.mxu0 0.0
        %4661 = vmatprep.subr.mxu0 0.0
        %4662 = vmatpush1.msra.mxu0 0.0
        %4663 = vmatprep.subr.mxu0 0.0
        %4664 = vmatpush1.msra.mxu0 0.0
        %4665 = vmatprep.subr.mxu0 0.0
        %4666 = vmatpush1.msra.mxu0 0.0
        %4667 = vmatprep.subr.mxu0 0.0
        %4668 = vmatpush1.msra.mxu0 0.0
        %4669 = vmatprep.subr.mxu0 0.0
        %4670 = vmatpush1.msra.mxu0 0.0
        %4671 = vmatprep.mubr.f32.mxu0 0.0
        %v4672 = vand.u32 %v838, 4294901760
        %4673 = vmatmul.mubr.f32.gmra.mrb[0].mxu0 %v4672
        %v4674 = vpop.f32.mrb[0].mxu0
        %v4675 = vadd.f32 %v4402, %v4674
        %v4676 = vpop.f32.mrb[0].mxu0
        %4677 = vmatprep.mubr.f32.mxu0 0.0
        %v4678 = vand.u32 %v839, 4294901760
        %4679 = vmatmul.mubr.f32.gmra.mrb[0].mxu0 %v4678
        %v4680 = vpop.f32.mrb[0].mxu0
        %v4681 = vadd.f32 %v4408, %v4680
        %v4682 = vpop.f32.mrb[0].mxu0
        %4683 = vmatprep.mubr.f32.mxu0 0.0
        %v4684 = vand.u32 %v840, 4294901760
        %4685 = vmatmul.mubr.f32.gmra.mrb[0].mxu0 %v4684
        %v4686 = vpop.f32.mrb[0].mxu0
        %v4687 = vadd.f32 %v4414, %v4686
        %v4688 = vpop.f32.mrb[0].mxu0
        %4689 = vmatprep.mubr.f32.mxu0 0.0
        %v4690 = vand.u32 %v841, 4294901760
        %4691 = vmatmul.mubr.f32.gmra.mrb[0].mxu0 %v4690
        %v4692 = vpop.f32.mrb[0].mxu0
        %v4693 = vadd.f32 %v4420, %v4692
        %v4694 = vpop.f32.mrb[0].mxu0
        %4695 = vmatprep.mubr.f32.mxu0 0.0
        %v4696 = vand.u32 %v842, 4294901760
        %4697 = vmatmul.mubr.f32.gmra.mrb[0].mxu0 %v4696
        %v4698 = vpop.f32.mrb[0].mxu0
        %v4699 = vadd.f32 %v4426, %v4698
        %v4700 = vpop.f32.mrb[0].mxu0
        %4701 = vmatprep.mubr.f32.mxu0 0.0
        %v4702 = vand.u32 %v843, 4294901760
        %4703 = vmatmul.mubr.f32.gmra.mrb[0].mxu0 %v4702
        %v4704 = vpop.f32.mrb[0].mxu0
        %v4705 = vadd.f32 %v4432, %v4704
        %v4706 = vpop.f32.mrb[0].mxu0
        %4707 = vmatprep.mubr.f32.mxu0 0.0
        %v4708 = vand.u32 %v844, 4294901760
        %4709 = vmatmul.mubr.f32.gmra.mrb[0].mxu0 %v4708
        %v4710 = vpop.f32.mrb[0].mxu0
        %v4711 = vadd.f32 %v4438, %v4710
        %v4712 = vpop.f32.mrb[0].mxu0
        %4713 = vmatprep.mubr.f32.mxu0 0.0
        %v4714 = vand.u32 %v845, 4294901760
        %4715 = vmatmul.mubr.f32.gmra.mrb[0].mxu0 %v4714
        %v4716 = vpop.f32.mrb[0].mxu0
        %v4717 = vadd.f32 %v4444, %v4716
        %v4718 = vpop.f32.mrb[0].mxu0
        %4719 = vmatprep.mubr.f32.mxu0 0.0
        %v4720 = vand.u32 %v846, 4294901760
        %4721 = vmatmul.mubr.f32.gmra.mrb[0].mxu0 %v4720
        %v4722 = vpop.f32.mrb[0].mxu0
        %v4723 = vadd.f32 %v4450, %v4722
        %v4724 = vpop.f32.mrb[0].mxu0
        %4725 = vmatprep.mubr.f32.mxu0 0.0
        %v4726 = vand.u32 %v847, 4294901760
        %4727 = vmatmul.mubr.f32.gmra.mrb[0].mxu0 %v4726
        %v4728 = vpop.f32.mrb[0].mxu0
        %v4729 = vadd.f32 %v4456, %v4728
        %v4730 = vpop.f32.mrb[0].mxu0
        %4731 = vmatprep.mubr.f32.mxu0 0.0
        %v4732 = vand.u32 %v848, 4294901760
        %4733 = vmatmul.mubr.f32.gmra.mrb[0].mxu0 %v4732
        %v4734 = vpop.f32.mrb[0].mxu0
        %v4735 = vadd.f32 %v4462, %v4734
        %v4736 = vpop.f32.mrb[0].mxu0
        %4737 = vmatprep.mubr.f32.mxu0 0.0
        %v4738 = vand.u32 %v849, 4294901760
        %4739 = vmatmul.mubr.f32.gmra.mrb[0].mxu0 %v4738
        %v4740 = vpop.f32.mrb[0].mxu0
        %v4741 = vadd.f32 %v4468, %v4740
        %v4742 = vpop.f32.mrb[0].mxu0
        %4743 = vmatprep.mubr.f32.mxu0 0.0
        %v4744 = vand.u32 %v850, 4294901760
        %4745 = vmatmul.mubr.f32.gmra.mrb[0].mxu0 %v4744
        %v4746 = vpop.f32.mrb[0].mxu0
        %v4747 = vadd.f32 %v4474, %v4746
        %v4748 = vpop.f32.mrb[0].mxu0
        %4749 = vmatprep.mubr.f32.mxu0 0.0
        %v4750 = vand.u32 %v851, 4294901760
        %4751 = vmatmul.mubr.f32.gmra.mrb[0].mxu0 %v4750
        %v4752 = vpop.f32.mrb[0].mxu0
        %v4753 = vadd.f32 %v4480, %v4752
        %v4754 = vpop.f32.mrb[0].mxu0
        %4755 = vmatprep.mubr.f32.mxu0 0.0
        %v4756 = vand.u32 %v852, 4294901760
        %4757 = vmatmul.mubr.f32.gmra.mrb[0].mxu0 %v4756
        %v4758 = vpop.f32.mrb[0].mxu0
        %v4759 = vadd.f32 %v4486, %v4758
        %v4760 = vpop.f32.mrb[0].mxu0
        %4761 = vmatprep.mubr.f32.mxu0 0.0
        %v4762 = vand.u32 %v853, 4294901760
        %4763 = vmatmul.mubr.f32.gmra.mrb[0].mxu0 %v4762
        %v4764 = vpop.f32.mrb[0].mxu0
        %v4765 = vadd.f32 %v4492, %v4764
        %v4766 = vpop.f32.mrb[0].mxu0
        %4767 = vmatprep.mubr.f32.mxu0 0.0
        %v4768 = vand.u32 %v854, 4294901760
        %4769 = vmatmul.mubr.f32.gmra.mrb[0].mxu0 %v4768
        %v4770 = vpop.f32.mrb[0].mxu0
        %v4771 = vadd.f32 %v4498, %v4770
        %v4772 = vpop.f32.mrb[0].mxu0
        %4773 = vmatprep.mubr.f32.mxu0 0.0
        %v4774 = vand.u32 %v855, 4294901760
        %4775 = vmatmul.mubr.f32.gmra.mrb[0].mxu0 %v4774
        %v4776 = vpop.f32.mrb[0].mxu0
        %v4777 = vadd.f32 %v4504, %v4776
        %v4778 = vpop.f32.mrb[0].mxu0
        %4779 = vmatprep.mubr.f32.mxu0 0.0
        %v4780 = vand.u32 %v856, 4294901760
        %4781 = vmatmul.mubr.f32.gmra.mrb[0].mxu0 %v4780
        %v4782 = vpop.f32.mrb[0].mxu0
        %v4783 = vadd.f32 %v4510, %v4782
        %v4784 = vpop.f32.mrb[0].mxu0
        %4785 = vmatprep.mubr.f32.mxu0 0.0
        %v4786 = vand.u32 %v857, 4294901760
        %4787 = vmatmul.mubr.f32.gmra.mrb[0].mxu0 %v4786
        %v4788 = vpop.f32.mrb[0].mxu0
        %v4789 = vadd.f32 %v4516, %v4788
        %v4790 = vpop.f32.mrb[0].mxu0
        %4791 = vmatprep.mubr.f32.mxu0 0.0
        %v4792 = vand.u32 %v858, 4294901760
        %4793 = vmatmul.mubr.f32.gmra.mrb[0].mxu0 %v4792
        %v4794 = vpop.f32.mrb[0].mxu0
        %v4795 = vadd.f32 %v4522, %v4794
        %v4796 = vpop.f32.mrb[0].mxu0
        %4797 = vmatprep.mubr.f32.mxu0 0.0
        %v4798 = vand.u32 %v859, 4294901760
        %4799 = vmatmul.mubr.f32.gmra.mrb[0].mxu0 %v4798
        %v4800 = vpop.f32.mrb[0].mxu0
        %v4801 = vadd.f32 %v4528, %v4800
        %v4802 = vpop.f32.mrb[0].mxu0
        %4803 = vmatprep.mubr.f32.mxu0 0.0
        %v4804 = vand.u32 %v860, 4294901760
        %4805 = vmatmul.mubr.f32.gmra.mrb[0].mxu0 %v4804
        %v4806 = vpop.f32.mrb[0].mxu0
        %v4807 = vadd.f32 %v4534, %v4806
        %v4808 = vpop.f32.mrb[0].mxu0
        %4809 = vmatprep.mubr.f32.mxu0 0.0
        %v4810 = vand.u32 %v861, 4294901760
        %4811 = vmatmul.mubr.f32.gmra.mrb[0].mxu0 %v4810
        %v4812 = vpop.f32.mrb[0].mxu0
        %v4813 = vadd.f32 %v4540, %v4812
        %v4814 = vpop.f32.mrb[0].mxu0
        %4815 = vmatprep.mubr.f32.mxu0 0.0
        %v4816 = vand.u32 %v862, 4294901760
        %4817 = vmatmul.mubr.f32.gmra.mrb[0].mxu0 %v4816
        %v4818 = vpop.f32.mrb[0].mxu0
        %v4819 = vadd.f32 %v4546, %v4818
        %v4820 = vpop.f32.mrb[0].mxu0
        %4821 = vmatprep.mubr.f32.mxu0 0.0
        %v4822 = vand.u32 %v863, 4294901760
        %4823 = vmatmul.mubr.f32.gmra.mrb[0].mxu0 %v4822
        %v4824 = vpop.f32.mrb[0].mxu0
        %v4825 = vadd.f32 %v4552, %v4824
        %v4826 = vpop.f32.mrb[0].mxu0
        %4827 = vmatprep.mubr.f32.mxu0 0.0
        %v4828 = vand.u32 %v864, 4294901760
        %4829 = vmatmul.mubr.f32.gmra.mrb[0].mxu0 %v4828
        %v4830 = vpop.f32.mrb[0].mxu0
        %v4831 = vadd.f32 %v4558, %v4830
        %v4832 = vpop.f32.mrb[0].mxu0
        %4833 = vmatprep.mubr.f32.mxu0 0.0
        %v4834 = vand.u32 %v865, 4294901760
        %4835 = vmatmul.mubr.f32.gmra.mrb[0].mxu0 %v4834
        %v4836 = vpop.f32.mrb[0].mxu0
        %v4837 = vadd.f32 %v4564, %v4836
        %v4838 = vpop.f32.mrb[0].mxu0
        %4839 = vmatprep.mubr.f32.mxu0 0.0
        %v4840 = vand.u32 %v866, 4294901760
        %4841 = vmatmul.mubr.f32.gmra.mrb[0].mxu0 %v4840
        %v4842 = vpop.f32.mrb[0].mxu0
        %v4843 = vadd.f32 %v4570, %v4842
        %v4844 = vpop.f32.mrb[0].mxu0
        %4845 = vmatprep.mubr.f32.mxu0 0.0
        %v4846 = vand.u32 %v867, 4294901760
        %4847 = vmatmul.mubr.f32.gmra.mrb[0].mxu0 %v4846
        %v4848 = vpop.f32.mrb[0].mxu0
        %v4849 = vadd.f32 %v4576, %v4848
        %v4850 = vpop.f32.mrb[0].mxu0
        %4851 = vmatprep.mubr.f32.mxu0 0.0
        %v4852 = vand.u32 %v868, 4294901760
        %4853 = vmatmul.mubr.f32.gmra.mrb[0].mxu0 %v4852
        %v4854 = vpop.f32.mrb[0].mxu0
        %v4855 = vadd.f32 %v4582, %v4854
        %v4856 = vpop.f32.mrb[0].mxu0
        %4857 = vmatprep.mubr.f32.mxu0 0.0
        %v4858 = vand.u32 %v869, 4294901760
        %4859 = vmatmul.mubr.f32.gmra.mrb[0].mxu0 %v4858
        %v4860 = vpop.f32.mrb[0].mxu0
        %v4861 = vadd.f32 %v4588, %v4860
        %v4862 = vpop.f32.mrb[0].mxu0
        %4863 = vdwg.mxu0
        %vm4864 = vcmask 523264
        %4865 = vst.msk [vmem:[%s395] sm:$0xff] %vm4864, %v2678
        %4866 = vst.msk [vmem:[%s395 + $0x8] sm:$0xff] %vm4864, %v2684
        %4867 = vst.msk [vmem:[%s395 + $0x10] sm:$0xff] %vm4864, %v2690
        %4868 = vst.msk [vmem:[%s395 + $0x18] sm:$0xff] %vm4864, %v2696
        %4869 = vst.msk [vmem:[%s395 + $0x20] sm:$0xff] %vm4864, %v2702
        %4870 = vst.msk [vmem:[%s395 + $0x28] sm:$0xff] %vm4864, %v2708
        %4871 = vst.msk [vmem:[%s395 + $0x30] sm:$0xff] %vm4864, %v2714
        %4872 = vst.msk [vmem:[%s395 + $0x38] sm:$0xff] %vm4864, %v2720
        %4873 = vst.msk [vmem:[%s395 + $0x40] sm:$0xff] %vm4864, %v2726
        %4874 = vst.msk [vmem:[%s395 + $0x48] sm:$0xff] %vm4864, %v2732
        %4875 = vst.msk [vmem:[%s395 + $0x50] sm:$0xff] %vm4864, %v2738
        %4876 = vst.msk [vmem:[%s395 + $0x58] sm:$0xff] %vm4864, %v2744
        %4877 = vst.msk [vmem:[%s395 + $0x60] sm:$0xff] %vm4864, %v2750
        %4878 = vst.msk [vmem:[%s395 + $0x68] sm:$0xff] %vm4864, %v2756
        %4879 = vst.msk [vmem:[%s395 + $0x70] sm:$0xff] %vm4864, %v2762
        %4880 = vst.msk [vmem:[%s395 + $0x78] sm:$0xff] %vm4864, %v2768
        %4881 = vst.msk [vmem:[%s395 + $0x80] sm:$0xff] %vm4864, %v2774
        %4882 = vst.msk [vmem:[%s395 + $0x88] sm:$0xff] %vm4864, %v2780
        %4883 = vst.msk [vmem:[%s395 + $0x90] sm:$0xff] %vm4864, %v2786
        %4884 = vst.msk [vmem:[%s395 + $0x98] sm:$0xff] %vm4864, %v2792
        %4885 = vst.msk [vmem:[%s395 + $0xa0] sm:$0xff] %vm4864, %v2798
        %4886 = vst.msk [vmem:[%s395 + $0xa8] sm:$0xff] %vm4864, %v2804
        %4887 = vst.msk [vmem:[%s395 + $0xb0] sm:$0xff] %vm4864, %v2810
        %4888 = vst.msk [vmem:[%s395 + $0xb8] sm:$0xff] %vm4864, %v2816
        %4889 = vst.msk [vmem:[%s395 + $0xc0] sm:$0xff] %vm4864, %v2822
        %4890 = vst.msk [vmem:[%s395 + $0xc8] sm:$0xff] %vm4864, %v2828
        %4891 = vst.msk [vmem:[%s395 + $0xd0] sm:$0xff] %vm4864, %v2834
        %4892 = vst.msk [vmem:[%s395 + $0xd8] sm:$0xff] %vm4864, %v2840
        %4893 = vst.msk [vmem:[%s395 + $0xe0] sm:$0xff] %vm4864, %v2846
        %4894 = vst.msk [vmem:[%s395 + $0xe8] sm:$0xff] %vm4864, %v2852
        %4895 = vst.msk [vmem:[%s395 + $0xf0] sm:$0xff] %vm4864, %v2858
        %4896 = vst.msk [vmem:[%s395 + $0xf8] sm:$0xff] %vm4864, %v2864
        %4897 = vst.msk [vmem:[%s405] sm:$0xff] %vm4864, %v4675
        %4898 = vst.msk [vmem:[%s405 + $0x8] sm:$0xff] %vm4864, %v4681
        %4899 = vst.msk [vmem:[%s405 + $0x10] sm:$0xff] %vm4864, %v4687
        %4900 = vst.msk [vmem:[%s405 + $0x18] sm:$0xff] %vm4864, %v4693
        %4901 = vst.msk [vmem:[%s405 + $0x20] sm:$0xff] %vm4864, %v4699
        %4902 = vst.msk [vmem:[%s405 + $0x28] sm:$0xff] %vm4864, %v4705
        %4903 = vst.msk [vmem:[%s405 + $0x30] sm:$0xff] %vm4864, %v4711
        %4904 = vst.msk [vmem:[%s405 + $0x38] sm:$0xff] %vm4864, %v4717
        %4905 = vst.msk [vmem:[%s405 + $0x40] sm:$0xff] %vm4864, %v4723
        %4906 = vst.msk [vmem:[%s405 + $0x48] sm:$0xff] %vm4864, %v4729
        %4907 = vst.msk [vmem:[%s405 + $0x50] sm:$0xff] %vm4864, %v4735
        %4908 = vst.msk [vmem:[%s405 + $0x58] sm:$0xff] %vm4864, %v4741
        %4909 = vst.msk [vmem:[%s405 + $0x60] sm:$0xff] %vm4864, %v4747
        %4910 = vst.msk [vmem:[%s405 + $0x68] sm:$0xff] %vm4864, %v4753
        %4911 = vst.msk [vmem:[%s405 + $0x70] sm:$0xff] %vm4864, %v4759
        %4912 = vst.msk [vmem:[%s405 + $0x78] sm:$0xff] %vm4864, %v4765
        %4913 = vst.msk [vmem:[%s405 + $0x80] sm:$0xff] %vm4864, %v4771
        %4914 = vst.msk [vmem:[%s405 + $0x88] sm:$0xff] %vm4864, %v4777
        %4915 = vst.msk [vmem:[%s405 + $0x90] sm:$0xff] %vm4864, %v4783
        %4916 = vst.msk [vmem:[%s405 + $0x98] sm:$0xff] %vm4864, %v4789
        %4917 = vst.msk [vmem:[%s405 + $0xa0] sm:$0xff] %vm4864, %v4795
        %4918 = vst.msk [vmem:[%s405 + $0xa8] sm:$0xff] %vm4864, %v4801
        %4919 = vst.msk [vmem:[%s405 + $0xb0] sm:$0xff] %vm4864, %v4807
        %4920 = vst.msk [vmem:[%s405 + $0xb8] sm:$0xff] %vm4864, %v4813
        %4921 = vst.msk [vmem:[%s405 + $0xc0] sm:$0xff] %vm4864, %v4819
        %4922 = vst.msk [vmem:[%s405 + $0xc8] sm:$0xff] %vm4864, %v4825
        %4923 = vst.msk [vmem:[%s405 + $0xd0] sm:$0xff] %vm4864, %v4831
        %4924 = vst.msk [vmem:[%s405 + $0xd8] sm:$0xff] %vm4864, %v4837
        %4925 = vst.msk [vmem:[%s405 + $0xe0] sm:$0xff] %vm4864, %v4843
        %4926 = vst.msk [vmem:[%s405 + $0xe8] sm:$0xff] %vm4864, %v4849
        %4927 = vst.msk [vmem:[%s405 + $0xf0] sm:$0xff] %vm4864, %v4855
        %4928 = vst.msk [vmem:[%s405 + $0xf8] sm:$0xff] %vm4864, %v4861
        %4961 = vrot.lane.b32.xlu0 %v2678, 64
        %v4962 = vpop.permute.xlu0 %4961
        %4963 = vrot.lane.b32.xlu0 %v2684, 64
        %v4964 = vpop.permute.xlu0 %4963
        %4965 = vrot.lane.b32.xlu0 %v2690, 64
        %v4966 = vpop.permute.xlu0 %4965
        %4967 = vrot.lane.b32.xlu0 %v2696, 64
        %v4968 = vpop.permute.xlu0 %4967
        %4969 = vrot.lane.b32.xlu0 %v2702, 64
        %v4970 = vpop.permute.xlu0 %4969
        %4971 = vrot.lane.b32.xlu0 %v2708, 64
        %v4972 = vpop.permute.xlu0 %4971
        %4973 = vrot.lane.b32.xlu0 %v2714, 64
        %v4974 = vpop.permute.xlu0 %4973
        %4975 = vrot.lane.b32.xlu0 %v2720, 64
        %v4976 = vpop.permute.xlu0 %4975
        %4977 = vrot.lane.b32.xlu0 %v2726, 64
        %v4978 = vpop.permute.xlu0 %4977
        %4979 = vrot.lane.b32.xlu0 %v2732, 64
        %v4980 = vpop.permute.xlu0 %4979
        %4981 = vrot.lane.b32.xlu0 %v2738, 64
        %v4982 = vpop.permute.xlu0 %4981
        %4983 = vrot.lane.b32.xlu0 %v2744, 64
        %v4984 = vpop.permute.xlu0 %4983
        %4985 = vrot.lane.b32.xlu0 %v2750, 64
        %v4986 = vpop.permute.xlu0 %4985
        %4987 = vrot.lane.b32.xlu0 %v2756, 64
        %v4988 = vpop.permute.xlu0 %4987
        %4989 = vrot.lane.b32.xlu0 %v2762, 64
        %v4990 = vpop.permute.xlu0 %4989
        %4991 = vrot.lane.b32.xlu0 %v2768, 64
        %v4992 = vpop.permute.xlu0 %4991
        %4993 = vrot.lane.b32.xlu0 %v2774, 64
        %v4994 = vpop.permute.xlu0 %4993
        %4995 = vrot.lane.b32.xlu0 %v2780, 64
        %v4996 = vpop.permute.xlu0 %4995
        %4997 = vrot.lane.b32.xlu0 %v2786, 64
        %v4998 = vpop.permute.xlu0 %4997
        %4999 = vrot.lane.b32.xlu0 %v2792, 64
        %v5000 = vpop.permute.xlu0 %4999
        %5001 = vrot.lane.b32.xlu0 %v2798, 64
        %v5002 = vpop.permute.xlu0 %5001
        %5003 = vrot.lane.b32.xlu0 %v2804, 64
        %v5004 = vpop.permute.xlu0 %5003
        %5005 = vrot.lane.b32.xlu0 %v2810, 64
        %v5006 = vpop.permute.xlu0 %5005
        %5007 = vrot.lane.b32.xlu0 %v2816, 64
        %v5008 = vpop.permute.xlu0 %5007
        %5009 = vrot.lane.b32.xlu0 %v2822, 64
        %v5010 = vpop.permute.xlu0 %5009
        %5011 = vrot.lane.b32.xlu0 %v2828, 64
        %v5012 = vpop.permute.xlu0 %5011
        %5013 = vrot.lane.b32.xlu0 %v2834, 64
        %v5014 = vpop.permute.xlu0 %5013
        %5015 = vrot.lane.b32.xlu0 %v2840, 64
        %v5016 = vpop.permute.xlu0 %5015
        %5017 = vrot.lane.b32.xlu0 %v2846, 64
        %v5018 = vpop.permute.xlu0 %5017
        %5019 = vrot.lane.b32.xlu0 %v2852, 64
        %v5020 = vpop.permute.xlu0 %5019
        %5021 = vrot.lane.b32.xlu0 %v2858, 64
        %v5022 = vpop.permute.xlu0 %5021
        %5023 = vrot.lane.b32.xlu0 %v2864, 64
        %v5024 = vpop.permute.xlu0 %5023
        %s5057 = scalar_lea.vmem %s395, 256
        %5058 = vst.msk [vmem:[%s5057] sm:$0xff] %vm4864, %v4962
        %5059 = vst.msk [vmem:[%s5057 + $0x8] sm:$0xff] %vm4864, %v4964
        %5060 = vst.msk [vmem:[%s5057 + $0x10] sm:$0xff] %vm4864, %v4966
        %5061 = vst.msk [vmem:[%s5057 + $0x18] sm:$0xff] %vm4864, %v4968
        %5062 = vst.msk [vmem:[%s5057 + $0x20] sm:$0xff] %vm4864, %v4970
        %5063 = vst.msk [vmem:[%s5057 + $0x28] sm:$0xff] %vm4864, %v4972
        %5064 = vst.msk [vmem:[%s5057 + $0x30] sm:$0xff] %vm4864, %v4974
        %5065 = vst.msk [vmem:[%s5057 + $0x38] sm:$0xff] %vm4864, %v4976
        %5066 = vst.msk [vmem:[%s5057 + $0x40] sm:$0xff] %vm4864, %v4978
        %5067 = vst.msk [vmem:[%s5057 + $0x48] sm:$0xff] %vm4864, %v4980
        %5068 = vst.msk [vmem:[%s5057 + $0x50] sm:$0xff] %vm4864, %v4982
        %5069 = vst.msk [vmem:[%s5057 + $0x58] sm:$0xff] %vm4864, %v4984
        %5070 = vst.msk [vmem:[%s5057 + $0x60] sm:$0xff] %vm4864, %v4986
        %5071 = vst.msk [vmem:[%s5057 + $0x68] sm:$0xff] %vm4864, %v4988
        %5072 = vst.msk [vmem:[%s5057 + $0x70] sm:$0xff] %vm4864, %v4990
        %5073 = vst.msk [vmem:[%s5057 + $0x78] sm:$0xff] %vm4864, %v4992
        %5074 = vst.msk [vmem:[%s5057 + $0x80] sm:$0xff] %vm4864, %v4994
        %5075 = vst.msk [vmem:[%s5057 + $0x88] sm:$0xff] %vm4864, %v4996
        %5076 = vst.msk [vmem:[%s5057 + $0x90] sm:$0xff] %vm4864, %v4998
        %5077 = vst.msk [vmem:[%s5057 + $0x98] sm:$0xff] %vm4864, %v5000
        %5078 = vst.msk [vmem:[%s5057 + $0xa0] sm:$0xff] %vm4864, %v5002
        %5079 = vst.msk [vmem:[%s5057 + $0xa8] sm:$0xff] %vm4864, %v5004
        %5080 = vst.msk [vmem:[%s5057 + $0xb0] sm:$0xff] %vm4864, %v5006
        %5081 = vst.msk [vmem:[%s5057 + $0xb8] sm:$0xff] %vm4864, %v5008
        %5082 = vst.msk [vmem:[%s5057 + $0xc0] sm:$0xff] %vm4864, %v5010
        %5083 = vst.msk [vmem:[%s5057 + $0xc8] sm:$0xff] %vm4864, %v5012
        %5084 = vst.msk [vmem:[%s5057 + $0xd0] sm:$0xff] %vm4864, %v5014
        %5085 = vst.msk [vmem:[%s5057 + $0xd8] sm:$0xff] %vm4864, %v5016
        %5086 = vst.msk [vmem:[%s5057 + $0xe0] sm:$0xff] %vm4864, %v5018
        %5087 = vst.msk [vmem:[%s5057 + $0xe8] sm:$0xff] %vm4864, %v5020
        %5088 = vst.msk [vmem:[%s5057 + $0xf0] sm:$0xff] %vm4864, %v5022
        %5089 = vst.msk [vmem:[%s5057 + $0xf8] sm:$0xff] %vm4864, %v5024
        %5122 = vrot.lane.b32.xlu0 %v4675, 64
        %v5123 = vpop.permute.xlu0 %5122
        %5124 = vrot.lane.b32.xlu0 %v4681, 64
        %v5125 = vpop.permute.xlu0 %5124
        %5126 = vrot.lane.b32.xlu0 %v4687, 64
        %v5127 = vpop.permute.xlu0 %5126
        %5128 = vrot.lane.b32.xlu0 %v4693, 64
        %v5129 = vpop.permute.xlu0 %5128
        %5130 = vrot.lane.b32.xlu0 %v4699, 64
        %v5131 = vpop.permute.xlu0 %5130
        %5132 = vrot.lane.b32.xlu0 %v4705, 64
        %v5133 = vpop.permute.xlu0 %5132
        %5134 = vrot.lane.b32.xlu0 %v4711, 64
        %v5135 = vpop.permute.xlu0 %5134
        %5136 = vrot.lane.b32.xlu0 %v4717, 64
        %v5137 = vpop.permute.xlu0 %5136
        %5138 = vrot.lane.b32.xlu0 %v4723, 64
        %v5139 = vpop.permute.xlu0 %5138
        %5140 = vrot.lane.b32.xlu0 %v4729, 64
        %v5141 = vpop.permute.xlu0 %5140
        %5142 = vrot.lane.b32.xlu0 %v4735, 64
        %v5143 = vpop.permute.xlu0 %5142
        %5144 = vrot.lane.b32.xlu0 %v4741, 64
        %v5145 = vpop.permute.xlu0 %5144
        %5146 = vrot.lane.b32.xlu0 %v4747, 64
        %v5147 = vpop.permute.xlu0 %5146
        %5148 = vrot.lane.b32.xlu0 %v4753, 64
        %v5149 = vpop.permute.xlu0 %5148
        %5150 = vrot.lane.b32.xlu0 %v4759, 64
        %v5151 = vpop.permute.xlu0 %5150
        %5152 = vrot.lane.b32.xlu0 %v4765, 64
        %v5153 = vpop.permute.xlu0 %5152
        %5154 = vrot.lane.b32.xlu0 %v4771, 64
        %v5155 = vpop.permute.xlu0 %5154
        %5156 = vrot.lane.b32.xlu0 %v4777, 64
        %v5157 = vpop.permute.xlu0 %5156
        %5158 = vrot.lane.b32.xlu0 %v4783, 64
        %v5159 = vpop.permute.xlu0 %5158
        %5160 = vrot.lane.b32.xlu0 %v4789, 64
        %v5161 = vpop.permute.xlu0 %5160
        %5162 = vrot.lane.b32.xlu0 %v4795, 64
        %v5163 = vpop.permute.xlu0 %5162
        %5164 = vrot.lane.b32.xlu0 %v4801, 64
        %v5165 = vpop.permute.xlu0 %5164
        %5166 = vrot.lane.b32.xlu0 %v4807, 64
        %v5167 = vpop.permute.xlu0 %5166
        %5168 = vrot.lane.b32.xlu0 %v4813, 64
        %v5169 = vpop.permute.xlu0 %5168
        %5170 = vrot.lane.b32.xlu0 %v4819, 64
        %v5171 = vpop.permute.xlu0 %5170
        %5172 = vrot.lane.b32.xlu0 %v4825, 64
        %v5173 = vpop.permute.xlu0 %5172
        %5174 = vrot.lane.b32.xlu0 %v4831, 64
        %v5175 = vpop.permute.xlu0 %5174
        %5176 = vrot.lane.b32.xlu0 %v4837, 64
        %v5177 = vpop.permute.xlu0 %5176
        %5178 = vrot.lane.b32.xlu0 %v4843, 64
        %v5179 = vpop.permute.xlu0 %5178
        %5180 = vrot.lane.b32.xlu0 %v4849, 64
        %v5181 = vpop.permute.xlu0 %5180
        %5182 = vrot.lane.b32.xlu0 %v4855, 64
        %v5183 = vpop.permute.xlu0 %5182
        %5184 = vrot.lane.b32.xlu0 %v4861, 64
        %v5185 = vpop.permute.xlu0 %5184
        %s5218 = scalar_lea.vmem %s405, 256
        %5219 = vst.msk [vmem:[%s5218] sm:$0xff] %vm4864, %v5123
        %5220 = vst.msk [vmem:[%s5218 + $0x8] sm:$0xff] %vm4864, %v5125
        %5221 = vst.msk [vmem:[%s5218 + $0x10] sm:$0xff] %vm4864, %v5127
        %5222 = vst.msk [vmem:[%s5218 + $0x18] sm:$0xff] %vm4864, %v5129
        %5223 = vst.msk [vmem:[%s5218 + $0x20] sm:$0xff] %vm4864, %v5131
        %5224 = vst.msk [vmem:[%s5218 + $0x28] sm:$0xff] %vm4864, %v5133
        %5225 = vst.msk [vmem:[%s5218 + $0x30] sm:$0xff] %vm4864, %v5135
        %5226 = vst.msk [vmem:[%s5218 + $0x38] sm:$0xff] %vm4864, %v5137
        %5227 = vst.msk [vmem:[%s5218 + $0x40] sm:$0xff] %vm4864, %v5139
        %5228 = vst.msk [vmem:[%s5218 + $0x48] sm:$0xff] %vm4864, %v5141
        %5229 = vst.msk [vmem:[%s5218 + $0x50] sm:$0xff] %vm4864, %v5143
        %5230 = vst.msk [vmem:[%s5218 + $0x58] sm:$0xff] %vm4864, %v5145
        %5231 = vst.msk [vmem:[%s5218 + $0x60] sm:$0xff] %vm4864, %v5147
        %5232 = vst.msk [vmem:[%s5218 + $0x68] sm:$0xff] %vm4864, %v5149
        %5233 = vst.msk [vmem:[%s5218 + $0x70] sm:$0xff] %vm4864, %v5151
        %5234 = vst.msk [vmem:[%s5218 + $0x78] sm:$0xff] %vm4864, %v5153
        %5235 = vst.msk [vmem:[%s5218 + $0x80] sm:$0xff] %vm4864, %v5155
        %5236 = vst.msk [vmem:[%s5218 + $0x88] sm:$0xff] %vm4864, %v5157
        %5237 = vst.msk [vmem:[%s5218 + $0x90] sm:$0xff] %vm4864, %v5159
        %5238 = vst.msk [vmem:[%s5218 + $0x98] sm:$0xff] %vm4864, %v5161
        %5239 = vst.msk [vmem:[%s5218 + $0xa0] sm:$0xff] %vm4864, %v5163
        %5240 = vst.msk [vmem:[%s5218 + $0xa8] sm:$0xff] %vm4864, %v5165
        %5241 = vst.msk [vmem:[%s5218 + $0xb0] sm:$0xff] %vm4864, %v5167
        %5242 = vst.msk [vmem:[%s5218 + $0xb8] sm:$0xff] %vm4864, %v5169
        %5243 = vst.msk [vmem:[%s5218 + $0xc0] sm:$0xff] %vm4864, %v5171
        %5244 = vst.msk [vmem:[%s5218 + $0xc8] sm:$0xff] %vm4864, %v5173
        %5245 = vst.msk [vmem:[%s5218 + $0xd0] sm:$0xff] %vm4864, %v5175
        %5246 = vst.msk [vmem:[%s5218 + $0xd8] sm:$0xff] %vm4864, %v5177
        %5247 = vst.msk [vmem:[%s5218 + $0xe0] sm:$0xff] %vm4864, %v5179
        %5248 = vst.msk [vmem:[%s5218 + $0xe8] sm:$0xff] %vm4864, %v5181
        %5249 = vst.msk [vmem:[%s5218 + $0xf0] sm:$0xff] %vm4864, %v5183
        %5250 = vst.msk [vmem:[%s5218 + $0xf8] sm:$0xff] %vm4864, %v5185
        %s5251 = smul.u32 32, %s29
        %p5252 = scmp.lt.s32.totalorder %s28, 1
        %s5253 = scalar_select %p5252, %s28, 1
        %p5254 = scmp.lt.s32.totalorder %s5251, 31
        %s5255 = scalar_select %p5254, %s5251, 31
        %s5256 = smul.addr %s5253, 64
        %s5257 = sadd.s32 %s5255, %s5256
        %s5258 = smul.addr %s5257, 8
        %s5259 = scalar_lea.vmem %s7, %s5258
        %s5260 = smul.u32 32, %s29
        %p5261 = scmp.lt.s32.totalorder %s28, 1
        %s5262 = scalar_select %p5261, %s28, 1
        %p5263 = scmp.lt.s32.totalorder %s5260, 31
        %s5264 = scalar_select %p5263, %s5260, 31
        %s5265 = smul.addr %s5262, 64
        %s5266 = sadd.s32 %s5264, %s5265
        %s5267 = smul.addr %s5266, 8
        %s5268 = scalar_lea.vmem %s8, %s5267
        // Predicated region
        $region61: #{tpu_custom_call.1} parent=47 // pred_check
          %p5269 = pneg %p210
        $region62: #{tpu_custom_call.1} parent=47 // pred_check_branch
          %5271 = sbr.rel (%p5269) target = $region64
        $region63: #{tpu_custom_call.1} parent=47 // pred_region
          %s5272 = smul.u32 32, %s29
        $region64: #{tpu_custom_call.1} parent=47 // pred_fallthru
          _
        // Predicated region
        $region65: #{tpu_custom_call.1} parent=47 // pred_check
          %p5273 = pneg %p238
        $region66: #{tpu_custom_call.1} parent=47 // pred_check_branch
          %5275 = sbr.rel (%p5273) target = $region68
        $region67: #{tpu_custom_call.1} parent=47 // pred_region
          %s5276 = smul.u32 32, %s29
        $region68: #{tpu_custom_call.1} parent=47 // pred_fallthru
          _
      $region48: #{tpu_custom_call.1} parent=5 // pred_fallthru
        _
      %p5277 = scmp.le.s32.totalorder 2, %s19
      // Predicated region
      $region69: #{tpu_custom_call.1} parent=5 // pred_check
        %p5278 = pneg %p5277
      $region70: #{tpu_custom_call.1} parent=5 // pred_check_branch
        %5280 = sbr.rel (%p5278) target = $region72
      $region71: #{tpu_custom_call.1} parent=5 // pred_region
        %s5281 = ssub.s32 %s19, 2
        // Predicated region
        $region73: #{tpu_custom_call.1} parent=71 // pred_check
          %p5282 = pneg %p216
        $region74: #{tpu_custom_call.1} parent=71 // pred_check_branch
          %5284 = sbr.rel (%p5282) target = $region76
        $region75: #{tpu_custom_call.1} parent=71 // pred_region
          %s5285 = smul.u32 32, %s31
          %p5286 = scmp.lt.s32.totalorder %s30, 1
          %s5287 = scalar_select %p5286, %s30, 1
          %p5288 = scmp.lt.s32.totalorder %s5285, 31
          %s5289 = scalar_select %p5288, %s5285, 31
          %s5290 = smul.addr %s5287, 64
          %s5291 = sadd.s32 %s5289, %s5290
          %s5292 = smul.addr %s5291, 8
          %s5293 = scalar_lea.vmem %s7, %s5292
        $region76: #{tpu_custom_call.1} parent=71 // pred_fallthru
          _
        // Predicated region
        $region77: #{tpu_custom_call.1} parent=71 // pred_check
          %p5294 = pneg %p244
        $region78: #{tpu_custom_call.1} parent=71 // pred_check_branch
          %5296 = sbr.rel (%p5294) target = $region80
        $region79: #{tpu_custom_call.1} parent=71 // pred_region
          %s5297 = smul.u32 32, %s31
          %p5298 = scmp.lt.s32.totalorder %s30, 1
          %s5299 = scalar_select %p5298, %s30, 1
          %p5300 = scmp.lt.s32.totalorder %s5297, 31
          %s5301 = scalar_select %p5300, %s5297, 31
          %s5302 = smul.addr %s5299, 64
          %s5303 = sadd.s32 %s5301, %s5302
          %s5304 = smul.addr %s5303, 8
          %s5305 = scalar_lea.vmem %s8, %s5304
        $region80: #{tpu_custom_call.1} parent=71 // pred_fallthru
          _
      $region72: #{tpu_custom_call.1} parent=5 // pred_fallthru
        _
    $region6: #{tpu_custom_call.1} parent=1 // loop_footer
      %s23 = sadd.s32 1, %s19
    $region7: #{tpu_custom_call.1} parent=1 // loop_footer_branch
      %18 = sbr.rel target = $region3
    $region8: #{tpu_custom_call.1} parent=1 // loop_exit
      _
    %5306 = vsyncpa [#allocation3], 1
    %s5307 = scalar_lea.sflag [#allocation3], 1
    %5308 = vsyncpa %s5307, 1
    %5309 = vsyncpa [#allocation5], 1

</llo_original>
